<compile_context>
chip_gen: v7x
topology: tpu7x:2x2x1
jax: 0.10.0
libtpu: 0.0.40
codegen_flags: <defaults>
</compile_context>

<pallas_src>
import jax
import jax.numpy as jnp
from jax import lax
from jax.experimental import pallas as pl
from jax.experimental.pallas import tpu as pltpu


def cos_attention(x, qkv_weight, scale_param, proj_weight, proj_bias, num_heads,
                  *, matmul_dtype=jnp.bfloat16):
    """Fused cosine-attention forward.

    x: (B, N, C).  qkv_weight: (3*H*d, C).  scale_param: (H, 1, 1).
    proj_weight: (C, H*d).  proj_bias: (C,).  Returns (B, N, C) f32.

    matmul_dtype: dtype fed to the MXU (bf16 default — native on v5e/v6e/v7x);
    accumulation and all elementwise math stay f32.  For very large learned scales
    (near the exp(4.6052)=100 clamp) keep matmul_dtype=float32 for tighter logits.
    """
    B, N, C = x.shape
    H = num_heads
    d = qkv_weight.shape[0] // (3 * H)
    Hd = H * d

    # Head grouping: g heads per grid step so each step's q/k/v slabs and the
    # per-group scratch store are (multiples of) 128 lanes wide.
    g = min(H, max(1, 128 // d)) if d < 128 else 1
    while H % g:
        g -= 1
    G = H // g
    gd = g * d

    # --- wrapper-side weight plumbing (layout only, runs once under jit) ---
    wq, wk, wv = jnp.split(qkv_weight, 3, axis=0)               # each (H*d, C)

    def regroup(w):                                             # (H*d, C) -> (G, C, g*d)
        w = w.reshape(G, g, d, C)
        return jnp.transpose(w, (0, 3, 1, 2)).reshape(G, C, gd)

    # Fused pre-transposed per-group slab: x @ wqkv[grp] = [q_grp | k_grp | v_grp].
    wqkv = jnp.concatenate([regroup(wq), regroup(wk), regroup(wv)], axis=-1)  # (G, C, 3gd)
    wproj = jnp.transpose(proj_weight)                          # (H*d, C)
    bproj = proj_bias.reshape(1, C).astype(jnp.float32)         # (1, C)
    # exp(clamp(scale, log(100))) per head, read from SMEM in-kernel.
    logit_scale = jnp.exp(jnp.minimum(jnp.reshape(scale_param, (H,)),
                                      4.6052)).astype(jnp.float32)  # (H,)

    x_mm = x.astype(matmul_dtype)
    wqkv = wqkv.astype(matmul_dtype)
    wproj = wproj.astype(matmul_dtype)

    def kernel(x_ref, wqkv_ref, wproj_ref, scale_ref, bproj_ref, o_ref, acc_ref):
        grp = pl.program_id(1)
        mm = x_ref.dtype

        x_blk = x_ref[0]                        # (N, C)      matmul dtype
        w_grp = wqkv_ref[grp]                   # (C, 3*g*d)  resident VMEM, dynamic slice

        # One wide MXU matmul for this group's q/k/v (f32 accumulate).
        qkv = jnp.dot(x_blk, w_grp, preferred_element_type=jnp.float32)   # (N, 3gd)
        q_g = qkv[:, 0 * gd:1 * gd]
        k_g = qkv[:, 1 * gd:2 * gd]
        v_g = qkv[:, 2 * gd:3 * gd]

        outs = []
        for hh in range(g):                     # static unroll over heads in the group
            h = grp * g + hh
            q = q_g[:, hh * d:(hh + 1) * d]
            k = k_g[:, hh * d:(hh + 1) * d]
            v = v_g[:, hh * d:(hh + 1) * d]

            # F.normalize(., dim=-1) == x * rsqrt(max(||x||^2, 1e-24)); the clamped
            # per-head logit scale is folded into the (N,1) rsqrt factor for q.
            q = q * (scale_ref[h] *
                     lax.rsqrt(jnp.maximum(jnp.sum(q * q, axis=-1, keepdims=True), 1e-24)))
            k = k * lax.rsqrt(jnp.maximum(jnp.sum(k * k, axis=-1, keepdims=True), 1e-24))

            # Cosine logits via trans_b contraction (no XLU transpose of k).
            logits = lax.dot_general(
                q.astype(mm), k.astype(mm),
                (((1,), (1,)), ((), ())),
                preferred_element_type=jnp.float32)             # (N, N) f32

            # Softmax with the divide deferred to the (N, d) PV result (EUP recip).
            m = jnp.max(logits, axis=-1, keepdims=True)
            e = jnp.exp(logits - m)
            denom = jnp.sum(e, axis=-1, keepdims=True)          # (N, 1)
            o_h = jnp.dot(e.astype(mm), v.astype(mm),
                          preferred_element_type=jnp.float32)   # (N, d)
            outs.append(o_h * pl.reciprocal(denom, approx=True))

        # Lane-dense (N, g*d) group slab into the persistent (N, H*d) scratch.
        o_grp = jnp.concatenate(outs, axis=-1).astype(mm)
        for gg in range(G):                     # static offsets, one pl.when per group
            @pl.when(grp == gg)
            def _(gg=gg):
                acc_ref[:, gg * gd:(gg + 1) * gd] = o_grp

        # Single full-depth output projection + fused bias on the last group.
        @pl.when(grp == G - 1)
        def _():
            out = jnp.dot(acc_ref[...], wproj_ref[...],
                          preferred_element_type=jnp.float32)   # (N, C)
            o_ref[0] = (out + bproj_ref[...]).astype(o_ref.dtype)

    return pl.pallas_call(
        kernel,
        out_shape=jax.ShapeDtypeStruct((B, N, C), jnp.float32),
        grid_spec=pltpu.PrefetchScalarGridSpec(
            num_scalar_prefetch=0,
            grid=(B, G),
            in_specs=[
                pl.BlockSpec((1, N, C), lambda b, grp: (b, 0, 0)),   # x block (pipelined)
                pl.BlockSpec(memory_space=pltpu.MemorySpace.VMEM),   # wqkv (G,C,3gd) resident
                pl.BlockSpec(memory_space=pltpu.MemorySpace.VMEM),   # wproj (H*d,C) resident
                pl.BlockSpec(memory_space=pltpu.MemorySpace.SMEM),   # per-head logit scale (H,)
                pl.BlockSpec(memory_space=pltpu.MemorySpace.VMEM),   # proj bias (1,C) resident
            ],
            out_specs=pl.BlockSpec((1, N, C), lambda b, grp: (b, 0, 0)),
            scratch_shapes=[pltpu.VMEM((N, Hd), matmul_dtype)],      # per-batch head-concat buffer
        ),
        compiler_params=pltpu.CompilerParams(
            dimension_semantics=("parallel", "arbitrary")),
    )(x_mm, wqkv, wproj, logit_scale, bproj)


def cos_attention_ref(x, qkv_weight, scale_param, proj_weight, proj_bias, num_heads):
    """Pure-JAX reference mirroring the PyTorch forward (f32 throughout)."""
    B, N, C = x.shape
    H = num_heads
    d = qkv_weight.shape[0] // (3 * H)
    qkv = x @ qkv_weight.T                                # (B, N, 3*H*d)
    qkv = qkv.reshape(B, N, 3, H, d).transpose(2, 0, 3, 1, 4)
    q, k, v = qkv[0], qkv[1], qkv[2]                      # (B, H, N, d)
    qn = q / jnp.maximum(jnp.linalg.norm(q, axis=-1, keepdims=True), 1e-12)
    kn = k / jnp.maximum(jnp.linalg.norm(k, axis=-1, keepdims=True), 1e-12)
    attn = qn @ jnp.swapaxes(kn, -2, -1)
    logit_scale = jnp.exp(jnp.minimum(scale_param, 4.6052))   # (H,1,1)
    attn = attn * logit_scale[None]
    attn = jax.nn.softmax(attn, axis=-1)
    out = (attn @ v).transpose(0, 2, 1, 3).reshape(B, N, H * d)
    return out @ proj_weight.T + proj_bias


if __name__ == "__main__":
    # Small but lane-dense shapes (N, C multiples of 128) so stores are unmasked.
    B, N, C, H = 2, 128, 128, 4          # head_dim d = 32 -> 4 heads per group, G = 1
    key = jax.random.PRNGKey(0)
    k_x, k_qkv, k_proj_w, k_proj_b = jax.random.split(key, 4)

    x = jax.random.normal(k_x, (B, N, C), dtype=jnp.float32)

    # Deterministic parameter init (shapes from __init__, qkv_bias=False default).
    qkv_weight = 0.02 * jax.random.normal(k_qkv, (3 * C, C), dtype=jnp.float32)
    scale_param = jnp.log(10.0 * jnp.ones((H, 1, 1), dtype=jnp.float32))
    proj_weight = 0.02 * jax.random.normal(k_proj_w, (C, C), dtype=jnp.float32)
    proj_bias = 0.01 * jax.random.normal(k_proj_b, (C,), dtype=jnp.float32)

    ref = cos_attention_ref(x, qkv_weight, scale_param, proj_weight, proj_bias, H)

    # Default fast path: bf16 MXU operands, f32 accumulate/elementwise.
    out_bf16 = jax.block_until_ready(
        cos_attention(x, qkv_weight, scale_param, proj_weight, proj_bias, H))
    assert out_bf16.shape == (B, N, C)
    assert jnp.allclose(out_bf16, ref, rtol=2e-2, atol=2e-2), \
        "bf16-operand kernel mismatch vs f32 reference"

    # Full-f32 operand path validates kernel math tightly (only the EUP
    # approx-reciprocal softmax denominator differs from the reference).
    out_f32 = jax.block_until_ready(
        cos_attention(x, qkv_weight, scale_param, proj_weight, proj_bias, H,
                      matmul_dtype=jnp.float32))
    assert jnp.allclose(out_f32, ref, rtol=2e-3, atol=2e-3), \
        "f32-operand kernel mismatch vs f32 reference"

    print("KERNEL_OK")
</pallas_src>

<mosaic_0001>
module attributes {stable_mosaic.version = 11 : i64} {
  func.func @kernel(%arg0: i32, %arg1: i32, %arg2: memref<1x128x128xbf16, #tpu.memory_space<vmem>>, %arg3: memref<1x128x384xbf16, #tpu.memory_space<vmem>>, %arg4: memref<128x128xbf16, #tpu.memory_space<vmem>>, %arg5: memref<4xf32, #tpu.memory_space<smem>>, %arg6: memref<1x128xf32, #tpu.memory_space<vmem>>, %arg7: memref<1x128x128xf32, #tpu.memory_space<vmem>>, %arg8: memref<128x128xbf16, #tpu.memory_space<vmem>>) attributes {dimension_semantics = [#tpu.dimension_semantics<parallel>, #tpu.dimension_semantics<arbitrary>], iteration_bounds = array<i64: 2, 1>, scalar_prefetch = 0 : i64, scratch_operands = 1 : i64, tpu.core_type = #tpu.core_type<tc>, window_params = [{transform_indices = @transform_0, window_bounds = array<i64: 1, 128, 128>}, {pipeline_mode = #tpu.pipeline_mode<synchronous>, transform_indices = @transform_1, window_bounds = array<i64: 1, 128, 384>}, {pipeline_mode = #tpu.pipeline_mode<synchronous>, transform_indices = @transform_2, window_bounds = array<i64: 128, 128>}, {transform_indices = @transform_3, window_bounds = array<i64: 4>}, {pipeline_mode = #tpu.pipeline_mode<synchronous>, transform_indices = @transform_4, window_bounds = array<i64: 1, 128>}, {transform_indices = @transform_5, window_bounds = array<i64: 1, 128, 128>}]} {
    %c0 = arith.constant 0 : index
    %c0_0 = arith.constant 0 : index
    %c0_1 = arith.constant 0 : index
    %0 = vector.load %arg2[%c0, %c0_0, %c0_1] : memref<1x128x128xbf16, #tpu.memory_space<vmem>>, vector<1x128x128xbf16>
    %1 = vector.shape_cast %0 : vector<1x128x128xbf16> to vector<128x128xbf16>
    %2 = arith.index_cast %arg1 : i32 to index
    %c0_2 = arith.constant 0 : index
    %c0_3 = arith.constant 0 : index
    %3 = vector.load %arg3[%2, %c0_2, %c0_3] : memref<1x128x384xbf16, #tpu.memory_space<vmem>>, vector<1x128x384xbf16>
    %4 = vector.shape_cast %3 : vector<1x128x384xbf16> to vector<128x384xbf16>
    %cst = arith.constant dense<0.000000e+00> : vector<128x384xf32>
    %5 = tpu.matmul %1, %4, %cst {dimension_numbers = #tpu.dot_dimension_numbers<[1], [0], [0], [1], [0, 0, 1, 1], [], []>} : vector<128x128xbf16>, vector<128x384xbf16>, vector<128x384xf32> -> vector<128x384xf32>
    %6 = vector.extract_strided_slice %5 {offsets = [0, 0], sizes = [128, 128], strides = [1, 1]} : vector<128x384xf32> to vector<128x128xf32>
    %7 = vector.extract_strided_slice %5 {offsets = [0, 128], sizes = [128, 128], strides = [1, 1]} : vector<128x384xf32> to vector<128x128xf32>
    %8 = vector.extract_strided_slice %5 {offsets = [0, 256], sizes = [128, 128], strides = [1, 1]} : vector<128x384xf32> to vector<128x128xf32>
    %c4_i32 = arith.constant 4 : i32
    %9 = arith.muli %arg1, %c4_i32 : i32
    %c0_i32 = arith.constant 0 : i32
    %10 = arith.addi %9, %c0_i32 : i32
    %11 = vector.extract_strided_slice %6 {offsets = [0, 0], sizes = [128, 32], strides = [1, 1]} : vector<128x128xf32> to vector<128x32xf32>
    %12 = vector.extract_strided_slice %7 {offsets = [0, 0], sizes = [128, 32], strides = [1, 1]} : vector<128x128xf32> to vector<128x32xf32>
    %13 = vector.extract_strided_slice %8 {offsets = [0, 0], sizes = [128, 32], strides = [1, 1]} : vector<128x128xf32> to vector<128x32xf32>
    %14 = arith.index_cast %10 : i32 to index
    %15 = memref.load %arg5[%14] : memref<4xf32, #tpu.memory_space<smem>>
    %16 = arith.mulf %11, %11 : vector<128x32xf32>
    %cst_4 = arith.constant dense<0.000000e+00> : vector<128xf32>
    %17 = vector.multi_reduction <add>, %16, %cst_4 [1] : vector<128x32xf32> to vector<128xf32>
    %18 = vector.shape_cast %17 : vector<128xf32> to vector<128x1xf32>
    %cst_5 = arith.constant 1.000000e-24 : f32
    %19 = vector.broadcast %cst_5 : f32 to vector<128x1xf32>
    %20 = arith.maximumf %18, %19 : vector<128x1xf32>
    %21 = math.rsqrt %20 : vector<128x1xf32>
    %22 = vector.broadcast %15 : f32 to vector<128x1xf32>
    %23 = arith.mulf %22, %21 : vector<128x1xf32>
    %24 = vector.broadcast %23 : vector<128x1xf32> to vector<128x32xf32>
    %25 = arith.mulf %11, %24 : vector<128x32xf32>
    %26 = arith.mulf %12, %12 : vector<128x32xf32>
    %cst_6 = arith.constant dense<0.000000e+00> : vector<128xf32>
    %27 = vector.multi_reduction <add>, %26, %cst_6 [1] : vector<128x32xf32> to vector<128xf32>
    %28 = vector.shape_cast %27 : vector<128xf32> to vector<128x1xf32>
    %cst_7 = arith.constant 1.000000e-24 : f32
    %29 = vector.broadcast %cst_7 : f32 to vector<128x1xf32>
    %30 = arith.maximumf %28, %29 : vector<128x1xf32>
    %31 = math.rsqrt %30 : vector<128x1xf32>
    %32 = vector.broadcast %31 : vector<128x1xf32> to vector<128x32xf32>
    %33 = arith.mulf %12, %32 : vector<128x32xf32>
    %34 = arith.truncf %25 : vector<128x32xf32> to vector<128x32xbf16>
    %35 = arith.truncf %33 : vector<128x32xf32> to vector<128x32xbf16>
    %cst_8 = arith.constant dense<0.000000e+00> : vector<128x128xf32>
    %36 = tpu.matmul %34, %35, %cst_8 {dimension_numbers = #tpu.dot_dimension_numbers<[1], [1], [0], [0], [0, 0, 1, 0], [], []>} : vector<128x32xbf16>, vector<128x32xbf16>, vector<128x128xf32> -> vector<128x128xf32>
    %cst_9 = arith.constant dense<0xFF800000> : vector<128xf32>
    %37 = vector.multi_reduction <maximumf>, %36, %cst_9 [1] : vector<128x128xf32> to vector<128xf32>
    %38 = vector.shape_cast %37 : vector<128xf32> to vector<128x1xf32>
    %39 = vector.broadcast %38 : vector<128x1xf32> to vector<128x128xf32>
    %40 = arith.subf %36, %39 : vector<128x128xf32>
    %41 = math.exp %40 : vector<128x128xf32>
    %cst_10 = arith.constant dense<0.000000e+00> : vector<128xf32>
    %42 = vector.multi_reduction <add>, %41, %cst_10 [1] : vector<128x128xf32> to vector<128xf32>
    %43 = vector.shape_cast %42 : vector<128xf32> to vector<128x1xf32>
    %44 = arith.truncf %41 : vector<128x128xf32> to vector<128x128xbf16>
    %45 = arith.truncf %13 : vector<128x32xf32> to vector<128x32xbf16>
    %cst_11 = arith.constant dense<0.000000e+00> : vector<128x32xf32>
    %46 = tpu.matmul %44, %45, %cst_11 {dimension_numbers = #tpu.dot_dimension_numbers<[1], [0], [0], [1], [0, 0, 1, 1], [], []>} : vector<128x128xbf16>, vector<128x32xbf16>, vector<128x32xf32> -> vector<128x32xf32>
    %47 = tpu.reciprocal %43 {approx = true} : vector<128x1xf32> -> vector<128x1xf32>
    %48 = vector.broadcast %47 : vector<128x1xf32> to vector<128x32xf32>
    %49 = arith.mulf %46, %48 : vector<128x32xf32>
    %c4_i32_12 = arith.constant 4 : i32
    %50 = arith.muli %arg1, %c4_i32_12 : i32
    %c1_i32 = arith.constant 1 : i32
    %51 = arith.addi %50, %c1_i32 : i32
    %52 = vector.extract_strided_slice %6 {offsets = [0, 32], sizes = [128, 32], strides = [1, 1]} : vector<128x128xf32> to vector<128x32xf32>
    %53 = vector.extract_strided_slice %7 {offsets = [0, 32], sizes = [128, 32], strides = [1, 1]} : vector<128x128xf32> to vector<128x32xf32>
    %54 = vector.extract_strided_slice %8 {offsets = [0, 32], sizes = [128, 32], strides = [1, 1]} : vector<128x128xf32> to vector<128x32xf32>
    %55 = arith.index_cast %51 : i32 to index
    %56 = memref.load %arg5[%55] : memref<4xf32, #tpu.memory_space<smem>>
    %57 = arith.mulf %52, %52 : vector<128x32xf32>
    %cst_13 = arith.constant dense<0.000000e+00> : vector<128xf32>
    %58 = vector.multi_reduction <add>, %57, %cst_13 [1] : vector<128x32xf32> to vector<128xf32>
    %59 = vector.shape_cast %58 : vector<128xf32> to vector<128x1xf32>
    %cst_14 = arith.constant 1.000000e-24 : f32
    %60 = vector.broadcast %cst_14 : f32 to vector<128x1xf32>
    %61 = arith.maximumf %59, %60 : vector<128x1xf32>
    %62 = math.rsqrt %61 : vector<128x1xf32>
    %63 = vector.broadcast %56 : f32 to vector<128x1xf32>
    %64 = arith.mulf %63, %62 : vector<128x1xf32>
    %65 = vector.broadcast %64 : vector<128x1xf32> to vector<128x32xf32>
    %66 = arith.mulf %52, %65 : vector<128x32xf32>
    %67 = arith.mulf %53, %53 : vector<128x32xf32>
    %cst_15 = arith.constant dense<0.000000e+00> : vector<128xf32>
    %68 = vector.multi_reduction <add>, %67, %cst_15 [1] : vector<128x32xf32> to vector<128xf32>
    %69 = vector.shape_cast %68 : vector<128xf32> to vector<128x1xf32>
    %cst_16 = arith.constant 1.000000e-24 : f32
    %70 = vector.broadcast %cst_16 : f32 to vector<128x1xf32>
    %71 = arith.maximumf %69, %70 : vector<128x1xf32>
    %72 = math.rsqrt %71 : vector<128x1xf32>
    %73 = vector.broadcast %72 : vector<128x1xf32> to vector<128x32xf32>
    %74 = arith.mulf %53, %73 : vector<128x32xf32>
    %75 = arith.truncf %66 : vector<128x32xf32> to vector<128x32xbf16>
    %76 = arith.truncf %74 : vector<128x32xf32> to vector<128x32xbf16>
    %cst_17 = arith.constant dense<0.000000e+00> : vector<128x128xf32>
    %77 = tpu.matmul %75, %76, %cst_17 {dimension_numbers = #tpu.dot_dimension_numbers<[1], [1], [0], [0], [0, 0, 1, 0], [], []>} : vector<128x32xbf16>, vector<128x32xbf16>, vector<128x128xf32> -> vector<128x128xf32>
    %cst_18 = arith.constant dense<0xFF800000> : vector<128xf32>
    %78 = vector.multi_reduction <maximumf>, %77, %cst_18 [1] : vector<128x128xf32> to vector<128xf32>
    %79 = vector.shape_cast %78 : vector<128xf32> to vector<128x1xf32>
    %80 = vector.broadcast %79 : vector<128x1xf32> to vector<128x128xf32>
    %81 = arith.subf %77, %80 : vector<128x128xf32>
    %82 = math.exp %81 : vector<128x128xf32>
    %cst_19 = arith.constant dense<0.000000e+00> : vector<128xf32>
    %83 = vector.multi_reduction <add>, %82, %cst_19 [1] : vector<128x128xf32> to vector<128xf32>
    %84 = vector.shape_cast %83 : vector<128xf32> to vector<128x1xf32>
    %85 = arith.truncf %82 : vector<128x128xf32> to vector<128x128xbf16>
    %86 = arith.truncf %54 : vector<128x32xf32> to vector<128x32xbf16>
    %cst_20 = arith.constant dense<0.000000e+00> : vector<128x32xf32>
    %87 = tpu.matmul %85, %86, %cst_20 {dimension_numbers = #tpu.dot_dimension_numbers<[1], [0], [0], [1], [0, 0, 1, 1], [], []>} : vector<128x128xbf16>, vector<128x32xbf16>, vector<128x32xf32> -> vector<128x32xf32>
    %88 = tpu.reciprocal %84 {approx = true} : vector<128x1xf32> -> vector<128x1xf32>
    %89 = vector.broadcast %88 : vector<128x1xf32> to vector<128x32xf32>
    %90 = arith.mulf %87, %89 : vector<128x32xf32>
    %c4_i32_21 = arith.constant 4 : i32
    %91 = arith.muli %arg1, %c4_i32_21 : i32
    %c2_i32 = arith.constant 2 : i32
    %92 = arith.addi %91, %c2_i32 : i32
    %93 = vector.extract_strided_slice %6 {offsets = [0, 64], sizes = [128, 32], strides = [1, 1]} : vector<128x128xf32> to vector<128x32xf32>
    %94 = vector.extract_strided_slice %7 {offsets = [0, 64], sizes = [128, 32], strides = [1, 1]} : vector<128x128xf32> to vector<128x32xf32>
    %95 = vector.extract_strided_slice %8 {offsets = [0, 64], sizes = [128, 32], strides = [1, 1]} : vector<128x128xf32> to vector<128x32xf32>
    %96 = arith.index_cast %92 : i32 to index
    %97 = memref.load %arg5[%96] : memref<4xf32, #tpu.memory_space<smem>>
    %98 = arith.mulf %93, %93 : vector<128x32xf32>
    %cst_22 = arith.constant dense<0.000000e+00> : vector<128xf32>
    %99 = vector.multi_reduction <add>, %98, %cst_22 [1] : vector<128x32xf32> to vector<128xf32>
    %100 = vector.shape_cast %99 : vector<128xf32> to vector<128x1xf32>
    %cst_23 = arith.constant 1.000000e-24 : f32
    %101 = vector.broadcast %cst_23 : f32 to vector<128x1xf32>
    %102 = arith.maximumf %100, %101 : vector<128x1xf32>
    %103 = math.rsqrt %102 : vector<128x1xf32>
    %104 = vector.broadcast %97 : f32 to vector<128x1xf32>
    %105 = arith.mulf %104, %103 : vector<128x1xf32>
    %106 = vector.broadcast %105 : vector<128x1xf32> to vector<128x32xf32>
    %107 = arith.mulf %93, %106 : vector<128x32xf32>
    %108 = arith.mulf %94, %94 : vector<128x32xf32>
    %cst_24 = arith.constant dense<0.000000e+00> : vector<128xf32>
    %109 = vector.multi_reduction <add>, %108, %cst_24 [1] : vector<128x32xf32> to vector<128xf32>
    %110 = vector.shape_cast %109 : vector<128xf32> to vector<128x1xf32>
    %cst_25 = arith.constant 1.000000e-24 : f32
    %111 = vector.broadcast %cst_25 : f32 to vector<128x1xf32>
    %112 = arith.maximumf %110, %111 : vector<128x1xf32>
    %113 = math.rsqrt %112 : vector<128x1xf32>
    %114 = vector.broadcast %113 : vector<128x1xf32> to vector<128x32xf32>
    %115 = arith.mulf %94, %114 : vector<128x32xf32>
    %116 = arith.truncf %107 : vector<128x32xf32> to vector<128x32xbf16>
    %117 = arith.truncf %115 : vector<128x32xf32> to vector<128x32xbf16>
    %cst_26 = arith.constant dense<0.000000e+00> : vector<128x128xf32>
    %118 = tpu.matmul %116, %117, %cst_26 {dimension_numbers = #tpu.dot_dimension_numbers<[1], [1], [0], [0], [0, 0, 1, 0], [], []>} : vector<128x32xbf16>, vector<128x32xbf16>, vector<128x128xf32> -> vector<128x128xf32>
    %cst_27 = arith.constant dense<0xFF800000> : vector<128xf32>
    %119 = vector.multi_reduction <maximumf>, %118, %cst_27 [1] : vector<128x128xf32> to vector<128xf32>
    %120 = vector.shape_cast %119 : vector<128xf32> to vector<128x1xf32>
    %121 = vector.broadcast %120 : vector<128x1xf32> to vector<128x128xf32>
    %122 = arith.subf %118, %121 : vector<128x128xf32>
    %123 = math.exp %122 : vector<128x128xf32>
    %cst_28 = arith.constant dense<0.000000e+00> : vector<128xf32>
    %124 = vector.multi_reduction <add>, %123, %cst_28 [1] : vector<128x128xf32> to vector<128xf32>
    %125 = vector.shape_cast %124 : vector<128xf32> to vector<128x1xf32>
    %126 = arith.truncf %123 : vector<128x128xf32> to vector<128x128xbf16>
    %127 = arith.truncf %95 : vector<128x32xf32> to vector<128x32xbf16>
    %cst_29 = arith.constant dense<0.000000e+00> : vector<128x32xf32>
    %128 = tpu.matmul %126, %127, %cst_29 {dimension_numbers = #tpu.dot_dimension_numbers<[1], [0], [0], [1], [0, 0, 1, 1], [], []>} : vector<128x128xbf16>, vector<128x32xbf16>, vector<128x32xf32> -> vector<128x32xf32>
    %129 = tpu.reciprocal %125 {approx = true} : vector<128x1xf32> -> vector<128x1xf32>
    %130 = vector.broadcast %129 : vector<128x1xf32> to vector<128x32xf32>
    %131 = arith.mulf %128, %130 : vector<128x32xf32>
    %c4_i32_30 = arith.constant 4 : i32
    %132 = arith.muli %arg1, %c4_i32_30 : i32
    %c3_i32 = arith.constant 3 : i32
    %133 = arith.addi %132, %c3_i32 : i32
    %134 = vector.extract_strided_slice %6 {offsets = [0, 96], sizes = [128, 32], strides = [1, 1]} : vector<128x128xf32> to vector<128x32xf32>
    %135 = vector.extract_strided_slice %7 {offsets = [0, 96], sizes = [128, 32], strides = [1, 1]} : vector<128x128xf32> to vector<128x32xf32>
    %136 = vector.extract_strided_slice %8 {offsets = [0, 96], sizes = [128, 32], strides = [1, 1]} : vector<128x128xf32> to vector<128x32xf32>
    %137 = arith.index_cast %133 : i32 to index
    %138 = memref.load %arg5[%137] : memref<4xf32, #tpu.memory_space<smem>>
    %139 = arith.mulf %134, %134 : vector<128x32xf32>
    %cst_31 = arith.constant dense<0.000000e+00> : vector<128xf32>
    %140 = vector.multi_reduction <add>, %139, %cst_31 [1] : vector<128x32xf32> to vector<128xf32>
    %141 = vector.shape_cast %140 : vector<128xf32> to vector<128x1xf32>
    %cst_32 = arith.constant 1.000000e-24 : f32
    %142 = vector.broadcast %cst_32 : f32 to vector<128x1xf32>
    %143 = arith.maximumf %141, %142 : vector<128x1xf32>
    %144 = math.rsqrt %143 : vector<128x1xf32>
    %145 = vector.broadcast %138 : f32 to vector<128x1xf32>
    %146 = arith.mulf %145, %144 : vector<128x1xf32>
    %147 = vector.broadcast %146 : vector<128x1xf32> to vector<128x32xf32>
    %148 = arith.mulf %134, %147 : vector<128x32xf32>
    %149 = arith.mulf %135, %135 : vector<128x32xf32>
    %cst_33 = arith.constant dense<0.000000e+00> : vector<128xf32>
    %150 = vector.multi_reduction <add>, %149, %cst_33 [1] : vector<128x32xf32> to vector<128xf32>
    %151 = vector.shape_cast %150 : vector<128xf32> to vector<128x1xf32>
    %cst_34 = arith.constant 1.000000e-24 : f32
    %152 = vector.broadcast %cst_34 : f32 to vector<128x1xf32>
    %153 = arith.maximumf %151, %152 : vector<128x1xf32>
    %154 = math.rsqrt %153 : vector<128x1xf32>
    %155 = vector.broadcast %154 : vector<128x1xf32> to vector<128x32xf32>
    %156 = arith.mulf %135, %155 : vector<128x32xf32>
    %157 = arith.truncf %148 : vector<128x32xf32> to vector<128x32xbf16>
    %158 = arith.truncf %156 : vector<128x32xf32> to vector<128x32xbf16>
    %cst_35 = arith.constant dense<0.000000e+00> : vector<128x128xf32>
    %159 = tpu.matmul %157, %158, %cst_35 {dimension_numbers = #tpu.dot_dimension_numbers<[1], [1], [0], [0], [0, 0, 1, 0], [], []>} : vector<128x32xbf16>, vector<128x32xbf16>, vector<128x128xf32> -> vector<128x128xf32>
    %cst_36 = arith.constant dense<0xFF800000> : vector<128xf32>
    %160 = vector.multi_reduction <maximumf>, %159, %cst_36 [1] : vector<128x128xf32> to vector<128xf32>
    %161 = vector.shape_cast %160 : vector<128xf32> to vector<128x1xf32>
    %162 = vector.broadcast %161 : vector<128x1xf32> to vector<128x128xf32>
    %163 = arith.subf %159, %162 : vector<128x128xf32>
    %164 = math.exp %163 : vector<128x128xf32>
    %cst_37 = arith.constant dense<0.000000e+00> : vector<128xf32>
    %165 = vector.multi_reduction <add>, %164, %cst_37 [1] : vector<128x128xf32> to vector<128xf32>
    %166 = vector.shape_cast %165 : vector<128xf32> to vector<128x1xf32>
    %167 = arith.truncf %164 : vector<128x128xf32> to vector<128x128xbf16>
    %168 = arith.truncf %136 : vector<128x32xf32> to vector<128x32xbf16>
    %cst_38 = arith.constant dense<0.000000e+00> : vector<128x32xf32>
    %169 = tpu.matmul %167, %168, %cst_38 {dimension_numbers = #tpu.dot_dimension_numbers<[1], [0], [0], [1], [0, 0, 1, 1], [], []>} : vector<128x128xbf16>, vector<128x32xbf16>, vector<128x32xf32> -> vector<128x32xf32>
    %170 = tpu.reciprocal %166 {approx = true} : vector<128x1xf32> -> vector<128x1xf32>
    %171 = vector.broadcast %170 : vector<128x1xf32> to vector<128x32xf32>
    %172 = arith.mulf %169, %171 : vector<128x32xf32>
    %173 = tpu.concatenate %49, %90, %131, %172 in 1 : vector<128x32xf32>, vector<128x32xf32>, vector<128x32xf32>, vector<128x32xf32> -> vector<128x128xf32>
    %174 = arith.truncf %173 : vector<128x128xf32> to vector<128x128xbf16>
    %c0_i32_39 = arith.constant 0 : i32
    %175 = arith.cmpi eq, %arg1, %c0_i32_39 : i32
    %176 = arith.extui %175 : i1 to i32
    %c0_i32_40 = arith.constant 0 : i32
    %177 = arith.cmpi ne, %176, %c0_i32_40 : i32
    scf.if %177 {
      %c0_43 = arith.constant 0 : index
      %c0_44 = arith.constant 0 : index
      %181 = vector.load %arg8[%c0_43, %c0_44] : memref<128x128xbf16, #tpu.memory_space<vmem>>, vector<128x128xbf16>
      tpu.vector_store %arg8[%c0_43, %c0_44], %174 {strides = array<i32>} : memref<128x128xbf16, #tpu.memory_space<vmem>>, vector<128x128xbf16>,
    } else {
    }
    %c0_i32_41 = arith.constant 0 : i32
    %178 = arith.cmpi eq, %arg1, %c0_i32_41 : i32
    %179 = arith.extui %178 : i1 to i32
    %c0_i32_42 = arith.constant 0 : i32
    %180 = arith.cmpi ne, %179, %c0_i32_42 : i32
    scf.if %180 {
      %c0_43 = arith.constant 0 : index
      %c0_44 = arith.constant 0 : index
      %181 = vector.load %arg8[%c0_43, %c0_44] : memref<128x128xbf16, #tpu.memory_space<vmem>>, vector<128x128xbf16>
      %c0_45 = arith.constant 0 : index
      %c0_46 = arith.constant 0 : index
      %182 = vector.load %arg4[%c0_45, %c0_46] : memref<128x128xbf16, #tpu.memory_space<vmem>>, vector<128x128xbf16>
      %cst_47 = arith.constant dense<0.000000e+00> : vector<128x128xf32>
      %183 = tpu.matmul %181, %182, %cst_47 {dimension_numbers = #tpu.dot_dimension_numbers<[1], [0], [0], [1], [0, 0, 1, 1], [], []>} : vector<128x128xbf16>, vector<128x128xbf16>, vector<128x128xf32> -> vector<128x128xf32>
      %c0_48 = arith.constant 0 : index
      %c0_49 = arith.constant 0 : index
      %184 = vector.load %arg6[%c0_48, %c0_49] : memref<1x128xf32, #tpu.memory_space<vmem>>, vector<1x128xf32>
      %185 = vector.broadcast %184 : vector<1x128xf32> to vector<128x128xf32>
      %186 = arith.addf %183, %185 : vector<128x128xf32>
      %c0_50 = arith.constant 0 : index
      %c0_51 = arith.constant 0 : index
      %c0_52 = arith.constant 0 : index
      %187 = vector.load %arg7[%c0_50, %c0_51, %c0_52] : memref<1x128x128xf32, #tpu.memory_space<vmem>>, vector<1x128x128xf32>
      %188 = vector.shape_cast %187 : vector<1x128x128xf32> to vector<128x128xf32>
      %189 = vector.shape_cast %186 : vector<128x128xf32> to vector<1x128x128xf32>
      tpu.vector_store %arg7[%c0_50, %c0_51, %c0_52], %189 {strides = array<i32>} : memref<1x128x128xf32, #tpu.memory_space<vmem>>, vector<1x128x128xf32>,
    } else {
    }
    return
  }
  func.func @transform_0(%arg0: i32, %arg1: i32) -> (i32, i32, i32) {
    %c0_i32 = arith.constant 0 : i32
    %c0_i32_0 = arith.constant 0 : i32
    %c0_i32_1 = arith.constant 0 : i32
    return %arg0, %c0_i32, %c0_i32_0 : i32, i32, i32
  }
  func.func @transform_1(%arg0: i32, %arg1: i32) -> (i32, i32, i32) {
    %c0_i32 = arith.constant 0 : i32
    %c0_i32_0 = arith.constant 0 : i32
    %c0_i32_1 = arith.constant 0 : i32
    %c0_i32_2 = arith.constant 0 : i32
    return %c0_i32, %c0_i32_0, %c0_i32_1 : i32, i32, i32
  }
  func.func @transform_2(%arg0: i32, %arg1: i32) -> (i32, i32) {
    %c0_i32 = arith.constant 0 : i32
    %c0_i32_0 = arith.constant 0 : i32
    %c0_i32_1 = arith.constant 0 : i32
    return %c0_i32, %c0_i32_0 : i32, i32
  }
  func.func @transform_3(%arg0: i32, %arg1: i32) -> i32 {
    %c0_i32 = arith.constant 0 : i32
    %c0_i32_0 = arith.constant 0 : i32
    return %c0_i32 : i32
  }
  func.func @transform_4(%arg0: i32, %arg1: i32) -> (i32, i32) {
    %c0_i32 = arith.constant 0 : i32
    %c0_i32_0 = arith.constant 0 : i32
    %c0_i32_1 = arith.constant 0 : i32
    return %c0_i32, %c0_i32_0 : i32, i32
  }
  func.func @transform_5(%arg0: i32, %arg1: i32) -> (i32, i32, i32) {
    %c0_i32 = arith.constant 0 : i32
    %c0_i32_0 = arith.constant 0 : i32
    %c0_i32_1 = arith.constant 0 : i32
    return %arg0, %c0_i32, %c0_i32_0 : i32, i32, i32
  }
}

</mosaic_0001>

<llo_original>
// kernel: tpu_custom_call.1
$region0: #{tpu_custom_call.1}
  #allocation0 [shape = 'u32[]', space=smem, size = 0x4, offset = 0x4, fixed_abs, tag = 'smem constant byte address 0x4 - core index']
  #allocation1 [shape = 'u32[144,128]{1,0:T(1,128)}', space=vmem, size = 0x12000, scoped, tag = 'internal scratch']
  #allocation2 [shape = 'bf16[128,128]{1,0:T(16,128)(2,1)}', space=vmem, size = 0x8000, scoped, tag = 'scratch operand']
  %s0 = inlined_call_operand.hbm [shape: bf16[2,128,128], index: 0, kind: input, shape index: {}]
  %s1 = inlined_call_operand.hbm [shape: bf16[1,128,384], index: 1, kind: input, shape index: {}]
  %s2 = inlined_call_operand.hbm [shape: bf16[128,128], index: 2, kind: input, shape index: {}]
  %s3 = inlined_call_operand.vmem [shape: f32[4], index: 3, kind: input, shape index: {}]
  %s4 = inlined_call_operand.vmem [shape: f32[1,128], index: 4, kind: input, shape index: {}]
  %s5 = inlined_call_operand.hbm [shape: f32[2,128,128], index: 5, kind: output, shape index: {}]
  %s6 = sld [smem:[#allocation0]]
  $region73: #{tpu_custom_call.1} parent=0
    _
  %s8 = ssub.s32 1, %s6
  %s9 = scalar_select 0, %s8, %s6
  $region1: #{tpu_custom_call.1} parent=0
    #allocation3 [shape = 'u8[65536]{0}', space=vmem, size = 0x10000, scoped, tag = 'input window, operand 0']
    #allocation4 [shape = 's32[2]{0}', space=sflag, size = 0x8, scoped, tag = 'scoped memory for tpu_custom_call.1']
    #allocation5 [shape = 's32[2]{0}', space=sflag, size = 0x8, scoped, tag = 'scoped memory for tpu_custom_call.1']
    #allocation6 [shape = 's32[2]{0}', space=sflag, size = 0x8, scoped, tag = 'scoped memory for tpu_custom_call.1']
    #allocation7 [shape = 'u8[98304]{0}', space=vmem, size = 0x18000, scoped, tag = 'input window, operand 1, single buffered']
    #allocation8 [shape = 's32[1]{0}', space=sflag, size = 0x4, scoped, tag = 'scoped memory for tpu_custom_call.1']
    #allocation9 [shape = 'u8[32768]{0}', space=vmem, size = 0x8000, scoped, tag = 'input window, operand 2, single buffered']
    #allocation10 [shape = 'u8[512]{0}', space=smem, size = 0x200, scoped, tag = 'input window, operand 3, single buffered']
    #allocation11 [shape = 'u8[131072]{0}', space=vmem, size = 0x20000, scoped, tag = 'output window, operand 0']
    %10 = vsyncpa [#allocation4], 0
    %s11 = scalar_lea.sflag [#allocation4], 1
    %12 = vsyncpa %s11, 0
    %13 = vsyncpa [#allocation8], 0
    %14 = vsyncpa [#allocation6], 0
    %15 = vsyncpa [#allocation5], 0
    %s16 = scalar_lea.sflag [#allocation5], 1
    %17 = vsyncpa %s16, 0
    loop: start=0, step=1, limit=4
    $region2: #{tpu_custom_call.1} parent=1 // loop_pre_header
      _
    $region3: #{tpu_custom_call.1} parent=1 // loop_header
      %s19 = sphi 0, %s23
      %p20 = scmp.ge.s32.totalorder %s19, 4
      %s26 = sphi 0, %s38
      %s27 = sphi 0, %s34
      %s28 = sphi 0, %s26
      %s29 = sphi 0, %s27
      %s30 = sphi 0, %s28
      %s31 = sphi 0, %s29
      %s41 = sphi 0, %s43
      %s44 = sphi 0, %s41
      %s45 = sphi 0, %s44
      %s61 = sphi 0, %s45
      %s65 = sphi 0, %s65
      %s67 = sphi 0, %s65
      %s68 = sphi 0, %s67
      %s82 = sphi 0, %s68
      %s86 = sphi 0, %s86
      %s88 = sphi 0, %s86
      %s89 = sphi 0, %s88
      %s103 = sphi 0, %s89
      %s107 = sphi 0, %s107
      %s109 = sphi 0, %s107
      %s110 = sphi 0, %s109
      %s124 = sphi 0, %s110
      %s128 = sphi 0, %s128
      %s130 = sphi 0, %s128
      %s131 = sphi 0, %s130
      %s145 = sphi 0, %s131
      %s151 = sphi 0, %s153
      %s154 = sphi 0, %s151
      %s155 = sphi 0, %s154
      %s171 = sphi 0, %s155
    $region4: #{tpu_custom_call.1} parent=1 // loop_header_branch
      %22 = sbr.rel (%p20) target = $region8
    $region5: #{tpu_custom_call.1} parent=1 // loop_body
      %s24 = ssub.s32 %s19, 1
      %s25 = ssub.s32 %s19, 2
      %s32 = sadd.s32 1, %s27
      %p33 = scmp.ge.s32.totalorder %s32, 1
      %s34 = scalar_select %p33, 0, %s32
      %s35 = sadd.s32 1, %s26
      %s36 = scalar_select %p33, %s35, %s26
      %p37 = scmp.ge.s32.totalorder %s36, 2
      %s38 = scalar_select %p37, 0, %s36
      %s39 = ssub.s32 %s26, %s38
      %p40 = scmp.eq.s32.totalorder %s39, 0
      %s42 = sadd.s32 %s41, 1
      %s43 = scalar_select %p40, %s41, %s42
      %p46 = pneg %p40
      %p47 = scmp.eq.s32.totalorder %s19, 1
      %p48 = por %p46, %p47
      %p49 = scmp.ne.s32.totalorder %s41, %s44
      %p50 = scmp.eq.s32.totalorder %s19, 0
      %p51 = por %p49, %p50
      %p52 = scmp.ne.s32.totalorder %s41, %s44
      %p53 = scmp.eq.s32.totalorder %s24, 1
      %p54 = por %p52, %p53
      %p55 = scmp.ne.s32.totalorder %s44, %s45
      %p56 = scmp.eq.s32.totalorder %s24, 0
      %p57 = por %p55, %p56
      %p58 = scmp.ne.s32.totalorder %s44, %s45
      %p59 = scmp.eq.s32.totalorder %s25, 1
      %p60 = por %p58, %p59
      %p62 = scmp.ne.s32.totalorder %s45, %s61
      %p63 = scmp.eq.s32.totalorder %s25, 0
      %p64 = por %p62, %p63
      %s66 = sadd.s32 %s65, 1
      %p69 = scmp.eq.s32.totalorder %s19, 1
      %p70 = scmp.ne.s32.totalorder %s65, %s67
      %p71 = scmp.eq.s32.totalorder %s19, 0
      %p72 = por %p70, %p71
      %p73 = scmp.ne.s32.totalorder %s65, %s67
      %p74 = scmp.eq.s32.totalorder %s24, 1
      %p75 = por %p73, %p74
      %p76 = scmp.ne.s32.totalorder %s67, %s68
      %p77 = scmp.eq.s32.totalorder %s24, 0
      %p78 = por %p76, %p77
      %p79 = scmp.ne.s32.totalorder %s67, %s68
      %p80 = scmp.eq.s32.totalorder %s25, 1
      %p81 = por %p79, %p80
      %p83 = scmp.ne.s32.totalorder %s68, %s82
      %p84 = scmp.eq.s32.totalorder %s25, 0
      %p85 = por %p83, %p84
      %s87 = sadd.s32 %s86, 1
      %p90 = scmp.eq.s32.totalorder %s19, 1
      %p91 = scmp.ne.s32.totalorder %s86, %s88
      %p92 = scmp.eq.s32.totalorder %s19, 0
      %p93 = por %p91, %p92
      %p94 = scmp.ne.s32.totalorder %s86, %s88
      %p95 = scmp.eq.s32.totalorder %s24, 1
      %p96 = por %p94, %p95
      %p97 = scmp.ne.s32.totalorder %s88, %s89
      %p98 = scmp.eq.s32.totalorder %s24, 0
      %p99 = por %p97, %p98
      %p100 = scmp.ne.s32.totalorder %s88, %s89
      %p101 = scmp.eq.s32.totalorder %s25, 1
      %p102 = por %p100, %p101
      %p104 = scmp.ne.s32.totalorder %s89, %s103
      %p105 = scmp.eq.s32.totalorder %s25, 0
      %p106 = por %p104, %p105
      %s108 = sadd.s32 %s107, 1
      %p111 = scmp.eq.s32.totalorder %s19, 1
      %p112 = scmp.ne.s32.totalorder %s107, %s109
      %p113 = scmp.eq.s32.totalorder %s19, 0
      %p114 = por %p112, %p113
      %p115 = scmp.ne.s32.totalorder %s107, %s109
      %p116 = scmp.eq.s32.totalorder %s24, 1
      %p117 = por %p115, %p116
      %p118 = scmp.ne.s32.totalorder %s109, %s110
      %p119 = scmp.eq.s32.totalorder %s24, 0
      %p120 = por %p118, %p119
      %p121 = scmp.ne.s32.totalorder %s109, %s110
      %p122 = scmp.eq.s32.totalorder %s25, 1
      %p123 = por %p121, %p122
      %p125 = scmp.ne.s32.totalorder %s110, %s124
      %p126 = scmp.eq.s32.totalorder %s25, 0
      %p127 = por %p125, %p126
      %s129 = sadd.s32 %s128, 1
      %p132 = scmp.eq.s32.totalorder %s19, 1
      %p133 = scmp.ne.s32.totalorder %s128, %s130
      %p134 = scmp.eq.s32.totalorder %s19, 0
      %p135 = por %p133, %p134
      %p136 = scmp.ne.s32.totalorder %s128, %s130
      %p137 = scmp.eq.s32.totalorder %s24, 1
      %p138 = por %p136, %p137
      %p139 = scmp.ne.s32.totalorder %s130, %s131
      %p140 = scmp.eq.s32.totalorder %s24, 0
      %p141 = por %p139, %p140
      %p142 = scmp.ne.s32.totalorder %s130, %s131
      %p143 = scmp.eq.s32.totalorder %s25, 1
      %p144 = por %p142, %p143
      %p146 = scmp.ne.s32.totalorder %s131, %s145
      %p147 = scmp.eq.s32.totalorder %s25, 0
      %p148 = por %p146, %p147
      %s149 = ssub.s32 %s26, %s38
      %p150 = scmp.eq.s32.totalorder %s149, 0
      %s152 = sadd.s32 %s151, 1
      %s153 = scalar_select %p150, %s151, %s152
      %p156 = pneg %p150
      %p157 = scmp.eq.s32.totalorder %s19, 1
      %p158 = por %p156, %p157
      %p159 = scmp.ne.s32.totalorder %s151, %s154
      %p160 = scmp.eq.s32.totalorder %s19, 0
      %p161 = por %p159, %p160
      %p162 = scmp.ne.s32.totalorder %s151, %s154
      %p163 = scmp.eq.s32.totalorder %s24, 1
      %p164 = por %p162, %p163
      %p165 = scmp.ne.s32.totalorder %s154, %s155
      %p166 = scmp.eq.s32.totalorder %s24, 0
      %p167 = por %p165, %p166
      %p168 = scmp.ne.s32.totalorder %s154, %s155
      %p169 = scmp.eq.s32.totalorder %s25, 1
      %p170 = por %p168, %p169
      %p172 = scmp.ne.s32.totalorder %s155, %s171
      %p173 = scmp.eq.s32.totalorder %s25, 0
      %p174 = por %p172, %p173
      %p175 = scmp.le.s32.totalorder 1, %s19
      %p176 = scmp.lt.s32.totalorder %s19, 3
      %p177 = pnand %p175, %p176
      %p178 = pneg %p177
      // Predicated region
      $region9: #{tpu_custom_call.1} parent=5 // pred_check
        _
      $region10: #{tpu_custom_call.1} parent=5 // pred_check_branch
        %180 = sbr.rel (%p177) target = $region12
      $region11: #{tpu_custom_call.1} parent=5 // pred_region
        %s181 = ssub.s32 %s19, 1
        // Predicated region
        $region13: #{tpu_custom_call.1} parent=11 // pred_check
          %p182 = pneg %p78
        $region14: #{tpu_custom_call.1} parent=11 // pred_check_branch
          %184 = sbr.rel (%p182) target = $region16
        $region15: #{tpu_custom_call.1} parent=11 // pred_region
          %s186 = ssub.s32 3072, 3072
          %187 = vsyncadd [#allocation8], %s186
          %s188 = sshll.u32 [#allocation7], 4
          %s189 = int_to_ptr.vmem [resolvable:$true] %s188
          %194 = dma.hbm_to_vmem [thread:$0]  %s1, 3072, %s189, [#allocation8], 192, 192, 12
        $region16: #{tpu_custom_call.1} parent=11 // pred_fallthru
          _
        // Predicated region
        $region17: #{tpu_custom_call.1} parent=11 // pred_check
          %p195 = pneg %p99
        $region18: #{tpu_custom_call.1} parent=11 // pred_check_branch
          %197 = sbr.rel (%p195) target = $region20
        $region19: #{tpu_custom_call.1} parent=11 // pred_region
          %s199 = ssub.s32 1024, 1024
          %200 = vsyncadd [#allocation8], %s199
          %s201 = sshll.u32 [#allocation9], 4
          %s202 = int_to_ptr.vmem [resolvable:$true] %s201
          %207 = dma.hbm_to_vmem [thread:$0]  %s2, 1024, %s202, [#allocation8], 64, 64, 4
        $region20: #{tpu_custom_call.1} parent=11 // pred_fallthru
          _
        // Predicated region
        $region21: #{tpu_custom_call.1} parent=11 // pred_check
          %p208 = pneg %p120
        $region22: #{tpu_custom_call.1} parent=11 // pred_check_branch
          %210 = sbr.rel (%p208) target = $region24
        $region23: #{tpu_custom_call.1} parent=11 // pred_region
          %s212 = ssub.s32 16, 16
          %213 = vsyncadd [#allocation6], %s212
          %s215 = sshll.u32 %s3, 4
          %s216 = int_to_ptr.vmem [resolvable:$true] %s215
          %218 = dma.vmem_to_smem %s216, 16, [#allocation10], [#allocation6]
        $region24: #{tpu_custom_call.1} parent=11 // pred_fallthru
          _
        // Predicated region
        $region25: #{tpu_custom_call.1} parent=11 // pred_check
          %p219 = pneg %p141
        $region26: #{tpu_custom_call.1} parent=11 // pred_check_branch
          %221 = sbr.rel (%p219) target = $region28
        $region27: #{tpu_custom_call.1} parent=11 // pred_region
          _
        $region28: #{tpu_custom_call.1} parent=11 // pred_fallthru
          _
      $region12: #{tpu_custom_call.1} parent=5 // pred_fallthru
        _
      %p222 = scmp.lt.s32.totalorder %s19, 2
      // Predicated region
      $region29: #{tpu_custom_call.1} parent=5 // pred_check
        %p223 = pneg %p222
      $region30: #{tpu_custom_call.1} parent=5 // pred_check_branch
        %225 = sbr.rel (%p223) target = $region32
      $region31: #{tpu_custom_call.1} parent=5 // pred_region
        // Predicated region
        $region33: #{tpu_custom_call.1} parent=31 // pred_check
          %p226 = pneg %p51
        $region34: #{tpu_custom_call.1} parent=31 // pred_check_branch
          %228 = sbr.rel (%p226) target = $region36
        $region35: #{tpu_custom_call.1} parent=31 // pred_region
          %s229 = sand.u32 %s41, 1
          %s230 = scalar_lea.sflag [#allocation4], %s229
          %s231 = sand.u32 %s41, 1
          %s232 = smul.addr %s231, 64
          %s233 = scalar_lea.vmem [#allocation3], %s232
          %s235 = ssub.s32 1024, 1024
          %236 = vsyncadd %s230, %s235
          %s237 = smul.addr %s26, 16
          %s238 = smul.addr %s237, 64
          %s239 = scalar_lea.hbm %s0, %s238
          %s240 = sshll.u32 %s233, 4
          %s241 = int_to_ptr.vmem [resolvable:$true] %s240
          %246 = dma.hbm_to_vmem [thread:$0]  %s239, 1024, %s241, %s230, 64, 64, 4
        $region36: #{tpu_custom_call.1} parent=31 // pred_fallthru
          _
      $region32: #{tpu_custom_call.1} parent=5 // pred_fallthru
        _
      %p247 = scmp.le.s32.totalorder 1, %s19
      %p248 = scmp.lt.s32.totalorder %s19, 3
      %p249 = pnand %p247, %p248
      %p250 = pneg %p249
      // Predicated region
      $region37: #{tpu_custom_call.1} parent=5 // pred_check
        _
      $region38: #{tpu_custom_call.1} parent=5 // pred_check_branch
        %252 = sbr.rel (%p249) target = $region40
      $region39: #{tpu_custom_call.1} parent=5 // pred_region
        %s253 = ssub.s32 %s19, 1
        %s254 = sand.u32 %s44, 1
        %s255 = scalar_lea.sflag [#allocation4], %s254
        %s256 = sand.u32 %s44, 1
        %s257 = smul.addr %s256, 64
        %s258 = scalar_lea.vmem [#allocation3], %s257
        // Predicated region
        $region41: #{tpu_custom_call.1} parent=39 // pred_check
          %p259 = pneg %p57
        $region42: #{tpu_custom_call.1} parent=39 // pred_check_branch
          %261 = sbr.rel (%p259) target = $region44
        $region43: #{tpu_custom_call.1} parent=39 // pred_region
          %262 = dma.done %s255, 1024
        $region44: #{tpu_custom_call.1} parent=39 // pred_fallthru
          _
        // Predicated region
        $region45: #{tpu_custom_call.1} parent=39 // pred_check
          %p263 = pneg %p78
        $region46: #{tpu_custom_call.1} parent=39 // pred_check_branch
          %265 = sbr.rel (%p263) target = $region48
        $region47: #{tpu_custom_call.1} parent=39 // pred_region
          %266 = dma.done [#allocation8], 3072
        $region48: #{tpu_custom_call.1} parent=39 // pred_fallthru
          _
        // Predicated region
        $region49: #{tpu_custom_call.1} parent=39 // pred_check
          %p267 = pneg %p99
        $region50: #{tpu_custom_call.1} parent=39 // pred_check_branch
          %269 = sbr.rel (%p267) target = $region52
        $region51: #{tpu_custom_call.1} parent=39 // pred_region
          %270 = dma.done [#allocation8], 1024
        $region52: #{tpu_custom_call.1} parent=39 // pred_fallthru
          _
        // Predicated region
        $region53: #{tpu_custom_call.1} parent=39 // pred_check
          %p271 = pneg %p120
        $region54: #{tpu_custom_call.1} parent=39 // pred_check_branch
          %273 = sbr.rel (%p271) target = $region56
        $region55: #{tpu_custom_call.1} parent=39 // pred_region
          %274 = dma.done [#allocation6], 16
        $region56: #{tpu_custom_call.1} parent=39 // pred_fallthru
          _
        %275 = sfence
        %s276 = sand.u32 %s44, 1
        %s277 = scalar_lea.sflag [#allocation4], %s276
        %s278 = sand.u32 %s44, 1
        %s279 = smul.addr %s278, 64
        %s280 = scalar_lea.vmem [#allocation3], %s279
        %p281 = pneg %p57
        %p282 = pneg %p54
        %p283 = pneg %p78
        %p284 = pneg %p75
        %p285 = pneg %p99
        %p286 = pneg %p96
        %p287 = pneg %p120
        %p288 = pneg %p117
        %p289 = pneg %p141
        %p290 = pneg %p138
        %p291 = pneg %p167
        %p292 = pneg %p164
        %s293 = sand.u32 %s154, 1
        %s294 = scalar_lea.sflag [#allocation5], %s293
        %s295 = sand.u32 %s154, 1
        %s296 = smul.addr %s295, 128
        %s297 = scalar_lea.vmem [#allocation11], %s296
        %v299 = vld [vmem:[%s258] sm:$0xf]
        %v300 = vld [vmem:[%s258 + $0x4] sm:$0xf]
        %v301 = vld [vmem:[%s258 + $0x8] sm:$0xf]
        %v302 = vld [vmem:[%s258 + $0xc] sm:$0xf]
        %v303 = vld [vmem:[%s258 + $0x10] sm:$0xf]
        %v304 = vld [vmem:[%s258 + $0x14] sm:$0xf]
        %v305 = vld [vmem:[%s258 + $0x18] sm:$0xf]
        %v306 = vld [vmem:[%s258 + $0x1c] sm:$0xf]
        %v307 = vld [vmem:[%s258 + $0x20] sm:$0xf]
        %v308 = vld [vmem:[%s258 + $0x24] sm:$0xf]
        %v309 = vld [vmem:[%s258 + $0x28] sm:$0xf]
        %v310 = vld [vmem:[%s258 + $0x2c] sm:$0xf]
        %v311 = vld [vmem:[%s258 + $0x30] sm:$0xf]
        %v312 = vld [vmem:[%s258 + $0x34] sm:$0xf]
        %v313 = vld [vmem:[%s258 + $0x38] sm:$0xf]
        %v314 = vld [vmem:[%s258 + $0x3c] sm:$0xf]
        %s315 = smul.u32 %s29, 48
        %s316 = smul.addr %s315, 4
        %s317 = scalar_lea.vmem [#allocation7], %s316
        %v318 = vld [vmem:[%s317] sm:$0xff]
        %v319 = vld [vmem:[%s317 + $0x8] sm:$0xf]
        %v320 = vld [vmem:[%s317 + $0xc] sm:$0xff]
        %v321 = vld [vmem:[%s317 + $0x14] sm:$0xf]
        %v322 = vld [vmem:[%s317 + $0x18] sm:$0xff]
        %v323 = vld [vmem:[%s317 + $0x20] sm:$0xf]
        %v324 = vld [vmem:[%s317 + $0x24] sm:$0xff]
        %v325 = vld [vmem:[%s317 + $0x2c] sm:$0xf]
        %v326 = vld [vmem:[%s317 + $0x30] sm:$0xff]
        %v327 = vld [vmem:[%s317 + $0x38] sm:$0xf]
        %v328 = vld [vmem:[%s317 + $0x3c] sm:$0xff]
        %v329 = vld [vmem:[%s317 + $0x44] sm:$0xf]
        %v330 = vld [vmem:[%s317 + $0x48] sm:$0xff]
        %v331 = vld [vmem:[%s317 + $0x50] sm:$0xf]
        %v332 = vld [vmem:[%s317 + $0x54] sm:$0xff]
        %v333 = vld [vmem:[%s317 + $0x5c] sm:$0xf]
        %v334 = vld [vmem:[%s317 + $0x60] sm:$0xff]
        %v335 = vld [vmem:[%s317 + $0x68] sm:$0xf]
        %v336 = vld [vmem:[%s317 + $0x6c] sm:$0xff]
        %v337 = vld [vmem:[%s317 + $0x74] sm:$0xf]
        %v338 = vld [vmem:[%s317 + $0x78] sm:$0xff]
        %v339 = vld [vmem:[%s317 + $0x80] sm:$0xf]
        %v340 = vld [vmem:[%s317 + $0x84] sm:$0xff]
        %v341 = vld [vmem:[%s317 + $0x8c] sm:$0xf]
        %v342 = vld [vmem:[%s317 + $0x90] sm:$0xff]
        %v343 = vld [vmem:[%s317 + $0x98] sm:$0xf]
        %v344 = vld [vmem:[%s317 + $0x9c] sm:$0xff]
        %v345 = vld [vmem:[%s317 + $0xa4] sm:$0xf]
        %v346 = vld [vmem:[%s317 + $0xa8] sm:$0xff]
        %v347 = vld [vmem:[%s317 + $0xb0] sm:$0xf]
        %v348 = vld [vmem:[%s317 + $0xb4] sm:$0xff]
        %v349 = vld [vmem:[%s317 + $0xbc] sm:$0xf]
        %v366 = vunpack.c.l.b16 %v299
        %v367 = vunpack.c.l.b16 %v300
        %v368 = vunpack.c.l.b16 %v301
        %v369 = vunpack.c.l.b16 %v302
        %v370 = vunpack.c.l.b16 %v303
        %v371 = vunpack.c.l.b16 %v304
        %v372 = vunpack.c.l.b16 %v305
        %v373 = vunpack.c.l.b16 %v306
        %v374 = vunpack.c.l.b16 %v307
        %v375 = vunpack.c.l.b16 %v308
        %v376 = vunpack.c.l.b16 %v309
        %v377 = vunpack.c.l.b16 %v310
        %v378 = vunpack.c.l.b16 %v311
        %v379 = vunpack.c.l.b16 %v312
        %v380 = vunpack.c.l.b16 %v313
        %v381 = vunpack.c.l.b16 %v314
        %v382 = vpack.c.b16 %v367, %v366
        %v383 = vpack.c.b16 %v369, %v368
        %v384 = vpack.c.b16 %v371, %v370
        %v385 = vpack.c.b16 %v373, %v372
        %v386 = vpack.c.b16 %v375, %v374
        %v387 = vpack.c.b16 %v377, %v376
        %v388 = vpack.c.b16 %v379, %v378
        %v389 = vpack.c.b16 %v381, %v380
        %v430 = vunpack.c.l.b16 %v318
        %v431 = vunpack.c.h.b16 %v318
        %v432 = vunpack.c.l.b16 %v319
        %v433 = vunpack.c.l.b16 %v320
        %v434 = vunpack.c.h.b16 %v320
        %v435 = vunpack.c.l.b16 %v321
        %v436 = vunpack.c.l.b16 %v322
        %v437 = vunpack.c.h.b16 %v322
        %v438 = vunpack.c.l.b16 %v323
        %v439 = vunpack.c.l.b16 %v324
        %v440 = vunpack.c.h.b16 %v324
        %v441 = vunpack.c.l.b16 %v325
        %v442 = vunpack.c.l.b16 %v326
        %v443 = vunpack.c.h.b16 %v326
        %v444 = vunpack.c.l.b16 %v327
        %v445 = vunpack.c.l.b16 %v328
        %v446 = vunpack.c.h.b16 %v328
        %v447 = vunpack.c.l.b16 %v329
        %v448 = vunpack.c.l.b16 %v330
        %v449 = vunpack.c.h.b16 %v330
        %v450 = vunpack.c.l.b16 %v331
        %v451 = vunpack.c.l.b16 %v332
        %v452 = vunpack.c.h.b16 %v332
        %v453 = vunpack.c.l.b16 %v333
        %v454 = vunpack.c.l.b16 %v334
        %v455 = vunpack.c.h.b16 %v334
        %v456 = vunpack.c.l.b16 %v335
        %v457 = vunpack.c.l.b16 %v336
        %v458 = vunpack.c.h.b16 %v336
        %v459 = vunpack.c.l.b16 %v337
        %v460 = vunpack.c.l.b16 %v338
        %v461 = vunpack.c.h.b16 %v338
        %v462 = vunpack.c.l.b16 %v339
        %v463 = vunpack.c.l.b16 %v340
        %v464 = vunpack.c.h.b16 %v340
        %v465 = vunpack.c.l.b16 %v341
        %v466 = vunpack.c.l.b16 %v342
        %v467 = vunpack.c.h.b16 %v342
        %v468 = vunpack.c.l.b16 %v343
        %v469 = vunpack.c.l.b16 %v344
        %v470 = vunpack.c.h.b16 %v344
        %v471 = vunpack.c.l.b16 %v345
        %v472 = vunpack.c.l.b16 %v346
        %v473 = vunpack.c.h.b16 %v346
        %v474 = vunpack.c.l.b16 %v347
        %v475 = vunpack.c.l.b16 %v348
        %v476 = vunpack.c.h.b16 %v348
        %v477 = vunpack.c.l.b16 %v349
        %v478 = vpack.c.b16 %v433, %v430
        %v479 = vpack.c.b16 %v434, %v431
        %v480 = vpack.c.b16 %v435, %v432
        %v481 = vpack.c.b16 %v439, %v436
        %v482 = vpack.c.b16 %v440, %v437
        %v483 = vpack.c.b16 %v441, %v438
        %v484 = vpack.c.b16 %v445, %v442
        %v485 = vpack.c.b16 %v446, %v443
        %v486 = vpack.c.b16 %v447, %v444
        %v487 = vpack.c.b16 %v451, %v448
        %v488 = vpack.c.b16 %v452, %v449
        %v489 = vpack.c.b16 %v453, %v450
        %v490 = vpack.c.b16 %v457, %v454
        %v491 = vpack.c.b16 %v458, %v455
        %v492 = vpack.c.b16 %v459, %v456
        %v493 = vpack.c.b16 %v463, %v460
        %v494 = vpack.c.b16 %v464, %v461
        %v495 = vpack.c.b16 %v465, %v462
        %v496 = vpack.c.b16 %v469, %v466
        %v497 = vpack.c.b16 %v470, %v467
        %v498 = vpack.c.b16 %v471, %v468
        %v499 = vpack.c.b16 %v475, %v472
        %v500 = vpack.c.b16 %v476, %v473
        %v501 = vpack.c.b16 %v477, %v474
        %526 = vmatprep.subr.bf16.mxu0 %v479
        %527 = vmatpush1.bf16.msra.mxu0 %v478
        %528 = vmatprep.subr.bf16.mxu0 %v482
        %529 = vmatpush1.bf16.msra.mxu0 %v481
        %530 = vmatprep.subr.bf16.mxu0 %v485
        %531 = vmatpush1.bf16.msra.mxu0 %v484
        %532 = vmatprep.subr.bf16.mxu0 %v488
        %533 = vmatpush1.bf16.msra.mxu0 %v487
        %534 = vmatprep.subr.bf16.mxu0 %v491
        %535 = vmatpush1.bf16.msra.mxu0 %v490
        %536 = vmatprep.subr.bf16.mxu0 %v494
        %537 = vmatpush1.bf16.msra.mxu0 %v493
        %538 = vmatprep.subr.bf16.mxu0 %v497
        %539 = vmatpush1.bf16.msra.mxu0 %v496
        %540 = vmatprep.subr.bf16.mxu0 %v500
        %541 = vmatpush1.bf16.msra.mxu0 %v499
        %542 = vmatprep.subr.bf16.mxu0 0
        %543 = vmatpush1.bf16.msra.mxu0 0
        %544 = vmatprep.subr.bf16.mxu0 0
        %545 = vmatpush1.bf16.msra.mxu0 0
        %546 = vmatprep.subr.bf16.mxu0 0
        %547 = vmatpush1.bf16.msra.mxu0 0
        %548 = vmatprep.subr.bf16.mxu0 0
        %549 = vmatpush1.bf16.msra.mxu0 0
        %550 = vmatprep.subr.bf16.mxu0 0
        %551 = vmatpush1.bf16.msra.mxu0 0
        %552 = vmatprep.subr.bf16.mxu0 0
        %553 = vmatpush1.bf16.msra.mxu0 0
        %554 = vmatprep.subr.bf16.mxu0 0
        %555 = vmatpush1.bf16.msra.mxu0 0
        %556 = vmatprep.subr.bf16.mxu0 0
        %557 = vmatpush1.bf16.msra.mxu0 0
        %558 = vmatprep.mubr.bf16.mxu0 0
        %559 = vmatmul.mubr.bf16.gmra.mrb[0].mxu0 %v382
        %v560 = vpop.f32.mrb[0].mxu0
        %v561 = vadd.f32 0.0, %v560
        %v562 = vpop.f32.mrb[0].mxu0
        %v563 = vadd.f32 0.0, %v562
        %v564 = vpop.f32.mrb[0].mxu0
        %v565 = vadd.f32 0.0, %v564
        %v566 = vpop.f32.mrb[0].mxu0
        %v567 = vadd.f32 0.0, %v566
        %568 = vmatprep.mubr.bf16.mxu0 0
        %569 = vmatmul.mubr.bf16.gmra.mrb[0].mxu0 %v383
        %v570 = vpop.f32.mrb[0].mxu0
        %v571 = vadd.f32 0.0, %v570
        %v572 = vpop.f32.mrb[0].mxu0
        %v573 = vadd.f32 0.0, %v572
        %v574 = vpop.f32.mrb[0].mxu0
        %v575 = vadd.f32 0.0, %v574
        %v576 = vpop.f32.mrb[0].mxu0
        %v577 = vadd.f32 0.0, %v576
        %578 = vmatprep.mubr.bf16.mxu0 0
        %579 = vmatmul.mubr.bf16.gmra.mrb[0].mxu0 %v384
        %v580 = vpop.f32.mrb[0].mxu0
        %v581 = vadd.f32 0.0, %v580
        %v582 = vpop.f32.mrb[0].mxu0
        %v583 = vadd.f32 0.0, %v582
        %v584 = vpop.f32.mrb[0].mxu0
        %v585 = vadd.f32 0.0, %v584
        %v586 = vpop.f32.mrb[0].mxu0
        %v587 = vadd.f32 0.0, %v586
        %588 = vmatprep.mubr.bf16.mxu0 0
        %589 = vmatmul.mubr.bf16.gmra.mrb[0].mxu0 %v385
        %v590 = vpop.f32.mrb[0].mxu0
        %v591 = vadd.f32 0.0, %v590
        %v592 = vpop.f32.mrb[0].mxu0
        %v593 = vadd.f32 0.0, %v592
        %v594 = vpop.f32.mrb[0].mxu0
        %v595 = vadd.f32 0.0, %v594
        %v596 = vpop.f32.mrb[0].mxu0
        %v597 = vadd.f32 0.0, %v596
        %598 = vmatprep.mubr.bf16.mxu0 0
        %599 = vmatmul.mubr.bf16.gmra.mrb[0].mxu0 %v386
        %v600 = vpop.f32.mrb[0].mxu0
        %v601 = vadd.f32 0.0, %v600
        %v602 = vpop.f32.mrb[0].mxu0
        %v603 = vadd.f32 0.0, %v602
        %v604 = vpop.f32.mrb[0].mxu0
        %v605 = vadd.f32 0.0, %v604
        %v606 = vpop.f32.mrb[0].mxu0
        %v607 = vadd.f32 0.0, %v606
        %608 = vmatprep.mubr.bf16.mxu0 0
        %609 = vmatmul.mubr.bf16.gmra.mrb[0].mxu0 %v387
        %v610 = vpop.f32.mrb[0].mxu0
        %v611 = vadd.f32 0.0, %v610
        %v612 = vpop.f32.mrb[0].mxu0
        %v613 = vadd.f32 0.0, %v612
        %v614 = vpop.f32.mrb[0].mxu0
        %v615 = vadd.f32 0.0, %v614
        %v616 = vpop.f32.mrb[0].mxu0
        %v617 = vadd.f32 0.0, %v616
        %618 = vmatprep.mubr.bf16.mxu0 0
        %619 = vmatmul.mubr.bf16.gmra.mrb[0].mxu0 %v388
        %v620 = vpop.f32.mrb[0].mxu0
        %v621 = vadd.f32 0.0, %v620
        %v622 = vpop.f32.mrb[0].mxu0
        %v623 = vadd.f32 0.0, %v622
        %v624 = vpop.f32.mrb[0].mxu0
        %v625 = vadd.f32 0.0, %v624
        %v626 = vpop.f32.mrb[0].mxu0
        %v627 = vadd.f32 0.0, %v626
        %628 = vmatprep.mubr.bf16.mxu0 0
        %629 = vmatmul.mubr.bf16.gmra.mrb[0].mxu0 %v389
        %v630 = vpop.f32.mrb[0].mxu0
        %v631 = vadd.f32 0.0, %v630
        %v632 = vpop.f32.mrb[0].mxu0
        %v633 = vadd.f32 0.0, %v632
        %v634 = vpop.f32.mrb[0].mxu0
        %v635 = vadd.f32 0.0, %v634
        %v636 = vpop.f32.mrb[0].mxu0
        %v637 = vadd.f32 0.0, %v636
        %638 = vdwg.mxu0
        %639 = vmatprep.subr.bf16.mxu0 0
        %640 = vmatpush1.bf16.msra.mxu0 %v480
        %641 = vmatprep.subr.bf16.mxu0 0
        %642 = vmatpush1.bf16.msra.mxu0 %v483
        %643 = vmatprep.subr.bf16.mxu0 0
        %644 = vmatpush1.bf16.msra.mxu0 %v486
        %645 = vmatprep.subr.bf16.mxu0 0
        %646 = vmatpush1.bf16.msra.mxu0 %v489
        %647 = vmatprep.subr.bf16.mxu0 0
        %648 = vmatpush1.bf16.msra.mxu0 %v492
        %649 = vmatprep.subr.bf16.mxu0 0
        %650 = vmatpush1.bf16.msra.mxu0 %v495
        %651 = vmatprep.subr.bf16.mxu0 0
        %652 = vmatpush1.bf16.msra.mxu0 %v498
        %653 = vmatprep.subr.bf16.mxu0 0
        %654 = vmatpush1.bf16.msra.mxu0 %v501
        %655 = vmatprep.subr.bf16.mxu0 0
        %656 = vmatpush1.bf16.msra.mxu0 0
        %657 = vmatprep.subr.bf16.mxu0 0
        %658 = vmatpush1.bf16.msra.mxu0 0
        %659 = vmatprep.subr.bf16.mxu0 0
        %660 = vmatpush1.bf16.msra.mxu0 0
        %661 = vmatprep.subr.bf16.mxu0 0
        %662 = vmatpush1.bf16.msra.mxu0 0
        %663 = vmatprep.subr.bf16.mxu0 0
        %664 = vmatpush1.bf16.msra.mxu0 0
        %665 = vmatprep.subr.bf16.mxu0 0
        %666 = vmatpush1.bf16.msra.mxu0 0
        %667 = vmatprep.subr.bf16.mxu0 0
        %668 = vmatpush1.bf16.msra.mxu0 0
        %669 = vmatprep.subr.bf16.mxu0 0
        %670 = vmatpush1.bf16.msra.mxu0 0
        %671 = vmatprep.mubr.bf16.mxu0 0
        %672 = vmatmul.mubr.bf16.gmra.mrb[0].mxu0 %v382
        %v673 = vpop.f32.mrb[0].mxu0
        %v674 = vadd.f32 0.0, %v673
        %v675 = vpop.f32.mrb[0].mxu0
        %v676 = vpop.f32.mrb[0].mxu0
        %v677 = vadd.f32 0.0, %v676
        %v678 = vpop.f32.mrb[0].mxu0
        %679 = vmatprep.mubr.bf16.mxu0 0
        %680 = vmatmul.mubr.bf16.gmra.mrb[0].mxu0 %v383
        %v681 = vpop.f32.mrb[0].mxu0
        %v682 = vadd.f32 0.0, %v681
        %v683 = vpop.f32.mrb[0].mxu0
        %v684 = vpop.f32.mrb[0].mxu0
        %v685 = vadd.f32 0.0, %v684
        %v686 = vpop.f32.mrb[0].mxu0
        %687 = vmatprep.mubr.bf16.mxu0 0
        %688 = vmatmul.mubr.bf16.gmra.mrb[0].mxu0 %v384
        %v689 = vpop.f32.mrb[0].mxu0
        %v690 = vadd.f32 0.0, %v689
        %v691 = vpop.f32.mrb[0].mxu0
        %v692 = vpop.f32.mrb[0].mxu0
        %v693 = vadd.f32 0.0, %v692
        %v694 = vpop.f32.mrb[0].mxu0
        %695 = vmatprep.mubr.bf16.mxu0 0
        %696 = vmatmul.mubr.bf16.gmra.mrb[0].mxu0 %v385
        %v697 = vpop.f32.mrb[0].mxu0
        %v698 = vadd.f32 0.0, %v697
        %v699 = vpop.f32.mrb[0].mxu0
        %v700 = vpop.f32.mrb[0].mxu0
        %v701 = vadd.f32 0.0, %v700
        %v702 = vpop.f32.mrb[0].mxu0
        %703 = vmatprep.mubr.bf16.mxu0 0
        %704 = vmatmul.mubr.bf16.gmra.mrb[0].mxu0 %v386
        %v705 = vpop.f32.mrb[0].mxu0
        %v706 = vadd.f32 0.0, %v705
        %v707 = vpop.f32.mrb[0].mxu0
        %v708 = vpop.f32.mrb[0].mxu0
        %v709 = vadd.f32 0.0, %v708
        %v710 = vpop.f32.mrb[0].mxu0
        %711 = vmatprep.mubr.bf16.mxu0 0
        %712 = vmatmul.mubr.bf16.gmra.mrb[0].mxu0 %v387
        %v713 = vpop.f32.mrb[0].mxu0
        %v714 = vadd.f32 0.0, %v713
        %v715 = vpop.f32.mrb[0].mxu0
        %v716 = vpop.f32.mrb[0].mxu0
        %v717 = vadd.f32 0.0, %v716
        %v718 = vpop.f32.mrb[0].mxu0
        %719 = vmatprep.mubr.bf16.mxu0 0
        %720 = vmatmul.mubr.bf16.gmra.mrb[0].mxu0 %v388
        %v721 = vpop.f32.mrb[0].mxu0
        %v722 = vadd.f32 0.0, %v721
        %v723 = vpop.f32.mrb[0].mxu0
        %v724 = vpop.f32.mrb[0].mxu0
        %v725 = vadd.f32 0.0, %v724
        %v726 = vpop.f32.mrb[0].mxu0
        %727 = vmatprep.mubr.bf16.mxu0 0
        %728 = vmatmul.mubr.bf16.gmra.mrb[0].mxu0 %v389
        %v729 = vpop.f32.mrb[0].mxu0
        %v730 = vadd.f32 0.0, %v729
        %v731 = vpop.f32.mrb[0].mxu0
        %v732 = vpop.f32.mrb[0].mxu0
        %v733 = vadd.f32 0.0, %v732
        %v734 = vpop.f32.mrb[0].mxu0
        %735 = vdwg.mxu0
        %s736 = smul.u32 %s29, 4
        %s737 = sld [smem:[#allocation10 + %s736]]
        %v738 = vmul.f32 %v561, %v561
        %v739 = vmul.f32 %v565, %v565
        %v740 = vmul.f32 %v571, %v571
        %v741 = vmul.f32 %v575, %v575
        %v742 = vmul.f32 %v581, %v581
        %v743 = vmul.f32 %v585, %v585
        %v744 = vmul.f32 %v591, %v591
        %v745 = vmul.f32 %v595, %v595
        %v746 = vmul.f32 %v601, %v601
        %v747 = vmul.f32 %v605, %v605
        %v748 = vmul.f32 %v611, %v611
        %v749 = vmul.f32 %v615, %v615
        %v750 = vmul.f32 %v621, %v621
        %v751 = vmul.f32 %v625, %v625
        %v752 = vmul.f32 %v631, %v631
        %v753 = vmul.f32 %v635, %v635
        %vm754 = vcmask 261120
        %v755 = vsel %vm754, %v738, 0.0
        %756 = vadd.xlane.f32.xlu0 %v755
        %v757 = vpop.xlane.xlu0 %756
        %v758 = vsel %vm754, %v739, 0.0
        %759 = vadd.xlane.f32.xlu0 %v758
        %v760 = vpop.xlane.xlu0 %759
        %v761 = vsel %vm754, %v740, 0.0
        %762 = vadd.xlane.f32.xlu0 %v761
        %v763 = vpop.xlane.xlu0 %762
        %v764 = vsel %vm754, %v741, 0.0
        %765 = vadd.xlane.f32.xlu0 %v764
        %v766 = vpop.xlane.xlu0 %765
        %v767 = vsel %vm754, %v742, 0.0
        %768 = vadd.xlane.f32.xlu0 %v767
        %v769 = vpop.xlane.xlu0 %768
        %v770 = vsel %vm754, %v743, 0.0
        %771 = vadd.xlane.f32.xlu0 %v770
        %v772 = vpop.xlane.xlu0 %771
        %v773 = vsel %vm754, %v744, 0.0
        %774 = vadd.xlane.f32.xlu0 %v773
        %v775 = vpop.xlane.xlu0 %774
        %v776 = vsel %vm754, %v745, 0.0
        %777 = vadd.xlane.f32.xlu0 %v776
        %v778 = vpop.xlane.xlu0 %777
        %v779 = vsel %vm754, %v746, 0.0
        %780 = vadd.xlane.f32.xlu0 %v779
        %v781 = vpop.xlane.xlu0 %780
        %v782 = vsel %vm754, %v747, 0.0
        %783 = vadd.xlane.f32.xlu0 %v782
        %v784 = vpop.xlane.xlu0 %783
        %v785 = vsel %vm754, %v748, 0.0
        %786 = vadd.xlane.f32.xlu0 %v785
        %v787 = vpop.xlane.xlu0 %786
        %v788 = vsel %vm754, %v749, 0.0
        %789 = vadd.xlane.f32.xlu0 %v788
        %v790 = vpop.xlane.xlu0 %789
        %v791 = vsel %vm754, %v750, 0.0
        %792 = vadd.xlane.f32.xlu0 %v791
        %v793 = vpop.xlane.xlu0 %792
        %v794 = vsel %vm754, %v751, 0.0
        %795 = vadd.xlane.f32.xlu0 %v794
        %v796 = vpop.xlane.xlu0 %795
        %v797 = vsel %vm754, %v752, 0.0
        %798 = vadd.xlane.f32.xlu0 %v797
        %v799 = vpop.xlane.xlu0 %798
        %v800 = vsel %vm754, %v753, 0.0
        %801 = vadd.xlane.f32.xlu0 %v800
        %v802 = vpop.xlane.xlu0 %801
        %v803 = vmax.f32 %v757, 1e-24
        %v804 = vmax.f32 %v760, 1e-24
        %v805 = vmax.f32 %v763, 1e-24
        %v806 = vmax.f32 %v766, 1e-24
        %v807 = vmax.f32 %v769, 1e-24
        %v808 = vmax.f32 %v772, 1e-24
        %v809 = vmax.f32 %v775, 1e-24
        %v810 = vmax.f32 %v778, 1e-24
        %v811 = vmax.f32 %v781, 1e-24
        %v812 = vmax.f32 %v784, 1e-24
        %v813 = vmax.f32 %v787, 1e-24
        %v814 = vmax.f32 %v790, 1e-24
        %v815 = vmax.f32 %v793, 1e-24
        %v816 = vmax.f32 %v796, 1e-24
        %v817 = vmax.f32 %v799, 1e-24
        %v818 = vmax.f32 %v802, 1e-24
        %v819 = vrsqrt.pop %v803
        %v820 = vrsqrt.pop %v804
        %v821 = vrsqrt.pop %v805
        %v822 = vrsqrt.pop %v806
        %v823 = vrsqrt.pop %v807
        %v824 = vrsqrt.pop %v808
        %v825 = vrsqrt.pop %v809
        %v826 = vrsqrt.pop %v810
        %v827 = vrsqrt.pop %v811
        %v828 = vrsqrt.pop %v812
        %v829 = vrsqrt.pop %v813
        %v830 = vrsqrt.pop %v814
        %v831 = vrsqrt.pop %v815
        %v832 = vrsqrt.pop %v816
        %v833 = vrsqrt.pop %v817
        %v834 = vrsqrt.pop %v818
        %v835 = vstv %s737
        %v836 = vmul.f32 %v835, %v819
        %v837 = vmul.f32 %v835, %v820
        %v838 = vmul.f32 %v835, %v821
        %v839 = vmul.f32 %v835, %v822
        %v840 = vmul.f32 %v835, %v823
        %v841 = vmul.f32 %v835, %v824
        %v842 = vmul.f32 %v835, %v825
        %v843 = vmul.f32 %v835, %v826
        %v844 = vmul.f32 %v835, %v827
        %v845 = vmul.f32 %v835, %v828
        %v846 = vmul.f32 %v835, %v829
        %v847 = vmul.f32 %v835, %v830
        %v848 = vmul.f32 %v835, %v831
        %v849 = vmul.f32 %v835, %v832
        %v850 = vmul.f32 %v835, %v833
        %v851 = vmul.f32 %v835, %v834
        %v852 = vmul.f32 %v561, %v836
        %v853 = vmul.f32 %v565, %v837
        %v854 = vmul.f32 %v571, %v838
        %v855 = vmul.f32 %v575, %v839
        %v856 = vmul.f32 %v581, %v840
        %v857 = vmul.f32 %v585, %v841
        %v858 = vmul.f32 %v591, %v842
        %v859 = vmul.f32 %v595, %v843
        %v860 = vmul.f32 %v601, %v844
        %v861 = vmul.f32 %v605, %v845
        %v862 = vmul.f32 %v611, %v846
        %v863 = vmul.f32 %v615, %v847
        %v864 = vmul.f32 %v621, %v848
        %v865 = vmul.f32 %v625, %v849
        %v866 = vmul.f32 %v631, %v850
        %v867 = vmul.f32 %v635, %v851
        %v868 = vmul.f32 %v563, %v563
        %v869 = vmul.f32 %v567, %v567
        %v870 = vmul.f32 %v573, %v573
        %v871 = vmul.f32 %v577, %v577
        %v872 = vmul.f32 %v583, %v583
        %v873 = vmul.f32 %v587, %v587
        %v874 = vmul.f32 %v593, %v593
        %v875 = vmul.f32 %v597, %v597
        %v876 = vmul.f32 %v603, %v603
        %v877 = vmul.f32 %v607, %v607
        %v878 = vmul.f32 %v613, %v613
        %v879 = vmul.f32 %v617, %v617
        %v880 = vmul.f32 %v623, %v623
        %v881 = vmul.f32 %v627, %v627
        %v882 = vmul.f32 %v633, %v633
        %v883 = vmul.f32 %v637, %v637
        %v884 = vsel %vm754, %v868, 0.0
        %885 = vadd.xlane.f32.xlu0 %v884
        %v886 = vpop.xlane.xlu0 %885
        %v887 = vsel %vm754, %v869, 0.0
        %888 = vadd.xlane.f32.xlu0 %v887
        %v889 = vpop.xlane.xlu0 %888
        %v890 = vsel %vm754, %v870, 0.0
        %891 = vadd.xlane.f32.xlu0 %v890
        %v892 = vpop.xlane.xlu0 %891
        %v893 = vsel %vm754, %v871, 0.0
        %894 = vadd.xlane.f32.xlu0 %v893
        %v895 = vpop.xlane.xlu0 %894
        %v896 = vsel %vm754, %v872, 0.0
        %897 = vadd.xlane.f32.xlu0 %v896
        %v898 = vpop.xlane.xlu0 %897
        %v899 = vsel %vm754, %v873, 0.0
        %900 = vadd.xlane.f32.xlu0 %v899
        %v901 = vpop.xlane.xlu0 %900
        %v902 = vsel %vm754, %v874, 0.0
        %903 = vadd.xlane.f32.xlu0 %v902
        %v904 = vpop.xlane.xlu0 %903
        %v905 = vsel %vm754, %v875, 0.0
        %906 = vadd.xlane.f32.xlu0 %v905
        %v907 = vpop.xlane.xlu0 %906
        %v908 = vsel %vm754, %v876, 0.0
        %909 = vadd.xlane.f32.xlu0 %v908
        %v910 = vpop.xlane.xlu0 %909
        %v911 = vsel %vm754, %v877, 0.0
        %912 = vadd.xlane.f32.xlu0 %v911
        %v913 = vpop.xlane.xlu0 %912
        %v914 = vsel %vm754, %v878, 0.0
        %915 = vadd.xlane.f32.xlu0 %v914
        %v916 = vpop.xlane.xlu0 %915
        %v917 = vsel %vm754, %v879, 0.0
        %918 = vadd.xlane.f32.xlu0 %v917
        %v919 = vpop.xlane.xlu0 %918
        %v920 = vsel %vm754, %v880, 0.0
        %921 = vadd.xlane.f32.xlu0 %v920
        %v922 = vpop.xlane.xlu0 %921
        %v923 = vsel %vm754, %v881, 0.0
        %924 = vadd.xlane.f32.xlu0 %v923
        %v925 = vpop.xlane.xlu0 %924
        %v926 = vsel %vm754, %v882, 0.0
        %927 = vadd.xlane.f32.xlu0 %v926
        %v928 = vpop.xlane.xlu0 %927
        %v929 = vsel %vm754, %v883, 0.0
        %930 = vadd.xlane.f32.xlu0 %v929
        %v931 = vpop.xlane.xlu0 %930
        %v932 = vmax.f32 %v886, 1e-24
        %v933 = vmax.f32 %v889, 1e-24
        %v934 = vmax.f32 %v892, 1e-24
        %v935 = vmax.f32 %v895, 1e-24
        %v936 = vmax.f32 %v898, 1e-24
        %v937 = vmax.f32 %v901, 1e-24
        %v938 = vmax.f32 %v904, 1e-24
        %v939 = vmax.f32 %v907, 1e-24
        %v940 = vmax.f32 %v910, 1e-24
        %v941 = vmax.f32 %v913, 1e-24
        %v942 = vmax.f32 %v916, 1e-24
        %v943 = vmax.f32 %v919, 1e-24
        %v944 = vmax.f32 %v922, 1e-24
        %v945 = vmax.f32 %v925, 1e-24
        %v946 = vmax.f32 %v928, 1e-24
        %v947 = vmax.f32 %v931, 1e-24
        %v948 = vrsqrt.pop %v932
        %v949 = vrsqrt.pop %v933
        %v950 = vrsqrt.pop %v934
        %v951 = vrsqrt.pop %v935
        %v952 = vrsqrt.pop %v936
        %v953 = vrsqrt.pop %v937
        %v954 = vrsqrt.pop %v938
        %v955 = vrsqrt.pop %v939
        %v956 = vrsqrt.pop %v940
        %v957 = vrsqrt.pop %v941
        %v958 = vrsqrt.pop %v942
        %v959 = vrsqrt.pop %v943
        %v960 = vrsqrt.pop %v944
        %v961 = vrsqrt.pop %v945
        %v962 = vrsqrt.pop %v946
        %v963 = vrsqrt.pop %v947
        %v964 = vmul.f32 %v563, %v948
        %v965 = vmul.f32 %v567, %v949
        %v966 = vmul.f32 %v573, %v950
        %v967 = vmul.f32 %v577, %v951
        %v968 = vmul.f32 %v583, %v952
        %v969 = vmul.f32 %v587, %v953
        %v970 = vmul.f32 %v593, %v954
        %v971 = vmul.f32 %v597, %v955
        %v972 = vmul.f32 %v603, %v956
        %v973 = vmul.f32 %v607, %v957
        %v974 = vmul.f32 %v613, %v958
        %v975 = vmul.f32 %v617, %v959
        %v976 = vmul.f32 %v623, %v960
        %v977 = vmul.f32 %v627, %v961
        %v978 = vmul.f32 %v633, %v962
        %v979 = vmul.f32 %v637, %v963
        %v980 = vpack.c.bf16 %v853, %v852
        %v981 = vpack.c.bf16 %v855, %v854
        %v982 = vpack.c.bf16 %v857, %v856
        %v983 = vpack.c.bf16 %v859, %v858
        %v984 = vpack.c.bf16 %v861, %v860
        %v985 = vpack.c.bf16 %v863, %v862
        %v986 = vpack.c.bf16 %v865, %v864
        %v987 = vpack.c.bf16 %v867, %v866
        %v988 = vpack.c.bf16 %v965, %v964
        %v989 = vpack.c.bf16 %v967, %v966
        %v990 = vpack.c.bf16 %v969, %v968
        %v991 = vpack.c.bf16 %v971, %v970
        %v992 = vpack.c.bf16 %v973, %v972
        %v993 = vpack.c.bf16 %v975, %v974
        %v994 = vpack.c.bf16 %v977, %v976
        %v995 = vpack.c.bf16 %v979, %v978
        %v997 = vsel %vm754, %v980, 0
        %v1000 = vsel %vm754, %v981, 0
        %v1003 = vsel %vm754, %v982, 0
        %v1006 = vsel %vm754, %v983, 0
        %v1009 = vsel %vm754, %v984, 0
        %v1012 = vsel %vm754, %v985, 0
        %v1015 = vsel %vm754, %v986, 0
        %v1018 = vsel %vm754, %v987, 0
        %v1021 = vsel %vm754, %v988, 0
        %v1024 = vsel %vm754, %v989, 0
        %v1027 = vsel %vm754, %v990, 0
        %v1030 = vsel %vm754, %v991, 0
        %v1033 = vsel %vm754, %v992, 0
        %v1036 = vsel %vm754, %v993, 0
        %v1039 = vsel %vm754, %v994, 0
        %v1042 = vsel %vm754, %v995, 0
        %1044 = vmatprep.subr.bf16.mxu0 0
        %1045 = vmatpush1.bf16.xpose.msra.mxu0 %v1021
        %1046 = vmatprep.subr.bf16.mxu0 0
        %1047 = vmatpush1.bf16.xpose.msra.mxu0 %v1024
        %1048 = vmatprep.subr.bf16.mxu0 0
        %1049 = vmatpush1.bf16.xpose.msra.mxu0 %v1027
        %1050 = vmatprep.subr.bf16.mxu0 0
        %1051 = vmatpush1.bf16.xpose.msra.mxu0 %v1030
        %1052 = vmatprep.subr.bf16.mxu0 0
        %1053 = vmatpush1.bf16.xpose.msra.mxu0 %v1033
        %1054 = vmatprep.subr.bf16.mxu0 0
        %1055 = vmatpush1.bf16.xpose.msra.mxu0 %v1036
        %1056 = vmatprep.subr.bf16.mxu0 0
        %1057 = vmatpush1.bf16.xpose.msra.mxu0 %v1039
        %1058 = vmatprep.subr.bf16.mxu0 0
        %1059 = vmatpush1.bf16.xpose.msra.mxu0 %v1042
        %1060 = vmatprep.subr.bf16.mxu0 0
        %1061 = vmatpush1.bf16.xpose.msra.mxu0 0
        %1062 = vmatprep.subr.bf16.mxu0 0
        %1063 = vmatpush1.bf16.xpose.msra.mxu0 0
        %1064 = vmatprep.subr.bf16.mxu0 0
        %1065 = vmatpush1.bf16.xpose.msra.mxu0 0
        %1066 = vmatprep.subr.bf16.mxu0 0
        %1067 = vmatpush1.bf16.xpose.msra.mxu0 0
        %1068 = vmatprep.subr.bf16.mxu0 0
        %1069 = vmatpush1.bf16.xpose.msra.mxu0 0
        %1070 = vmatprep.subr.bf16.mxu0 0
        %1071 = vmatpush1.bf16.xpose.msra.mxu0 0
        %1072 = vmatprep.subr.bf16.mxu0 0
        %1073 = vmatpush1.bf16.xpose.msra.mxu0 0
        %1074 = vmatprep.subr.bf16.mxu0 0
        %1075 = vmatpush1.bf16.xpose.msra.mxu0 0
        %1076 = vmatprep.mubr.bf16.mxu0 0
        %1077 = vmatmul.mubr.bf16.gmra.mrb[0].mxu0 %v997
        %v1078 = vpop.f32.mrb[0].mxu0
        %v1079 = vadd.f32 0.0, %v1078
        %v1080 = vpop.f32.mrb[0].mxu0
        %v1081 = vpop.f32.mrb[0].mxu0
        %v1082 = vadd.f32 0.0, %v1081
        %v1083 = vpop.f32.mrb[0].mxu0
        %1084 = vmatprep.mubr.bf16.mxu0 0
        %1085 = vmatmul.mubr.bf16.gmra.mrb[0].mxu0 %v1000
        %v1086 = vpop.f32.mrb[0].mxu0
        %v1087 = vadd.f32 0.0, %v1086
        %v1088 = vpop.f32.mrb[0].mxu0
        %v1089 = vpop.f32.mrb[0].mxu0
        %v1090 = vadd.f32 0.0, %v1089
        %v1091 = vpop.f32.mrb[0].mxu0
        %1092 = vmatprep.mubr.bf16.mxu0 0
        %1093 = vmatmul.mubr.bf16.gmra.mrb[0].mxu0 %v1003
        %v1094 = vpop.f32.mrb[0].mxu0
        %v1095 = vadd.f32 0.0, %v1094
        %v1096 = vpop.f32.mrb[0].mxu0
        %v1097 = vpop.f32.mrb[0].mxu0
        %v1098 = vadd.f32 0.0, %v1097
        %v1099 = vpop.f32.mrb[0].mxu0
        %1100 = vmatprep.mubr.bf16.mxu0 0
        %1101 = vmatmul.mubr.bf16.gmra.mrb[0].mxu0 %v1006
        %v1102 = vpop.f32.mrb[0].mxu0
        %v1103 = vadd.f32 0.0, %v1102
        %v1104 = vpop.f32.mrb[0].mxu0
        %v1105 = vpop.f32.mrb[0].mxu0
        %v1106 = vadd.f32 0.0, %v1105
        %v1107 = vpop.f32.mrb[0].mxu0
        %1108 = vmatprep.mubr.bf16.mxu0 0
        %1109 = vmatmul.mubr.bf16.gmra.mrb[0].mxu0 %v1009
        %v1110 = vpop.f32.mrb[0].mxu0
        %v1111 = vadd.f32 0.0, %v1110
        %v1112 = vpop.f32.mrb[0].mxu0
        %v1113 = vpop.f32.mrb[0].mxu0
        %v1114 = vadd.f32 0.0, %v1113
        %v1115 = vpop.f32.mrb[0].mxu0
        %1116 = vmatprep.mubr.bf16.mxu0 0
        %1117 = vmatmul.mubr.bf16.gmra.mrb[0].mxu0 %v1012
        %v1118 = vpop.f32.mrb[0].mxu0
        %v1119 = vadd.f32 0.0, %v1118
        %v1120 = vpop.f32.mrb[0].mxu0
        %v1121 = vpop.f32.mrb[0].mxu0
        %v1122 = vadd.f32 0.0, %v1121
        %v1123 = vpop.f32.mrb[0].mxu0
        %1124 = vmatprep.mubr.bf16.mxu0 0
        %1125 = vmatmul.mubr.bf16.gmra.mrb[0].mxu0 %v1015
        %v1126 = vpop.f32.mrb[0].mxu0
        %v1127 = vadd.f32 0.0, %v1126
        %v1128 = vpop.f32.mrb[0].mxu0
        %v1129 = vpop.f32.mrb[0].mxu0
        %v1130 = vadd.f32 0.0, %v1129
        %v1131 = vpop.f32.mrb[0].mxu0
        %1132 = vmatprep.mubr.bf16.mxu0 0
        %1133 = vmatmul.mubr.bf16.gmra.mrb[0].mxu0 %v1018
        %v1134 = vpop.f32.mrb[0].mxu0
        %v1135 = vadd.f32 0.0, %v1134
        %v1136 = vpop.f32.mrb[0].mxu0
        %v1137 = vpop.f32.mrb[0].mxu0
        %v1138 = vadd.f32 0.0, %v1137
        %v1139 = vpop.f32.mrb[0].mxu0
        %1140 = vdwg.mxu0
        %1141 = vmax.xlane.f32.xlu0 %v1079
        %v1142 = vpop.xlane.xlu0 %1141
        %1143 = vmax.xlane.f32.xlu0 %v1082
        %v1144 = vpop.xlane.xlu0 %1143
        %1145 = vmax.xlane.f32.xlu0 %v1087
        %v1146 = vpop.xlane.xlu0 %1145
        %1147 = vmax.xlane.f32.xlu0 %v1090
        %v1148 = vpop.xlane.xlu0 %1147
        %1149 = vmax.xlane.f32.xlu0 %v1095
        %v1150 = vpop.xlane.xlu0 %1149
        %1151 = vmax.xlane.f32.xlu0 %v1098
        %v1152 = vpop.xlane.xlu0 %1151
        %1153 = vmax.xlane.f32.xlu0 %v1103
        %v1154 = vpop.xlane.xlu0 %1153
        %1155 = vmax.xlane.f32.xlu0 %v1106
        %v1156 = vpop.xlane.xlu0 %1155
        %1157 = vmax.xlane.f32.xlu0 %v1111
        %v1158 = vpop.xlane.xlu0 %1157
        %1159 = vmax.xlane.f32.xlu0 %v1114
        %v1160 = vpop.xlane.xlu0 %1159
        %1161 = vmax.xlane.f32.xlu0 %v1119
        %v1162 = vpop.xlane.xlu0 %1161
        %1163 = vmax.xlane.f32.xlu0 %v1122
        %v1164 = vpop.xlane.xlu0 %1163
        %1165 = vmax.xlane.f32.xlu0 %v1127
        %v1166 = vpop.xlane.xlu0 %1165
        %1167 = vmax.xlane.f32.xlu0 %v1130
        %v1168 = vpop.xlane.xlu0 %1167
        %1169 = vmax.xlane.f32.xlu0 %v1135
        %v1170 = vpop.xlane.xlu0 %1169
        %1171 = vmax.xlane.f32.xlu0 %v1138
        %v1172 = vpop.xlane.xlu0 %1171
        %v1173 = vsub.f32 %v1079, %v1142
        %v1174 = vsub.f32 %v1082, %v1144
        %v1175 = vsub.f32 %v1087, %v1146
        %v1176 = vsub.f32 %v1090, %v1148
        %v1177 = vsub.f32 %v1095, %v1150
        %v1178 = vsub.f32 %v1098, %v1152
        %v1179 = vsub.f32 %v1103, %v1154
        %v1180 = vsub.f32 %v1106, %v1156
        %v1181 = vsub.f32 %v1111, %v1158
        %v1182 = vsub.f32 %v1114, %v1160
        %v1183 = vsub.f32 %v1119, %v1162
        %v1184 = vsub.f32 %v1122, %v1164
        %v1185 = vsub.f32 %v1127, %v1166
        %v1186 = vsub.f32 %v1130, %v1168
        %v1187 = vsub.f32 %v1135, %v1170
        %v1188 = vsub.f32 %v1138, %v1172
        %v1189 = vmul.f32 %v1173, 1.442695
        %v1190 = vpow.pop %v1189
        %v1191 = vmul.f32 %v1174, 1.442695
        %v1192 = vpow.pop %v1191
        %v1193 = vmul.f32 %v1175, 1.442695
        %v1194 = vpow.pop %v1193
        %v1195 = vmul.f32 %v1176, 1.442695
        %v1196 = vpow.pop %v1195
        %v1197 = vmul.f32 %v1177, 1.442695
        %v1198 = vpow.pop %v1197
        %v1199 = vmul.f32 %v1178, 1.442695
        %v1200 = vpow.pop %v1199
        %v1201 = vmul.f32 %v1179, 1.442695
        %v1202 = vpow.pop %v1201
        %v1203 = vmul.f32 %v1180, 1.442695
        %v1204 = vpow.pop %v1203
        %v1205 = vmul.f32 %v1181, 1.442695
        %v1206 = vpow.pop %v1205
        %v1207 = vmul.f32 %v1182, 1.442695
        %v1208 = vpow.pop %v1207
        %v1209 = vmul.f32 %v1183, 1.442695
        %v1210 = vpow.pop %v1209
        %v1211 = vmul.f32 %v1184, 1.442695
        %v1212 = vpow.pop %v1211
        %v1213 = vmul.f32 %v1185, 1.442695
        %v1214 = vpow.pop %v1213
        %v1215 = vmul.f32 %v1186, 1.442695
        %v1216 = vpow.pop %v1215
        %v1217 = vmul.f32 %v1187, 1.442695
        %v1218 = vpow.pop %v1217
        %v1219 = vmul.f32 %v1188, 1.442695
        %v1220 = vpow.pop %v1219
        %1221 = vadd.xlane.f32.xlu0 %v1190
        %v1222 = vpop.xlane.xlu0 %1221
        %1223 = vadd.xlane.f32.xlu0 %v1192
        %v1224 = vpop.xlane.xlu0 %1223
        %1225 = vadd.xlane.f32.xlu0 %v1194
        %v1226 = vpop.xlane.xlu0 %1225
        %1227 = vadd.xlane.f32.xlu0 %v1196
        %v1228 = vpop.xlane.xlu0 %1227
        %1229 = vadd.xlane.f32.xlu0 %v1198
        %v1230 = vpop.xlane.xlu0 %1229
        %1231 = vadd.xlane.f32.xlu0 %v1200
        %v1232 = vpop.xlane.xlu0 %1231
        %1233 = vadd.xlane.f32.xlu0 %v1202
        %v1234 = vpop.xlane.xlu0 %1233
        %1235 = vadd.xlane.f32.xlu0 %v1204
        %v1236 = vpop.xlane.xlu0 %1235
        %1237 = vadd.xlane.f32.xlu0 %v1206
        %v1238 = vpop.xlane.xlu0 %1237
        %1239 = vadd.xlane.f32.xlu0 %v1208
        %v1240 = vpop.xlane.xlu0 %1239
        %1241 = vadd.xlane.f32.xlu0 %v1210
        %v1242 = vpop.xlane.xlu0 %1241
        %1243 = vadd.xlane.f32.xlu0 %v1212
        %v1244 = vpop.xlane.xlu0 %1243
        %1245 = vadd.xlane.f32.xlu0 %v1214
        %v1246 = vpop.xlane.xlu0 %1245
        %1247 = vadd.xlane.f32.xlu0 %v1216
        %v1248 = vpop.xlane.xlu0 %1247
        %1249 = vadd.xlane.f32.xlu0 %v1218
        %v1250 = vpop.xlane.xlu0 %1249
        %1251 = vadd.xlane.f32.xlu0 %v1220
        %v1252 = vpop.xlane.xlu0 %1251
        %v1253 = vpack.c.bf16 %v1192, %v1190
        %v1254 = vpack.c.bf16 %v1196, %v1194
        %v1255 = vpack.c.bf16 %v1200, %v1198
        %v1256 = vpack.c.bf16 %v1204, %v1202
        %v1257 = vpack.c.bf16 %v1208, %v1206
        %v1258 = vpack.c.bf16 %v1212, %v1210
        %v1259 = vpack.c.bf16 %v1216, %v1214
        %v1260 = vpack.c.bf16 %v1220, %v1218
        %v1261 = vpack.c.bf16 %v677, %v674
        %v1262 = vpack.c.bf16 %v685, %v682
        %v1263 = vpack.c.bf16 %v693, %v690
        %v1264 = vpack.c.bf16 %v701, %v698
        %v1265 = vpack.c.bf16 %v709, %v706
        %v1266 = vpack.c.bf16 %v717, %v714
        %v1267 = vpack.c.bf16 %v725, %v722
        %v1268 = vpack.c.bf16 %v733, %v730
        %1269 = vmatprep.subr.bf16.mxu0 0
        %1270 = vmatpush1.bf16.msra.mxu0 %v1261
        %1271 = vmatprep.subr.bf16.mxu0 0
        %1272 = vmatpush1.bf16.msra.mxu0 %v1262
        %1273 = vmatprep.subr.bf16.mxu0 0
        %1274 = vmatpush1.bf16.msra.mxu0 %v1263
        %1275 = vmatprep.subr.bf16.mxu0 0
        %1276 = vmatpush1.bf16.msra.mxu0 %v1264
        %1277 = vmatprep.subr.bf16.mxu0 0
        %1278 = vmatpush1.bf16.msra.mxu0 %v1265
        %1279 = vmatprep.subr.bf16.mxu0 0
        %1280 = vmatpush1.bf16.msra.mxu0 %v1266
        %1281 = vmatprep.subr.bf16.mxu0 0
        %1282 = vmatpush1.bf16.msra.mxu0 %v1267
        %1283 = vmatprep.subr.bf16.mxu0 0
        %1284 = vmatpush1.bf16.msra.mxu0 %v1268
        %1285 = vmatprep.subr.bf16.mxu0 0
        %1286 = vmatpush1.bf16.msra.mxu0 0
        %1287 = vmatprep.subr.bf16.mxu0 0
        %1288 = vmatpush1.bf16.msra.mxu0 0
        %1289 = vmatprep.subr.bf16.mxu0 0
        %1290 = vmatpush1.bf16.msra.mxu0 0
        %1291 = vmatprep.subr.bf16.mxu0 0
        %1292 = vmatpush1.bf16.msra.mxu0 0
        %1293 = vmatprep.subr.bf16.mxu0 0
        %1294 = vmatpush1.bf16.msra.mxu0 0
        %1295 = vmatprep.subr.bf16.mxu0 0
        %1296 = vmatpush1.bf16.msra.mxu0 0
        %1297 = vmatprep.subr.bf16.mxu0 0
        %1298 = vmatpush1.bf16.msra.mxu0 0
        %1299 = vmatprep.subr.bf16.mxu0 0
        %1300 = vmatpush1.bf16.msra.mxu0 0
        %1301 = vmatprep.mubr.bf16.mxu0 0
        %1302 = vmatmul.mubr.bf16.gmra.mrb[0].mxu0 %v1253
        %v1303 = vpop.f32.mrb[0].mxu0
        %v1304 = vadd.f32 0.0, %v1303
        %v1305 = vpop.f32.mrb[0].mxu0
        %v1306 = vpop.f32.mrb[0].mxu0
        %v1307 = vadd.f32 0.0, %v1306
        %v1308 = vpop.f32.mrb[0].mxu0
        %1309 = vmatprep.mubr.bf16.mxu0 0
        %1310 = vmatmul.mubr.bf16.gmra.mrb[0].mxu0 %v1254
        %v1311 = vpop.f32.mrb[0].mxu0
        %v1312 = vadd.f32 0.0, %v1311
        %v1313 = vpop.f32.mrb[0].mxu0
        %v1314 = vpop.f32.mrb[0].mxu0
        %v1315 = vadd.f32 0.0, %v1314
        %v1316 = vpop.f32.mrb[0].mxu0
        %1317 = vmatprep.mubr.bf16.mxu0 0
        %1318 = vmatmul.mubr.bf16.gmra.mrb[0].mxu0 %v1255
        %v1319 = vpop.f32.mrb[0].mxu0
        %v1320 = vadd.f32 0.0, %v1319
        %v1321 = vpop.f32.mrb[0].mxu0
        %v1322 = vpop.f32.mrb[0].mxu0
        %v1323 = vadd.f32 0.0, %v1322
        %v1324 = vpop.f32.mrb[0].mxu0
        %1325 = vmatprep.mubr.bf16.mxu0 0
        %1326 = vmatmul.mubr.bf16.gmra.mrb[0].mxu0 %v1256
        %v1327 = vpop.f32.mrb[0].mxu0
        %v1328 = vadd.f32 0.0, %v1327
        %v1329 = vpop.f32.mrb[0].mxu0
        %v1330 = vpop.f32.mrb[0].mxu0
        %v1331 = vadd.f32 0.0, %v1330
        %v1332 = vpop.f32.mrb[0].mxu0
        %1333 = vmatprep.mubr.bf16.mxu0 0
        %1334 = vmatmul.mubr.bf16.gmra.mrb[0].mxu0 %v1257
        %v1335 = vpop.f32.mrb[0].mxu0
        %v1336 = vadd.f32 0.0, %v1335
        %v1337 = vpop.f32.mrb[0].mxu0
        %v1338 = vpop.f32.mrb[0].mxu0
        %v1339 = vadd.f32 0.0, %v1338
        %v1340 = vpop.f32.mrb[0].mxu0
        %1341 = vmatprep.mubr.bf16.mxu0 0
        %1342 = vmatmul.mubr.bf16.gmra.mrb[0].mxu0 %v1258
        %v1343 = vpop.f32.mrb[0].mxu0
        %v1344 = vadd.f32 0.0, %v1343
        %v1345 = vpop.f32.mrb[0].mxu0
        %v1346 = vpop.f32.mrb[0].mxu0
        %v1347 = vadd.f32 0.0, %v1346
        %v1348 = vpop.f32.mrb[0].mxu0
        %1349 = vmatprep.mubr.bf16.mxu0 0
        %1350 = vmatmul.mubr.bf16.gmra.mrb[0].mxu0 %v1259
        %v1351 = vpop.f32.mrb[0].mxu0
        %v1352 = vadd.f32 0.0, %v1351
        %v1353 = vpop.f32.mrb[0].mxu0
        %v1354 = vpop.f32.mrb[0].mxu0
        %v1355 = vadd.f32 0.0, %v1354
        %v1356 = vpop.f32.mrb[0].mxu0
        %1357 = vmatprep.mubr.bf16.mxu0 0
        %1358 = vmatmul.mubr.bf16.gmra.mrb[0].mxu0 %v1260
        %v1359 = vpop.f32.mrb[0].mxu0
        %v1360 = vadd.f32 0.0, %v1359
        %v1361 = vpop.f32.mrb[0].mxu0
        %v1362 = vpop.f32.mrb[0].mxu0
        %v1363 = vadd.f32 0.0, %v1362
        %v1364 = vpop.f32.mrb[0].mxu0
        %1365 = vdwg.mxu0
        %v1366 = vrcp.pop %v1222
        %v1367 = vrcp.pop %v1224
        %v1368 = vrcp.pop %v1226
        %v1369 = vrcp.pop %v1228
        %v1370 = vrcp.pop %v1230
        %v1371 = vrcp.pop %v1232
        %v1372 = vrcp.pop %v1234
        %v1373 = vrcp.pop %v1236
        %v1374 = vrcp.pop %v1238
        %v1375 = vrcp.pop %v1240
        %v1376 = vrcp.pop %v1242
        %v1377 = vrcp.pop %v1244
        %v1378 = vrcp.pop %v1246
        %v1379 = vrcp.pop %v1248
        %v1380 = vrcp.pop %v1250
        %v1381 = vrcp.pop %v1252
        %v1382 = vmul.f32 %v1304, %v1366
        %v1383 = vmul.f32 %v1307, %v1367
        %v1384 = vmul.f32 %v1312, %v1368
        %v1385 = vmul.f32 %v1315, %v1369
        %v1386 = vmul.f32 %v1320, %v1370
        %v1387 = vmul.f32 %v1323, %v1371
        %v1388 = vmul.f32 %v1328, %v1372
        %v1389 = vmul.f32 %v1331, %v1373
        %v1390 = vmul.f32 %v1336, %v1374
        %v1391 = vmul.f32 %v1339, %v1375
        %v1392 = vmul.f32 %v1344, %v1376
        %v1393 = vmul.f32 %v1347, %v1377
        %v1394 = vmul.f32 %v1352, %v1378
        %v1395 = vmul.f32 %v1355, %v1379
        %v1396 = vmul.f32 %v1360, %v1380
        %v1397 = vmul.f32 %v1363, %v1381
        %s1398 = sadd.s32 %s736, 1
        %s1399 = sld [smem:[#allocation10 + %s1398]]
        %1416 = vrot.lane.b32.xlu0 %v738, 96
        %v1417 = vpop.permute.xlu0 %1416
        %1418 = vrot.lane.b32.xlu0 %v739, 96
        %v1419 = vpop.permute.xlu0 %1418
        %1420 = vrot.lane.b32.xlu0 %v740, 96
        %v1421 = vpop.permute.xlu0 %1420
        %1422 = vrot.lane.b32.xlu0 %v741, 96
        %v1423 = vpop.permute.xlu0 %1422
        %1424 = vrot.lane.b32.xlu0 %v742, 96
        %v1425 = vpop.permute.xlu0 %1424
        %1426 = vrot.lane.b32.xlu0 %v743, 96
        %v1427 = vpop.permute.xlu0 %1426
        %1428 = vrot.lane.b32.xlu0 %v744, 96
        %v1429 = vpop.permute.xlu0 %1428
        %1430 = vrot.lane.b32.xlu0 %v745, 96
        %v1431 = vpop.permute.xlu0 %1430
        %1432 = vrot.lane.b32.xlu0 %v746, 96
        %v1433 = vpop.permute.xlu0 %1432
        %1434 = vrot.lane.b32.xlu0 %v747, 96
        %v1435 = vpop.permute.xlu0 %1434
        %1436 = vrot.lane.b32.xlu0 %v748, 96
        %v1437 = vpop.permute.xlu0 %1436
        %1438 = vrot.lane.b32.xlu0 %v749, 96
        %v1439 = vpop.permute.xlu0 %1438
        %1440 = vrot.lane.b32.xlu0 %v750, 96
        %v1441 = vpop.permute.xlu0 %1440
        %1442 = vrot.lane.b32.xlu0 %v751, 96
        %v1443 = vpop.permute.xlu0 %1442
        %1444 = vrot.lane.b32.xlu0 %v752, 96
        %v1445 = vpop.permute.xlu0 %1444
        %1446 = vrot.lane.b32.xlu0 %v753, 96
        %v1447 = vpop.permute.xlu0 %1446
        %v1464 = vsel %vm754, %v1417, 0.0
        %1465 = vadd.xlane.f32.xlu0 %v1464
        %v1466 = vpop.xlane.xlu0 %1465
        %v1467 = vsel %vm754, %v1419, 0.0
        %1468 = vadd.xlane.f32.xlu0 %v1467
        %v1469 = vpop.xlane.xlu0 %1468
        %v1470 = vsel %vm754, %v1421, 0.0
        %1471 = vadd.xlane.f32.xlu0 %v1470
        %v1472 = vpop.xlane.xlu0 %1471
        %v1473 = vsel %vm754, %v1423, 0.0
        %1474 = vadd.xlane.f32.xlu0 %v1473
        %v1475 = vpop.xlane.xlu0 %1474
        %v1476 = vsel %vm754, %v1425, 0.0
        %1477 = vadd.xlane.f32.xlu0 %v1476
        %v1478 = vpop.xlane.xlu0 %1477
        %v1479 = vsel %vm754, %v1427, 0.0
        %1480 = vadd.xlane.f32.xlu0 %v1479
        %v1481 = vpop.xlane.xlu0 %1480
        %v1482 = vsel %vm754, %v1429, 0.0
        %1483 = vadd.xlane.f32.xlu0 %v1482
        %v1484 = vpop.xlane.xlu0 %1483
        %v1485 = vsel %vm754, %v1431, 0.0
        %1486 = vadd.xlane.f32.xlu0 %v1485
        %v1487 = vpop.xlane.xlu0 %1486
        %v1488 = vsel %vm754, %v1433, 0.0
        %1489 = vadd.xlane.f32.xlu0 %v1488
        %v1490 = vpop.xlane.xlu0 %1489
        %v1491 = vsel %vm754, %v1435, 0.0
        %1492 = vadd.xlane.f32.xlu0 %v1491
        %v1493 = vpop.xlane.xlu0 %1492
        %v1494 = vsel %vm754, %v1437, 0.0
        %1495 = vadd.xlane.f32.xlu0 %v1494
        %v1496 = vpop.xlane.xlu0 %1495
        %v1497 = vsel %vm754, %v1439, 0.0
        %1498 = vadd.xlane.f32.xlu0 %v1497
        %v1499 = vpop.xlane.xlu0 %1498
        %v1500 = vsel %vm754, %v1441, 0.0
        %1501 = vadd.xlane.f32.xlu0 %v1500
        %v1502 = vpop.xlane.xlu0 %1501
        %v1503 = vsel %vm754, %v1443, 0.0
        %1504 = vadd.xlane.f32.xlu0 %v1503
        %v1505 = vpop.xlane.xlu0 %1504
        %v1506 = vsel %vm754, %v1445, 0.0
        %1507 = vadd.xlane.f32.xlu0 %v1506
        %v1508 = vpop.xlane.xlu0 %1507
        %v1509 = vsel %vm754, %v1447, 0.0
        %1510 = vadd.xlane.f32.xlu0 %v1509
        %v1511 = vpop.xlane.xlu0 %1510
        %v1512 = vmax.f32 %v1466, 1e-24
        %v1513 = vmax.f32 %v1469, 1e-24
        %v1514 = vmax.f32 %v1472, 1e-24
        %v1515 = vmax.f32 %v1475, 1e-24
        %v1516 = vmax.f32 %v1478, 1e-24
        %v1517 = vmax.f32 %v1481, 1e-24
        %v1518 = vmax.f32 %v1484, 1e-24
        %v1519 = vmax.f32 %v1487, 1e-24
        %v1520 = vmax.f32 %v1490, 1e-24
        %v1521 = vmax.f32 %v1493, 1e-24
        %v1522 = vmax.f32 %v1496, 1e-24
        %v1523 = vmax.f32 %v1499, 1e-24
        %v1524 = vmax.f32 %v1502, 1e-24
        %v1525 = vmax.f32 %v1505, 1e-24
        %v1526 = vmax.f32 %v1508, 1e-24
        %v1527 = vmax.f32 %v1511, 1e-24
        %v1528 = vrsqrt.pop %v1512
        %v1529 = vrsqrt.pop %v1513
        %v1530 = vrsqrt.pop %v1514
        %v1531 = vrsqrt.pop %v1515
        %v1532 = vrsqrt.pop %v1516
        %v1533 = vrsqrt.pop %v1517
        %v1534 = vrsqrt.pop %v1518
        %v1535 = vrsqrt.pop %v1519
        %v1536 = vrsqrt.pop %v1520
        %v1537 = vrsqrt.pop %v1521
        %v1538 = vrsqrt.pop %v1522
        %v1539 = vrsqrt.pop %v1523
        %v1540 = vrsqrt.pop %v1524
        %v1541 = vrsqrt.pop %v1525
        %v1542 = vrsqrt.pop %v1526
        %v1543 = vrsqrt.pop %v1527
        %v1544 = vstv %s1399
        %v1545 = vmul.f32 %v1544, %v1528
        %v1546 = vmul.f32 %v1544, %v1529
        %v1547 = vmul.f32 %v1544, %v1530
        %v1548 = vmul.f32 %v1544, %v1531
        %v1549 = vmul.f32 %v1544, %v1532
        %v1550 = vmul.f32 %v1544, %v1533
        %v1551 = vmul.f32 %v1544, %v1534
        %v1552 = vmul.f32 %v1544, %v1535
        %v1553 = vmul.f32 %v1544, %v1536
        %v1554 = vmul.f32 %v1544, %v1537
        %v1555 = vmul.f32 %v1544, %v1538
        %v1556 = vmul.f32 %v1544, %v1539
        %v1557 = vmul.f32 %v1544, %v1540
        %v1558 = vmul.f32 %v1544, %v1541
        %v1559 = vmul.f32 %v1544, %v1542
        %v1560 = vmul.f32 %v1544, %v1543
        %v1561 = vmul.f32 %v561, %v1545
        %v1562 = vmul.f32 %v565, %v1546
        %v1563 = vmul.f32 %v571, %v1547
        %v1564 = vmul.f32 %v575, %v1548
        %v1565 = vmul.f32 %v581, %v1549
        %v1566 = vmul.f32 %v585, %v1550
        %v1567 = vmul.f32 %v591, %v1551
        %v1568 = vmul.f32 %v595, %v1552
        %v1569 = vmul.f32 %v601, %v1553
        %v1570 = vmul.f32 %v605, %v1554
        %v1571 = vmul.f32 %v611, %v1555
        %v1572 = vmul.f32 %v615, %v1556
        %v1573 = vmul.f32 %v621, %v1557
        %v1574 = vmul.f32 %v625, %v1558
        %v1575 = vmul.f32 %v631, %v1559
        %v1576 = vmul.f32 %v635, %v1560
        %1593 = vrot.lane.b32.xlu0 %v868, 96
        %v1594 = vpop.permute.xlu0 %1593
        %1595 = vrot.lane.b32.xlu0 %v869, 96
        %v1596 = vpop.permute.xlu0 %1595
        %1597 = vrot.lane.b32.xlu0 %v870, 96
        %v1598 = vpop.permute.xlu0 %1597
        %1599 = vrot.lane.b32.xlu0 %v871, 96
        %v1600 = vpop.permute.xlu0 %1599
        %1601 = vrot.lane.b32.xlu0 %v872, 96
        %v1602 = vpop.permute.xlu0 %1601
        %1603 = vrot.lane.b32.xlu0 %v873, 96
        %v1604 = vpop.permute.xlu0 %1603
        %1605 = vrot.lane.b32.xlu0 %v874, 96
        %v1606 = vpop.permute.xlu0 %1605
        %1607 = vrot.lane.b32.xlu0 %v875, 96
        %v1608 = vpop.permute.xlu0 %1607
        %1609 = vrot.lane.b32.xlu0 %v876, 96
        %v1610 = vpop.permute.xlu0 %1609
        %1611 = vrot.lane.b32.xlu0 %v877, 96
        %v1612 = vpop.permute.xlu0 %1611
        %1613 = vrot.lane.b32.xlu0 %v878, 96
        %v1614 = vpop.permute.xlu0 %1613
        %1615 = vrot.lane.b32.xlu0 %v879, 96
        %v1616 = vpop.permute.xlu0 %1615
        %1617 = vrot.lane.b32.xlu0 %v880, 96
        %v1618 = vpop.permute.xlu0 %1617
        %1619 = vrot.lane.b32.xlu0 %v881, 96
        %v1620 = vpop.permute.xlu0 %1619
        %1621 = vrot.lane.b32.xlu0 %v882, 96
        %v1622 = vpop.permute.xlu0 %1621
        %1623 = vrot.lane.b32.xlu0 %v883, 96
        %v1624 = vpop.permute.xlu0 %1623
        %v1641 = vsel %vm754, %v1594, 0.0
        %1642 = vadd.xlane.f32.xlu0 %v1641
        %v1643 = vpop.xlane.xlu0 %1642
        %v1644 = vsel %vm754, %v1596, 0.0
        %1645 = vadd.xlane.f32.xlu0 %v1644
        %v1646 = vpop.xlane.xlu0 %1645
        %v1647 = vsel %vm754, %v1598, 0.0
        %1648 = vadd.xlane.f32.xlu0 %v1647
        %v1649 = vpop.xlane.xlu0 %1648
        %v1650 = vsel %vm754, %v1600, 0.0
        %1651 = vadd.xlane.f32.xlu0 %v1650
        %v1652 = vpop.xlane.xlu0 %1651
        %v1653 = vsel %vm754, %v1602, 0.0
        %1654 = vadd.xlane.f32.xlu0 %v1653
        %v1655 = vpop.xlane.xlu0 %1654
        %v1656 = vsel %vm754, %v1604, 0.0
        %1657 = vadd.xlane.f32.xlu0 %v1656
        %v1658 = vpop.xlane.xlu0 %1657
        %v1659 = vsel %vm754, %v1606, 0.0
        %1660 = vadd.xlane.f32.xlu0 %v1659
        %v1661 = vpop.xlane.xlu0 %1660
        %v1662 = vsel %vm754, %v1608, 0.0
        %1663 = vadd.xlane.f32.xlu0 %v1662
        %v1664 = vpop.xlane.xlu0 %1663
        %v1665 = vsel %vm754, %v1610, 0.0
        %1666 = vadd.xlane.f32.xlu0 %v1665
        %v1667 = vpop.xlane.xlu0 %1666
        %v1668 = vsel %vm754, %v1612, 0.0
        %1669 = vadd.xlane.f32.xlu0 %v1668
        %v1670 = vpop.xlane.xlu0 %1669
        %v1671 = vsel %vm754, %v1614, 0.0
        %1672 = vadd.xlane.f32.xlu0 %v1671
        %v1673 = vpop.xlane.xlu0 %1672
        %v1674 = vsel %vm754, %v1616, 0.0
        %1675 = vadd.xlane.f32.xlu0 %v1674
        %v1676 = vpop.xlane.xlu0 %1675
        %v1677 = vsel %vm754, %v1618, 0.0
        %1678 = vadd.xlane.f32.xlu0 %v1677
        %v1679 = vpop.xlane.xlu0 %1678
        %v1680 = vsel %vm754, %v1620, 0.0
        %1681 = vadd.xlane.f32.xlu0 %v1680
        %v1682 = vpop.xlane.xlu0 %1681
        %v1683 = vsel %vm754, %v1622, 0.0
        %1684 = vadd.xlane.f32.xlu0 %v1683
        %v1685 = vpop.xlane.xlu0 %1684
        %v1686 = vsel %vm754, %v1624, 0.0
        %1687 = vadd.xlane.f32.xlu0 %v1686
        %v1688 = vpop.xlane.xlu0 %1687
        %v1689 = vmax.f32 %v1643, 1e-24
        %v1690 = vmax.f32 %v1646, 1e-24
        %v1691 = vmax.f32 %v1649, 1e-24
        %v1692 = vmax.f32 %v1652, 1e-24
        %v1693 = vmax.f32 %v1655, 1e-24
        %v1694 = vmax.f32 %v1658, 1e-24
        %v1695 = vmax.f32 %v1661, 1e-24
        %v1696 = vmax.f32 %v1664, 1e-24
        %v1697 = vmax.f32 %v1667, 1e-24
        %v1698 = vmax.f32 %v1670, 1e-24
        %v1699 = vmax.f32 %v1673, 1e-24
        %v1700 = vmax.f32 %v1676, 1e-24
        %v1701 = vmax.f32 %v1679, 1e-24
        %v1702 = vmax.f32 %v1682, 1e-24
        %v1703 = vmax.f32 %v1685, 1e-24
        %v1704 = vmax.f32 %v1688, 1e-24
        %v1705 = vrsqrt.pop %v1689
        %v1706 = vrsqrt.pop %v1690
        %v1707 = vrsqrt.pop %v1691
        %v1708 = vrsqrt.pop %v1692
        %v1709 = vrsqrt.pop %v1693
        %v1710 = vrsqrt.pop %v1694
        %v1711 = vrsqrt.pop %v1695
        %v1712 = vrsqrt.pop %v1696
        %v1713 = vrsqrt.pop %v1697
        %v1714 = vrsqrt.pop %v1698
        %v1715 = vrsqrt.pop %v1699
        %v1716 = vrsqrt.pop %v1700
        %v1717 = vrsqrt.pop %v1701
        %v1718 = vrsqrt.pop %v1702
        %v1719 = vrsqrt.pop %v1703
        %v1720 = vrsqrt.pop %v1704
        %v1721 = vmul.f32 %v563, %v1705
        %v1722 = vmul.f32 %v567, %v1706
        %v1723 = vmul.f32 %v573, %v1707
        %v1724 = vmul.f32 %v577, %v1708
        %v1725 = vmul.f32 %v583, %v1709
        %v1726 = vmul.f32 %v587, %v1710
        %v1727 = vmul.f32 %v593, %v1711
        %v1728 = vmul.f32 %v597, %v1712
        %v1729 = vmul.f32 %v603, %v1713
        %v1730 = vmul.f32 %v607, %v1714
        %v1731 = vmul.f32 %v613, %v1715
        %v1732 = vmul.f32 %v617, %v1716
        %v1733 = vmul.f32 %v623, %v1717
        %v1734 = vmul.f32 %v627, %v1718
        %v1735 = vmul.f32 %v633, %v1719
        %v1736 = vmul.f32 %v637, %v1720
        %v1737 = vpack.c.bf16 %v1562, %v1561
        %v1738 = vpack.c.bf16 %v1564, %v1563
        %v1739 = vpack.c.bf16 %v1566, %v1565
        %v1740 = vpack.c.bf16 %v1568, %v1567
        %v1741 = vpack.c.bf16 %v1570, %v1569
        %v1742 = vpack.c.bf16 %v1572, %v1571
        %v1743 = vpack.c.bf16 %v1574, %v1573
        %v1744 = vpack.c.bf16 %v1576, %v1575
        %v1745 = vpack.c.bf16 %v1722, %v1721
        %v1746 = vpack.c.bf16 %v1724, %v1723
        %v1747 = vpack.c.bf16 %v1726, %v1725
        %v1748 = vpack.c.bf16 %v1728, %v1727
        %v1749 = vpack.c.bf16 %v1730, %v1729
        %v1750 = vpack.c.bf16 %v1732, %v1731
        %v1751 = vpack.c.bf16 %v1734, %v1733
        %v1752 = vpack.c.bf16 %v1736, %v1735
        %1761 = vrot.lane.b32.xlu0 %v1737, 96
        %v1762 = vpop.permute.xlu0 %1761
        %1763 = vrot.lane.b32.xlu0 %v1738, 96
        %v1764 = vpop.permute.xlu0 %1763
        %1765 = vrot.lane.b32.xlu0 %v1739, 96
        %v1766 = vpop.permute.xlu0 %1765
        %1767 = vrot.lane.b32.xlu0 %v1740, 96
        %v1768 = vpop.permute.xlu0 %1767
        %1769 = vrot.lane.b32.xlu0 %v1741, 96
        %v1770 = vpop.permute.xlu0 %1769
        %1771 = vrot.lane.b32.xlu0 %v1742, 96
        %v1772 = vpop.permute.xlu0 %1771
        %1773 = vrot.lane.b32.xlu0 %v1743, 96
        %v1774 = vpop.permute.xlu0 %1773
        %1775 = vrot.lane.b32.xlu0 %v1744, 96
        %v1776 = vpop.permute.xlu0 %1775
        %1785 = vrot.lane.b32.xlu0 %v1745, 96
        %v1786 = vpop.permute.xlu0 %1785
        %1787 = vrot.lane.b32.xlu0 %v1746, 96
        %v1788 = vpop.permute.xlu0 %1787
        %1789 = vrot.lane.b32.xlu0 %v1747, 96
        %v1790 = vpop.permute.xlu0 %1789
        %1791 = vrot.lane.b32.xlu0 %v1748, 96
        %v1792 = vpop.permute.xlu0 %1791
        %1793 = vrot.lane.b32.xlu0 %v1749, 96
        %v1794 = vpop.permute.xlu0 %1793
        %1795 = vrot.lane.b32.xlu0 %v1750, 96
        %v1796 = vpop.permute.xlu0 %1795
        %1797 = vrot.lane.b32.xlu0 %v1751, 96
        %v1798 = vpop.permute.xlu0 %1797
        %1799 = vrot.lane.b32.xlu0 %v1752, 96
        %v1800 = vpop.permute.xlu0 %1799
        %v1802 = vsel %vm754, %v1762, 0
        %v1805 = vsel %vm754, %v1764, 0
        %v1808 = vsel %vm754, %v1766, 0
        %v1811 = vsel %vm754, %v1768, 0
        %v1814 = vsel %vm754, %v1770, 0
        %v1817 = vsel %vm754, %v1772, 0
        %v1820 = vsel %vm754, %v1774, 0
        %v1823 = vsel %vm754, %v1776, 0
        %v1826 = vsel %vm754, %v1786, 0
        %v1829 = vsel %vm754, %v1788, 0
        %v1832 = vsel %vm754, %v1790, 0
        %v1835 = vsel %vm754, %v1792, 0
        %v1838 = vsel %vm754, %v1794, 0
        %v1841 = vsel %vm754, %v1796, 0
        %v1844 = vsel %vm754, %v1798, 0
        %v1847 = vsel %vm754, %v1800, 0
        %1849 = vmatprep.subr.bf16.mxu0 0
        %1850 = vmatpush1.bf16.xpose.msra.mxu0 %v1826
        %1851 = vmatprep.subr.bf16.mxu0 0
        %1852 = vmatpush1.bf16.xpose.msra.mxu0 %v1829
        %1853 = vmatprep.subr.bf16.mxu0 0
        %1854 = vmatpush1.bf16.xpose.msra.mxu0 %v1832
        %1855 = vmatprep.subr.bf16.mxu0 0
        %1856 = vmatpush1.bf16.xpose.msra.mxu0 %v1835
        %1857 = vmatprep.subr.bf16.mxu0 0
        %1858 = vmatpush1.bf16.xpose.msra.mxu0 %v1838
        %1859 = vmatprep.subr.bf16.mxu0 0
        %1860 = vmatpush1.bf16.xpose.msra.mxu0 %v1841
        %1861 = vmatprep.subr.bf16.mxu0 0
        %1862 = vmatpush1.bf16.xpose.msra.mxu0 %v1844
        %1863 = vmatprep.subr.bf16.mxu0 0
        %1864 = vmatpush1.bf16.xpose.msra.mxu0 %v1847
        %1865 = vmatprep.subr.bf16.mxu0 0
        %1866 = vmatpush1.bf16.xpose.msra.mxu0 0
        %1867 = vmatprep.subr.bf16.mxu0 0
        %1868 = vmatpush1.bf16.xpose.msra.mxu0 0
        %1869 = vmatprep.subr.bf16.mxu0 0
        %1870 = vmatpush1.bf16.xpose.msra.mxu0 0
        %1871 = vmatprep.subr.bf16.mxu0 0
        %1872 = vmatpush1.bf16.xpose.msra.mxu0 0
        %1873 = vmatprep.subr.bf16.mxu0 0
        %1874 = vmatpush1.bf16.xpose.msra.mxu0 0
        %1875 = vmatprep.subr.bf16.mxu0 0
        %1876 = vmatpush1.bf16.xpose.msra.mxu0 0
        %1877 = vmatprep.subr.bf16.mxu0 0
        %1878 = vmatpush1.bf16.xpose.msra.mxu0 0
        %1879 = vmatprep.subr.bf16.mxu0 0
        %1880 = vmatpush1.bf16.xpose.msra.mxu0 0
        %1881 = vmatprep.mubr.bf16.mxu0 0
        %1882 = vmatmul.mubr.bf16.gmra.mrb[0].mxu0 %v1802
        %v1883 = vpop.f32.mrb[0].mxu0
        %v1884 = vadd.f32 0.0, %v1883
        %v1885 = vpop.f32.mrb[0].mxu0
        %v1886 = vpop.f32.mrb[0].mxu0
        %v1887 = vadd.f32 0.0, %v1886
        %v1888 = vpop.f32.mrb[0].mxu0
        %1889 = vmatprep.mubr.bf16.mxu0 0
        %1890 = vmatmul.mubr.bf16.gmra.mrb[0].mxu0 %v1805
        %v1891 = vpop.f32.mrb[0].mxu0
        %v1892 = vadd.f32 0.0, %v1891
        %v1893 = vpop.f32.mrb[0].mxu0
        %v1894 = vpop.f32.mrb[0].mxu0
        %v1895 = vadd.f32 0.0, %v1894
        %v1896 = vpop.f32.mrb[0].mxu0
        %1897 = vmatprep.mubr.bf16.mxu0 0
        %1898 = vmatmul.mubr.bf16.gmra.mrb[0].mxu0 %v1808
        %v1899 = vpop.f32.mrb[0].mxu0
        %v1900 = vadd.f32 0.0, %v1899
        %v1901 = vpop.f32.mrb[0].mxu0
        %v1902 = vpop.f32.mrb[0].mxu0
        %v1903 = vadd.f32 0.0, %v1902
        %v1904 = vpop.f32.mrb[0].mxu0
        %1905 = vmatprep.mubr.bf16.mxu0 0
        %1906 = vmatmul.mubr.bf16.gmra.mrb[0].mxu0 %v1811
        %v1907 = vpop.f32.mrb[0].mxu0
        %v1908 = vadd.f32 0.0, %v1907
        %v1909 = vpop.f32.mrb[0].mxu0
        %v1910 = vpop.f32.mrb[0].mxu0
        %v1911 = vadd.f32 0.0, %v1910
        %v1912 = vpop.f32.mrb[0].mxu0
        %1913 = vmatprep.mubr.bf16.mxu0 0
        %1914 = vmatmul.mubr.bf16.gmra.mrb[0].mxu0 %v1814
        %v1915 = vpop.f32.mrb[0].mxu0
        %v1916 = vadd.f32 0.0, %v1915
        %v1917 = vpop.f32.mrb[0].mxu0
        %v1918 = vpop.f32.mrb[0].mxu0
        %v1919 = vadd.f32 0.0, %v1918
        %v1920 = vpop.f32.mrb[0].mxu0
        %1921 = vmatprep.mubr.bf16.mxu0 0
        %1922 = vmatmul.mubr.bf16.gmra.mrb[0].mxu0 %v1817
        %v1923 = vpop.f32.mrb[0].mxu0
        %v1924 = vadd.f32 0.0, %v1923
        %v1925 = vpop.f32.mrb[0].mxu0
        %v1926 = vpop.f32.mrb[0].mxu0
        %v1927 = vadd.f32 0.0, %v1926
        %v1928 = vpop.f32.mrb[0].mxu0
        %1929 = vmatprep.mubr.bf16.mxu0 0
        %1930 = vmatmul.mubr.bf16.gmra.mrb[0].mxu0 %v1820
        %v1931 = vpop.f32.mrb[0].mxu0
        %v1932 = vadd.f32 0.0, %v1931
        %v1933 = vpop.f32.mrb[0].mxu0
        %v1934 = vpop.f32.mrb[0].mxu0
        %v1935 = vadd.f32 0.0, %v1934
        %v1936 = vpop.f32.mrb[0].mxu0
        %1937 = vmatprep.mubr.bf16.mxu0 0
        %1938 = vmatmul.mubr.bf16.gmra.mrb[0].mxu0 %v1823
        %v1939 = vpop.f32.mrb[0].mxu0
        %v1940 = vadd.f32 0.0, %v1939
        %v1941 = vpop.f32.mrb[0].mxu0
        %v1942 = vpop.f32.mrb[0].mxu0
        %v1943 = vadd.f32 0.0, %v1942
        %v1944 = vpop.f32.mrb[0].mxu0
        %1945 = vdwg.mxu0
        %1946 = vmax.xlane.f32.xlu0 %v1884
        %v1947 = vpop.xlane.xlu0 %1946
        %1948 = vmax.xlane.f32.xlu0 %v1887
        %v1949 = vpop.xlane.xlu0 %1948
        %1950 = vmax.xlane.f32.xlu0 %v1892
        %v1951 = vpop.xlane.xlu0 %1950
        %1952 = vmax.xlane.f32.xlu0 %v1895
        %v1953 = vpop.xlane.xlu0 %1952
        %1954 = vmax.xlane.f32.xlu0 %v1900
        %v1955 = vpop.xlane.xlu0 %1954
        %1956 = vmax.xlane.f32.xlu0 %v1903
        %v1957 = vpop.xlane.xlu0 %1956
        %1958 = vmax.xlane.f32.xlu0 %v1908
        %v1959 = vpop.xlane.xlu0 %1958
        %1960 = vmax.xlane.f32.xlu0 %v1911
        %v1961 = vpop.xlane.xlu0 %1960
        %1962 = vmax.xlane.f32.xlu0 %v1916
        %v1963 = vpop.xlane.xlu0 %1962
        %1964 = vmax.xlane.f32.xlu0 %v1919
        %v1965 = vpop.xlane.xlu0 %1964
        %1966 = vmax.xlane.f32.xlu0 %v1924
        %v1967 = vpop.xlane.xlu0 %1966
        %1968 = vmax.xlane.f32.xlu0 %v1927
        %v1969 = vpop.xlane.xlu0 %1968
        %1970 = vmax.xlane.f32.xlu0 %v1932
        %v1971 = vpop.xlane.xlu0 %1970
        %1972 = vmax.xlane.f32.xlu0 %v1935
        %v1973 = vpop.xlane.xlu0 %1972
        %1974 = vmax.xlane.f32.xlu0 %v1940
        %v1975 = vpop.xlane.xlu0 %1974
        %1976 = vmax.xlane.f32.xlu0 %v1943
        %v1977 = vpop.xlane.xlu0 %1976
        %v1978 = vsub.f32 %v1884, %v1947
        %v1979 = vsub.f32 %v1887, %v1949
        %v1980 = vsub.f32 %v1892, %v1951
        %v1981 = vsub.f32 %v1895, %v1953
        %v1982 = vsub.f32 %v1900, %v1955
        %v1983 = vsub.f32 %v1903, %v1957
        %v1984 = vsub.f32 %v1908, %v1959
        %v1985 = vsub.f32 %v1911, %v1961
        %v1986 = vsub.f32 %v1916, %v1963
        %v1987 = vsub.f32 %v1919, %v1965
        %v1988 = vsub.f32 %v1924, %v1967
        %v1989 = vsub.f32 %v1927, %v1969
        %v1990 = vsub.f32 %v1932, %v1971
        %v1991 = vsub.f32 %v1935, %v1973
        %v1992 = vsub.f32 %v1940, %v1975
        %v1993 = vsub.f32 %v1943, %v1977
        %v1994 = vmul.f32 %v1978, 1.442695
        %v1995 = vpow.pop %v1994
        %v1996 = vmul.f32 %v1979, 1.442695
        %v1997 = vpow.pop %v1996
        %v1998 = vmul.f32 %v1980, 1.442695
        %v1999 = vpow.pop %v1998
        %v2000 = vmul.f32 %v1981, 1.442695
        %v2001 = vpow.pop %v2000
        %v2002 = vmul.f32 %v1982, 1.442695
        %v2003 = vpow.pop %v2002
        %v2004 = vmul.f32 %v1983, 1.442695
        %v2005 = vpow.pop %v2004
        %v2006 = vmul.f32 %v1984, 1.442695
        %v2007 = vpow.pop %v2006
        %v2008 = vmul.f32 %v1985, 1.442695
        %v2009 = vpow.pop %v2008
        %v2010 = vmul.f32 %v1986, 1.442695
        %v2011 = vpow.pop %v2010
        %v2012 = vmul.f32 %v1987, 1.442695
        %v2013 = vpow.pop %v2012
        %v2014 = vmul.f32 %v1988, 1.442695
        %v2015 = vpow.pop %v2014
        %v2016 = vmul.f32 %v1989, 1.442695
        %v2017 = vpow.pop %v2016
        %v2018 = vmul.f32 %v1990, 1.442695
        %v2019 = vpow.pop %v2018
        %v2020 = vmul.f32 %v1991, 1.442695
        %v2021 = vpow.pop %v2020
        %v2022 = vmul.f32 %v1992, 1.442695
        %v2023 = vpow.pop %v2022
        %v2024 = vmul.f32 %v1993, 1.442695
        %v2025 = vpow.pop %v2024
        %2026 = vadd.xlane.f32.xlu0 %v1995
        %v2027 = vpop.xlane.xlu0 %2026
        %2028 = vadd.xlane.f32.xlu0 %v1997
        %v2029 = vpop.xlane.xlu0 %2028
        %2030 = vadd.xlane.f32.xlu0 %v1999
        %v2031 = vpop.xlane.xlu0 %2030
        %2032 = vadd.xlane.f32.xlu0 %v2001
        %v2033 = vpop.xlane.xlu0 %2032
        %2034 = vadd.xlane.f32.xlu0 %v2003
        %v2035 = vpop.xlane.xlu0 %2034
        %2036 = vadd.xlane.f32.xlu0 %v2005
        %v2037 = vpop.xlane.xlu0 %2036
        %2038 = vadd.xlane.f32.xlu0 %v2007
        %v2039 = vpop.xlane.xlu0 %2038
        %2040 = vadd.xlane.f32.xlu0 %v2009
        %v2041 = vpop.xlane.xlu0 %2040
        %2042 = vadd.xlane.f32.xlu0 %v2011
        %v2043 = vpop.xlane.xlu0 %2042
        %2044 = vadd.xlane.f32.xlu0 %v2013
        %v2045 = vpop.xlane.xlu0 %2044
        %2046 = vadd.xlane.f32.xlu0 %v2015
        %v2047 = vpop.xlane.xlu0 %2046
        %2048 = vadd.xlane.f32.xlu0 %v2017
        %v2049 = vpop.xlane.xlu0 %2048
        %2050 = vadd.xlane.f32.xlu0 %v2019
        %v2051 = vpop.xlane.xlu0 %2050
        %2052 = vadd.xlane.f32.xlu0 %v2021
        %v2053 = vpop.xlane.xlu0 %2052
        %2054 = vadd.xlane.f32.xlu0 %v2023
        %v2055 = vpop.xlane.xlu0 %2054
        %2056 = vadd.xlane.f32.xlu0 %v2025
        %v2057 = vpop.xlane.xlu0 %2056
        %v2058 = vpack.c.bf16 %v1997, %v1995
        %v2059 = vpack.c.bf16 %v2001, %v1999
        %v2060 = vpack.c.bf16 %v2005, %v2003
        %v2061 = vpack.c.bf16 %v2009, %v2007
        %v2062 = vpack.c.bf16 %v2013, %v2011
        %v2063 = vpack.c.bf16 %v2017, %v2015
        %v2064 = vpack.c.bf16 %v2021, %v2019
        %v2065 = vpack.c.bf16 %v2025, %v2023
        %2074 = vrot.lane.b32.xlu0 %v1261, 96
        %v2075 = vpop.permute.xlu0 %2074
        %2076 = vrot.lane.b32.xlu0 %v1262, 96
        %v2077 = vpop.permute.xlu0 %2076
        %2078 = vrot.lane.b32.xlu0 %v1263, 96
        %v2079 = vpop.permute.xlu0 %2078
        %2080 = vrot.lane.b32.xlu0 %v1264, 96
        %v2081 = vpop.permute.xlu0 %2080
        %2082 = vrot.lane.b32.xlu0 %v1265, 96
        %v2083 = vpop.permute.xlu0 %2082
        %2084 = vrot.lane.b32.xlu0 %v1266, 96
        %v2085 = vpop.permute.xlu0 %2084
        %2086 = vrot.lane.b32.xlu0 %v1267, 96
        %v2087 = vpop.permute.xlu0 %2086
        %2088 = vrot.lane.b32.xlu0 %v1268, 96
        %v2089 = vpop.permute.xlu0 %2088
        %2098 = vmatprep.subr.bf16.mxu0 0
        %2099 = vmatpush1.bf16.msra.mxu0 %v2075
        %2100 = vmatprep.subr.bf16.mxu0 0
        %2101 = vmatpush1.bf16.msra.mxu0 %v2077
        %2102 = vmatprep.subr.bf16.mxu0 0
        %2103 = vmatpush1.bf16.msra.mxu0 %v2079
        %2104 = vmatprep.subr.bf16.mxu0 0
        %2105 = vmatpush1.bf16.msra.mxu0 %v2081
        %2106 = vmatprep.subr.bf16.mxu0 0
        %2107 = vmatpush1.bf16.msra.mxu0 %v2083
        %2108 = vmatprep.subr.bf16.mxu0 0
        %2109 = vmatpush1.bf16.msra.mxu0 %v2085
        %2110 = vmatprep.subr.bf16.mxu0 0
        %2111 = vmatpush1.bf16.msra.mxu0 %v2087
        %2112 = vmatprep.subr.bf16.mxu0 0
        %2113 = vmatpush1.bf16.msra.mxu0 %v2089
        %2114 = vmatprep.subr.bf16.mxu0 0
        %2115 = vmatpush1.bf16.msra.mxu0 0
        %2116 = vmatprep.subr.bf16.mxu0 0
        %2117 = vmatpush1.bf16.msra.mxu0 0
        %2118 = vmatprep.subr.bf16.mxu0 0
        %2119 = vmatpush1.bf16.msra.mxu0 0
        %2120 = vmatprep.subr.bf16.mxu0 0
        %2121 = vmatpush1.bf16.msra.mxu0 0
        %2122 = vmatprep.subr.bf16.mxu0 0
        %2123 = vmatpush1.bf16.msra.mxu0 0
        %2124 = vmatprep.subr.bf16.mxu0 0
        %2125 = vmatpush1.bf16.msra.mxu0 0
        %2126 = vmatprep.subr.bf16.mxu0 0
        %2127 = vmatpush1.bf16.msra.mxu0 0
        %2128 = vmatprep.subr.bf16.mxu0 0
        %2129 = vmatpush1.bf16.msra.mxu0 0
        %2130 = vmatprep.mubr.bf16.mxu0 0
        %2131 = vmatmul.mubr.bf16.gmra.mrb[0].mxu0 %v2058
        %v2132 = vpop.f32.mrb[0].mxu0
        %v2133 = vadd.f32 0.0, %v2132
        %v2134 = vpop.f32.mrb[0].mxu0
        %v2135 = vpop.f32.mrb[0].mxu0
        %v2136 = vadd.f32 0.0, %v2135
        %v2137 = vpop.f32.mrb[0].mxu0
        %2138 = vmatprep.mubr.bf16.mxu0 0
        %2139 = vmatmul.mubr.bf16.gmra.mrb[0].mxu0 %v2059
        %v2140 = vpop.f32.mrb[0].mxu0
        %v2141 = vadd.f32 0.0, %v2140
        %v2142 = vpop.f32.mrb[0].mxu0
        %v2143 = vpop.f32.mrb[0].mxu0
        %v2144 = vadd.f32 0.0, %v2143
        %v2145 = vpop.f32.mrb[0].mxu0
        %2146 = vmatprep.mubr.bf16.mxu0 0
        %2147 = vmatmul.mubr.bf16.gmra.mrb[0].mxu0 %v2060
        %v2148 = vpop.f32.mrb[0].mxu0
        %v2149 = vadd.f32 0.0, %v2148
        %v2150 = vpop.f32.mrb[0].mxu0
        %v2151 = vpop.f32.mrb[0].mxu0
        %v2152 = vadd.f32 0.0, %v2151
        %v2153 = vpop.f32.mrb[0].mxu0
        %2154 = vmatprep.mubr.bf16.mxu0 0
        %2155 = vmatmul.mubr.bf16.gmra.mrb[0].mxu0 %v2061
        %v2156 = vpop.f32.mrb[0].mxu0
        %v2157 = vadd.f32 0.0, %v2156
        %v2158 = vpop.f32.mrb[0].mxu0
        %v2159 = vpop.f32.mrb[0].mxu0
        %v2160 = vadd.f32 0.0, %v2159
        %v2161 = vpop.f32.mrb[0].mxu0
        %2162 = vmatprep.mubr.bf16.mxu0 0
        %2163 = vmatmul.mubr.bf16.gmra.mrb[0].mxu0 %v2062
        %v2164 = vpop.f32.mrb[0].mxu0
        %v2165 = vadd.f32 0.0, %v2164
        %v2166 = vpop.f32.mrb[0].mxu0
        %v2167 = vpop.f32.mrb[0].mxu0
        %v2168 = vadd.f32 0.0, %v2167
        %v2169 = vpop.f32.mrb[0].mxu0
        %2170 = vmatprep.mubr.bf16.mxu0 0
        %2171 = vmatmul.mubr.bf16.gmra.mrb[0].mxu0 %v2063
        %v2172 = vpop.f32.mrb[0].mxu0
        %v2173 = vadd.f32 0.0, %v2172
        %v2174 = vpop.f32.mrb[0].mxu0
        %v2175 = vpop.f32.mrb[0].mxu0
        %v2176 = vadd.f32 0.0, %v2175
        %v2177 = vpop.f32.mrb[0].mxu0
        %2178 = vmatprep.mubr.bf16.mxu0 0
        %2179 = vmatmul.mubr.bf16.gmra.mrb[0].mxu0 %v2064
        %v2180 = vpop.f32.mrb[0].mxu0
        %v2181 = vadd.f32 0.0, %v2180
        %v2182 = vpop.f32.mrb[0].mxu0
        %v2183 = vpop.f32.mrb[0].mxu0
        %v2184 = vadd.f32 0.0, %v2183
        %v2185 = vpop.f32.mrb[0].mxu0
        %2186 = vmatprep.mubr.bf16.mxu0 0
        %2187 = vmatmul.mubr.bf16.gmra.mrb[0].mxu0 %v2065
        %v2188 = vpop.f32.mrb[0].mxu0
        %v2189 = vadd.f32 0.0, %v2188
        %v2190 = vpop.f32.mrb[0].mxu0
        %v2191 = vpop.f32.mrb[0].mxu0
        %v2192 = vadd.f32 0.0, %v2191
        %v2193 = vpop.f32.mrb[0].mxu0
        %2194 = vdwg.mxu0
        %v2195 = vrcp.pop %v2027
        %v2196 = vrcp.pop %v2029
        %v2197 = vrcp.pop %v2031
        %v2198 = vrcp.pop %v2033
        %v2199 = vrcp.pop %v2035
        %v2200 = vrcp.pop %v2037
        %v2201 = vrcp.pop %v2039
        %v2202 = vrcp.pop %v2041
        %v2203 = vrcp.pop %v2043
        %v2204 = vrcp.pop %v2045
        %v2205 = vrcp.pop %v2047
        %v2206 = vrcp.pop %v2049
        %v2207 = vrcp.pop %v2051
        %v2208 = vrcp.pop %v2053
        %v2209 = vrcp.pop %v2055
        %v2210 = vrcp.pop %v2057
        %v2211 = vmul.f32 %v2133, %v2195
        %v2212 = vmul.f32 %v2136, %v2196
        %v2213 = vmul.f32 %v2141, %v2197
        %v2214 = vmul.f32 %v2144, %v2198
        %v2215 = vmul.f32 %v2149, %v2199
        %v2216 = vmul.f32 %v2152, %v2200
        %v2217 = vmul.f32 %v2157, %v2201
        %v2218 = vmul.f32 %v2160, %v2202
        %v2219 = vmul.f32 %v2165, %v2203
        %v2220 = vmul.f32 %v2168, %v2204
        %v2221 = vmul.f32 %v2173, %v2205
        %v2222 = vmul.f32 %v2176, %v2206
        %v2223 = vmul.f32 %v2181, %v2207
        %v2224 = vmul.f32 %v2184, %v2208
        %v2225 = vmul.f32 %v2189, %v2209
        %v2226 = vmul.f32 %v2192, %v2210
        %s2227 = sadd.s32 %s736, 2
        %s2228 = sld [smem:[#allocation10 + %s2227]]
        %2229 = vrot.lane.b32.xlu0 %v738, 64
        %v2230 = vpop.permute.xlu0 %2229
        %2231 = vrot.lane.b32.xlu0 %v739, 64
        %v2232 = vpop.permute.xlu0 %2231
        %2233 = vrot.lane.b32.xlu0 %v740, 64
        %v2234 = vpop.permute.xlu0 %2233
        %2235 = vrot.lane.b32.xlu0 %v741, 64
        %v2236 = vpop.permute.xlu0 %2235
        %2237 = vrot.lane.b32.xlu0 %v742, 64
        %v2238 = vpop.permute.xlu0 %2237
        %2239 = vrot.lane.b32.xlu0 %v743, 64
        %v2240 = vpop.permute.xlu0 %2239
        %2241 = vrot.lane.b32.xlu0 %v744, 64
        %v2242 = vpop.permute.xlu0 %2241
        %2243 = vrot.lane.b32.xlu0 %v745, 64
        %v2244 = vpop.permute.xlu0 %2243
        %2245 = vrot.lane.b32.xlu0 %v746, 64
        %v2246 = vpop.permute.xlu0 %2245
        %2247 = vrot.lane.b32.xlu0 %v747, 64
        %v2248 = vpop.permute.xlu0 %2247
        %2249 = vrot.lane.b32.xlu0 %v748, 64
        %v2250 = vpop.permute.xlu0 %2249
        %2251 = vrot.lane.b32.xlu0 %v749, 64
        %v2252 = vpop.permute.xlu0 %2251
        %2253 = vrot.lane.b32.xlu0 %v750, 64
        %v2254 = vpop.permute.xlu0 %2253
        %2255 = vrot.lane.b32.xlu0 %v751, 64
        %v2256 = vpop.permute.xlu0 %2255
        %2257 = vrot.lane.b32.xlu0 %v752, 64
        %v2258 = vpop.permute.xlu0 %2257
        %2259 = vrot.lane.b32.xlu0 %v753, 64
        %v2260 = vpop.permute.xlu0 %2259
        %v2277 = vsel %vm754, %v2230, 0.0
        %2278 = vadd.xlane.f32.xlu0 %v2277
        %v2279 = vpop.xlane.xlu0 %2278
        %v2280 = vsel %vm754, %v2232, 0.0
        %2281 = vadd.xlane.f32.xlu0 %v2280
        %v2282 = vpop.xlane.xlu0 %2281
        %v2283 = vsel %vm754, %v2234, 0.0
        %2284 = vadd.xlane.f32.xlu0 %v2283
        %v2285 = vpop.xlane.xlu0 %2284
        %v2286 = vsel %vm754, %v2236, 0.0
        %2287 = vadd.xlane.f32.xlu0 %v2286
        %v2288 = vpop.xlane.xlu0 %2287
        %v2289 = vsel %vm754, %v2238, 0.0
        %2290 = vadd.xlane.f32.xlu0 %v2289
        %v2291 = vpop.xlane.xlu0 %2290
        %v2292 = vsel %vm754, %v2240, 0.0
        %2293 = vadd.xlane.f32.xlu0 %v2292
        %v2294 = vpop.xlane.xlu0 %2293
        %v2295 = vsel %vm754, %v2242, 0.0
        %2296 = vadd.xlane.f32.xlu0 %v2295
        %v2297 = vpop.xlane.xlu0 %2296
        %v2298 = vsel %vm754, %v2244, 0.0
        %2299 = vadd.xlane.f32.xlu0 %v2298
        %v2300 = vpop.xlane.xlu0 %2299
        %v2301 = vsel %vm754, %v2246, 0.0
        %2302 = vadd.xlane.f32.xlu0 %v2301
        %v2303 = vpop.xlane.xlu0 %2302
        %v2304 = vsel %vm754, %v2248, 0.0
        %2305 = vadd.xlane.f32.xlu0 %v2304
        %v2306 = vpop.xlane.xlu0 %2305
        %v2307 = vsel %vm754, %v2250, 0.0
        %2308 = vadd.xlane.f32.xlu0 %v2307
        %v2309 = vpop.xlane.xlu0 %2308
        %v2310 = vsel %vm754, %v2252, 0.0
        %2311 = vadd.xlane.f32.xlu0 %v2310
        %v2312 = vpop.xlane.xlu0 %2311
        %v2313 = vsel %vm754, %v2254, 0.0
        %2314 = vadd.xlane.f32.xlu0 %v2313
        %v2315 = vpop.xlane.xlu0 %2314
        %v2316 = vsel %vm754, %v2256, 0.0
        %2317 = vadd.xlane.f32.xlu0 %v2316
        %v2318 = vpop.xlane.xlu0 %2317
        %v2319 = vsel %vm754, %v2258, 0.0
        %2320 = vadd.xlane.f32.xlu0 %v2319
        %v2321 = vpop.xlane.xlu0 %2320
        %v2322 = vsel %vm754, %v2260, 0.0
        %2323 = vadd.xlane.f32.xlu0 %v2322
        %v2324 = vpop.xlane.xlu0 %2323
        %v2325 = vmax.f32 %v2279, 1e-24
        %v2326 = vmax.f32 %v2282, 1e-24
        %v2327 = vmax.f32 %v2285, 1e-24
        %v2328 = vmax.f32 %v2288, 1e-24
        %v2329 = vmax.f32 %v2291, 1e-24
        %v2330 = vmax.f32 %v2294, 1e-24
        %v2331 = vmax.f32 %v2297, 1e-24
        %v2332 = vmax.f32 %v2300, 1e-24
        %v2333 = vmax.f32 %v2303, 1e-24
        %v2334 = vmax.f32 %v2306, 1e-24
        %v2335 = vmax.f32 %v2309, 1e-24
        %v2336 = vmax.f32 %v2312, 1e-24
        %v2337 = vmax.f32 %v2315, 1e-24
        %v2338 = vmax.f32 %v2318, 1e-24
        %v2339 = vmax.f32 %v2321, 1e-24
        %v2340 = vmax.f32 %v2324, 1e-24
        %v2341 = vrsqrt.pop %v2325
        %v2342 = vrsqrt.pop %v2326
        %v2343 = vrsqrt.pop %v2327
        %v2344 = vrsqrt.pop %v2328
        %v2345 = vrsqrt.pop %v2329
        %v2346 = vrsqrt.pop %v2330
        %v2347 = vrsqrt.pop %v2331
        %v2348 = vrsqrt.pop %v2332
        %v2349 = vrsqrt.pop %v2333
        %v2350 = vrsqrt.pop %v2334
        %v2351 = vrsqrt.pop %v2335
        %v2352 = vrsqrt.pop %v2336
        %v2353 = vrsqrt.pop %v2337
        %v2354 = vrsqrt.pop %v2338
        %v2355 = vrsqrt.pop %v2339
        %v2356 = vrsqrt.pop %v2340
        %v2357 = vstv %s2228
        %v2358 = vmul.f32 %v2357, %v2341
        %v2359 = vmul.f32 %v2357, %v2342
        %v2360 = vmul.f32 %v2357, %v2343
        %v2361 = vmul.f32 %v2357, %v2344
        %v2362 = vmul.f32 %v2357, %v2345
        %v2363 = vmul.f32 %v2357, %v2346
        %v2364 = vmul.f32 %v2357, %v2347
        %v2365 = vmul.f32 %v2357, %v2348
        %v2366 = vmul.f32 %v2357, %v2349
        %v2367 = vmul.f32 %v2357, %v2350
        %v2368 = vmul.f32 %v2357, %v2351
        %v2369 = vmul.f32 %v2357, %v2352
        %v2370 = vmul.f32 %v2357, %v2353
        %v2371 = vmul.f32 %v2357, %v2354
        %v2372 = vmul.f32 %v2357, %v2355
        %v2373 = vmul.f32 %v2357, %v2356
        %v2374 = vmul.f32 %v561, %v2358
        %v2375 = vmul.f32 %v565, %v2359
        %v2376 = vmul.f32 %v571, %v2360
        %v2377 = vmul.f32 %v575, %v2361
        %v2378 = vmul.f32 %v581, %v2362
        %v2379 = vmul.f32 %v585, %v2363
        %v2380 = vmul.f32 %v591, %v2364
        %v2381 = vmul.f32 %v595, %v2365
        %v2382 = vmul.f32 %v601, %v2366
        %v2383 = vmul.f32 %v605, %v2367
        %v2384 = vmul.f32 %v611, %v2368
        %v2385 = vmul.f32 %v615, %v2369
        %v2386 = vmul.f32 %v621, %v2370
        %v2387 = vmul.f32 %v625, %v2371
        %v2388 = vmul.f32 %v631, %v2372
        %v2389 = vmul.f32 %v635, %v2373
        %2390 = vrot.lane.b32.xlu0 %v868, 64
        %v2391 = vpop.permute.xlu0 %2390
        %2392 = vrot.lane.b32.xlu0 %v869, 64
        %v2393 = vpop.permute.xlu0 %2392
        %2394 = vrot.lane.b32.xlu0 %v870, 64
        %v2395 = vpop.permute.xlu0 %2394
        %2396 = vrot.lane.b32.xlu0 %v871, 64
        %v2397 = vpop.permute.xlu0 %2396
        %2398 = vrot.lane.b32.xlu0 %v872, 64
        %v2399 = vpop.permute.xlu0 %2398
        %2400 = vrot.lane.b32.xlu0 %v873, 64
        %v2401 = vpop.permute.xlu0 %2400
        %2402 = vrot.lane.b32.xlu0 %v874, 64
        %v2403 = vpop.permute.xlu0 %2402
        %2404 = vrot.lane.b32.xlu0 %v875, 64
        %v2405 = vpop.permute.xlu0 %2404
        %2406 = vrot.lane.b32.xlu0 %v876, 64
        %v2407 = vpop.permute.xlu0 %2406
        %2408 = vrot.lane.b32.xlu0 %v877, 64
        %v2409 = vpop.permute.xlu0 %2408
        %2410 = vrot.lane.b32.xlu0 %v878, 64
        %v2411 = vpop.permute.xlu0 %2410
        %2412 = vrot.lane.b32.xlu0 %v879, 64
        %v2413 = vpop.permute.xlu0 %2412
        %2414 = vrot.lane.b32.xlu0 %v880, 64
        %v2415 = vpop.permute.xlu0 %2414
        %2416 = vrot.lane.b32.xlu0 %v881, 64
        %v2417 = vpop.permute.xlu0 %2416
        %2418 = vrot.lane.b32.xlu0 %v882, 64
        %v2419 = vpop.permute.xlu0 %2418
        %2420 = vrot.lane.b32.xlu0 %v883, 64
        %v2421 = vpop.permute.xlu0 %2420
        %v2438 = vsel %vm754, %v2391, 0.0
        %2439 = vadd.xlane.f32.xlu0 %v2438
        %v2440 = vpop.xlane.xlu0 %2439
        %v2441 = vsel %vm754, %v2393, 0.0
        %2442 = vadd.xlane.f32.xlu0 %v2441
        %v2443 = vpop.xlane.xlu0 %2442
        %v2444 = vsel %vm754, %v2395, 0.0
        %2445 = vadd.xlane.f32.xlu0 %v2444
        %v2446 = vpop.xlane.xlu0 %2445
        %v2447 = vsel %vm754, %v2397, 0.0
        %2448 = vadd.xlane.f32.xlu0 %v2447
        %v2449 = vpop.xlane.xlu0 %2448
        %v2450 = vsel %vm754, %v2399, 0.0
        %2451 = vadd.xlane.f32.xlu0 %v2450
        %v2452 = vpop.xlane.xlu0 %2451
        %v2453 = vsel %vm754, %v2401, 0.0
        %2454 = vadd.xlane.f32.xlu0 %v2453
        %v2455 = vpop.xlane.xlu0 %2454
        %v2456 = vsel %vm754, %v2403, 0.0
        %2457 = vadd.xlane.f32.xlu0 %v2456
        %v2458 = vpop.xlane.xlu0 %2457
        %v2459 = vsel %vm754, %v2405, 0.0
        %2460 = vadd.xlane.f32.xlu0 %v2459
        %v2461 = vpop.xlane.xlu0 %2460
        %v2462 = vsel %vm754, %v2407, 0.0
        %2463 = vadd.xlane.f32.xlu0 %v2462
        %v2464 = vpop.xlane.xlu0 %2463
        %v2465 = vsel %vm754, %v2409, 0.0
        %2466 = vadd.xlane.f32.xlu0 %v2465
        %v2467 = vpop.xlane.xlu0 %2466
        %v2468 = vsel %vm754, %v2411, 0.0
        %2469 = vadd.xlane.f32.xlu0 %v2468
        %v2470 = vpop.xlane.xlu0 %2469
        %v2471 = vsel %vm754, %v2413, 0.0
        %2472 = vadd.xlane.f32.xlu0 %v2471
        %v2473 = vpop.xlane.xlu0 %2472
        %v2474 = vsel %vm754, %v2415, 0.0
        %2475 = vadd.xlane.f32.xlu0 %v2474
        %v2476 = vpop.xlane.xlu0 %2475
        %v2477 = vsel %vm754, %v2417, 0.0
        %2478 = vadd.xlane.f32.xlu0 %v2477
        %v2479 = vpop.xlane.xlu0 %2478
        %v2480 = vsel %vm754, %v2419, 0.0
        %2481 = vadd.xlane.f32.xlu0 %v2480
        %v2482 = vpop.xlane.xlu0 %2481
        %v2483 = vsel %vm754, %v2421, 0.0
        %2484 = vadd.xlane.f32.xlu0 %v2483
        %v2485 = vpop.xlane.xlu0 %2484
        %v2486 = vmax.f32 %v2440, 1e-24
        %v2487 = vmax.f32 %v2443, 1e-24
        %v2488 = vmax.f32 %v2446, 1e-24
        %v2489 = vmax.f32 %v2449, 1e-24
        %v2490 = vmax.f32 %v2452, 1e-24
        %v2491 = vmax.f32 %v2455, 1e-24
        %v2492 = vmax.f32 %v2458, 1e-24
        %v2493 = vmax.f32 %v2461, 1e-24
        %v2494 = vmax.f32 %v2464, 1e-24
        %v2495 = vmax.f32 %v2467, 1e-24
        %v2496 = vmax.f32 %v2470, 1e-24
        %v2497 = vmax.f32 %v2473, 1e-24
        %v2498 = vmax.f32 %v2476, 1e-24
        %v2499 = vmax.f32 %v2479, 1e-24
        %v2500 = vmax.f32 %v2482, 1e-24
        %v2501 = vmax.f32 %v2485, 1e-24
        %v2502 = vrsqrt.pop %v2486
        %v2503 = vrsqrt.pop %v2487
        %v2504 = vrsqrt.pop %v2488
        %v2505 = vrsqrt.pop %v2489
        %v2506 = vrsqrt.pop %v2490
        %v2507 = vrsqrt.pop %v2491
        %v2508 = vrsqrt.pop %v2492
        %v2509 = vrsqrt.pop %v2493
        %v2510 = vrsqrt.pop %v2494
        %v2511 = vrsqrt.pop %v2495
        %v2512 = vrsqrt.pop %v2496
        %v2513 = vrsqrt.pop %v2497
        %v2514 = vrsqrt.pop %v2498
        %v2515 = vrsqrt.pop %v2499
        %v2516 = vrsqrt.pop %v2500
        %v2517 = vrsqrt.pop %v2501
        %v2518 = vmul.f32 %v563, %v2502
        %v2519 = vmul.f32 %v567, %v2503
        %v2520 = vmul.f32 %v573, %v2504
        %v2521 = vmul.f32 %v577, %v2505
        %v2522 = vmul.f32 %v583, %v2506
        %v2523 = vmul.f32 %v587, %v2507
        %v2524 = vmul.f32 %v593, %v2508
        %v2525 = vmul.f32 %v597, %v2509
        %v2526 = vmul.f32 %v603, %v2510
        %v2527 = vmul.f32 %v607, %v2511
        %v2528 = vmul.f32 %v613, %v2512
        %v2529 = vmul.f32 %v617, %v2513
        %v2530 = vmul.f32 %v623, %v2514
        %v2531 = vmul.f32 %v627, %v2515
        %v2532 = vmul.f32 %v633, %v2516
        %v2533 = vmul.f32 %v637, %v2517
        %v2534 = vpack.c.bf16 %v2375, %v2374
        %v2535 = vpack.c.bf16 %v2377, %v2376
        %v2536 = vpack.c.bf16 %v2379, %v2378
        %v2537 = vpack.c.bf16 %v2381, %v2380
        %v2538 = vpack.c.bf16 %v2383, %v2382
        %v2539 = vpack.c.bf16 %v2385, %v2384
        %v2540 = vpack.c.bf16 %v2387, %v2386
        %v2541 = vpack.c.bf16 %v2389, %v2388
        %v2542 = vpack.c.bf16 %v2519, %v2518
        %v2543 = vpack.c.bf16 %v2521, %v2520
        %v2544 = vpack.c.bf16 %v2523, %v2522
        %v2545 = vpack.c.bf16 %v2525, %v2524
        %v2546 = vpack.c.bf16 %v2527, %v2526
        %v2547 = vpack.c.bf16 %v2529, %v2528
        %v2548 = vpack.c.bf16 %v2531, %v2530
        %v2549 = vpack.c.bf16 %v2533, %v2532
        %2558 = vrot.lane.b32.xlu0 %v2534, 64
        %v2559 = vpop.permute.xlu0 %2558
        %2560 = vrot.lane.b32.xlu0 %v2535, 64
        %v2561 = vpop.permute.xlu0 %2560
        %2562 = vrot.lane.b32.xlu0 %v2536, 64
        %v2563 = vpop.permute.xlu0 %2562
        %2564 = vrot.lane.b32.xlu0 %v2537, 64
        %v2565 = vpop.permute.xlu0 %2564
        %2566 = vrot.lane.b32.xlu0 %v2538, 64
        %v2567 = vpop.permute.xlu0 %2566
        %2568 = vrot.lane.b32.xlu0 %v2539, 64
        %v2569 = vpop.permute.xlu0 %2568
        %2570 = vrot.lane.b32.xlu0 %v2540, 64
        %v2571 = vpop.permute.xlu0 %2570
        %2572 = vrot.lane.b32.xlu0 %v2541, 64
        %v2573 = vpop.permute.xlu0 %2572
        %2582 = vrot.lane.b32.xlu0 %v2542, 64
        %v2583 = vpop.permute.xlu0 %2582
        %2584 = vrot.lane.b32.xlu0 %v2543, 64
        %v2585 = vpop.permute.xlu0 %2584
        %2586 = vrot.lane.b32.xlu0 %v2544, 64
        %v2587 = vpop.permute.xlu0 %2586
        %2588 = vrot.lane.b32.xlu0 %v2545, 64
        %v2589 = vpop.permute.xlu0 %2588
        %2590 = vrot.lane.b32.xlu0 %v2546, 64
        %v2591 = vpop.permute.xlu0 %2590
        %2592 = vrot.lane.b32.xlu0 %v2547, 64
        %v2593 = vpop.permute.xlu0 %2592
        %2594 = vrot.lane.b32.xlu0 %v2548, 64
        %v2595 = vpop.permute.xlu0 %2594
        %2596 = vrot.lane.b32.xlu0 %v2549, 64
        %v2597 = vpop.permute.xlu0 %2596
        %v2599 = vsel %vm754, %v2559, 0
        %v2602 = vsel %vm754, %v2561, 0
        %v2605 = vsel %vm754, %v2563, 0
        %v2608 = vsel %vm754, %v2565, 0
        %v2611 = vsel %vm754, %v2567, 0
        %v2614 = vsel %vm754, %v2569, 0
        %v2617 = vsel %vm754, %v2571, 0
        %v2620 = vsel %vm754, %v2573, 0
        %v2623 = vsel %vm754, %v2583, 0
        %v2626 = vsel %vm754, %v2585, 0
        %v2629 = vsel %vm754, %v2587, 0
        %v2632 = vsel %vm754, %v2589, 0
        %v2635 = vsel %vm754, %v2591, 0
        %v2638 = vsel %vm754, %v2593, 0
        %v2641 = vsel %vm754, %v2595, 0
        %v2644 = vsel %vm754, %v2597, 0
        %2646 = vmatprep.subr.bf16.mxu0 0
        %2647 = vmatpush1.bf16.xpose.msra.mxu0 %v2623
        %2648 = vmatprep.subr.bf16.mxu0 0
        %2649 = vmatpush1.bf16.xpose.msra.mxu0 %v2626
        %2650 = vmatprep.subr.bf16.mxu0 0
        %2651 = vmatpush1.bf16.xpose.msra.mxu0 %v2629
        %2652 = vmatprep.subr.bf16.mxu0 0
        %2653 = vmatpush1.bf16.xpose.msra.mxu0 %v2632
        %2654 = vmatprep.subr.bf16.mxu0 0
        %2655 = vmatpush1.bf16.xpose.msra.mxu0 %v2635
        %2656 = vmatprep.subr.bf16.mxu0 0
        %2657 = vmatpush1.bf16.xpose.msra.mxu0 %v2638
        %2658 = vmatprep.subr.bf16.mxu0 0
        %2659 = vmatpush1.bf16.xpose.msra.mxu0 %v2641
        %2660 = vmatprep.subr.bf16.mxu0 0
        %2661 = vmatpush1.bf16.xpose.msra.mxu0 %v2644
        %2662 = vmatprep.subr.bf16.mxu0 0
        %2663 = vmatpush1.bf16.xpose.msra.mxu0 0
        %2664 = vmatprep.subr.bf16.mxu0 0
        %2665 = vmatpush1.bf16.xpose.msra.mxu0 0
        %2666 = vmatprep.subr.bf16.mxu0 0
        %2667 = vmatpush1.bf16.xpose.msra.mxu0 0
        %2668 = vmatprep.subr.bf16.mxu0 0
        %2669 = vmatpush1.bf16.xpose.msra.mxu0 0
        %2670 = vmatprep.subr.bf16.mxu0 0
        %2671 = vmatpush1.bf16.xpose.msra.mxu0 0
        %2672 = vmatprep.subr.bf16.mxu0 0
        %2673 = vmatpush1.bf16.xpose.msra.mxu0 0
        %2674 = vmatprep.subr.bf16.mxu0 0
        %2675 = vmatpush1.bf16.xpose.msra.mxu0 0
        %2676 = vmatprep.subr.bf16.mxu0 0
        %2677 = vmatpush1.bf16.xpose.msra.mxu0 0
        %2678 = vmatprep.mubr.bf16.mxu0 0
        %2679 = vmatmul.mubr.bf16.gmra.mrb[0].mxu0 %v2599
        %v2680 = vpop.f32.mrb[0].mxu0
        %v2681 = vadd.f32 0.0, %v2680
        %v2682 = vpop.f32.mrb[0].mxu0
        %v2683 = vpop.f32.mrb[0].mxu0
        %v2684 = vadd.f32 0.0, %v2683
        %v2685 = vpop.f32.mrb[0].mxu0
        %2686 = vmatprep.mubr.bf16.mxu0 0
        %2687 = vmatmul.mubr.bf16.gmra.mrb[0].mxu0 %v2602
        %v2688 = vpop.f32.mrb[0].mxu0
        %v2689 = vadd.f32 0.0, %v2688
        %v2690 = vpop.f32.mrb[0].mxu0
        %v2691 = vpop.f32.mrb[0].mxu0
        %v2692 = vadd.f32 0.0, %v2691
        %v2693 = vpop.f32.mrb[0].mxu0
        %2694 = vmatprep.mubr.bf16.mxu0 0
        %2695 = vmatmul.mubr.bf16.gmra.mrb[0].mxu0 %v2605
        %v2696 = vpop.f32.mrb[0].mxu0
        %v2697 = vadd.f32 0.0, %v2696
        %v2698 = vpop.f32.mrb[0].mxu0
        %v2699 = vpop.f32.mrb[0].mxu0
        %v2700 = vadd.f32 0.0, %v2699
        %v2701 = vpop.f32.mrb[0].mxu0
        %2702 = vmatprep.mubr.bf16.mxu0 0
        %2703 = vmatmul.mubr.bf16.gmra.mrb[0].mxu0 %v2608
        %v2704 = vpop.f32.mrb[0].mxu0
        %v2705 = vadd.f32 0.0, %v2704
        %v2706 = vpop.f32.mrb[0].mxu0
        %v2707 = vpop.f32.mrb[0].mxu0
        %v2708 = vadd.f32 0.0, %v2707
        %v2709 = vpop.f32.mrb[0].mxu0
        %2710 = vmatprep.mubr.bf16.mxu0 0
        %2711 = vmatmul.mubr.bf16.gmra.mrb[0].mxu0 %v2611
        %v2712 = vpop.f32.mrb[0].mxu0
        %v2713 = vadd.f32 0.0, %v2712
        %v2714 = vpop.f32.mrb[0].mxu0
        %v2715 = vpop.f32.mrb[0].mxu0
        %v2716 = vadd.f32 0.0, %v2715
        %v2717 = vpop.f32.mrb[0].mxu0
        %2718 = vmatprep.mubr.bf16.mxu0 0
        %2719 = vmatmul.mubr.bf16.gmra.mrb[0].mxu0 %v2614
        %v2720 = vpop.f32.mrb[0].mxu0
        %v2721 = vadd.f32 0.0, %v2720
        %v2722 = vpop.f32.mrb[0].mxu0
        %v2723 = vpop.f32.mrb[0].mxu0
        %v2724 = vadd.f32 0.0, %v2723
        %v2725 = vpop.f32.mrb[0].mxu0
        %2726 = vmatprep.mubr.bf16.mxu0 0
        %2727 = vmatmul.mubr.bf16.gmra.mrb[0].mxu0 %v2617
        %v2728 = vpop.f32.mrb[0].mxu0
        %v2729 = vadd.f32 0.0, %v2728
        %v2730 = vpop.f32.mrb[0].mxu0
        %v2731 = vpop.f32.mrb[0].mxu0
        %v2732 = vadd.f32 0.0, %v2731
        %v2733 = vpop.f32.mrb[0].mxu0
        %2734 = vmatprep.mubr.bf16.mxu0 0
        %2735 = vmatmul.mubr.bf16.gmra.mrb[0].mxu0 %v2620
        %v2736 = vpop.f32.mrb[0].mxu0
        %v2737 = vadd.f32 0.0, %v2736
        %v2738 = vpop.f32.mrb[0].mxu0
        %v2739 = vpop.f32.mrb[0].mxu0
        %v2740 = vadd.f32 0.0, %v2739
        %v2741 = vpop.f32.mrb[0].mxu0
        %2742 = vdwg.mxu0
        %2743 = vmax.xlane.f32.xlu0 %v2681
        %v2744 = vpop.xlane.xlu0 %2743
        %2745 = vmax.xlane.f32.xlu0 %v2684
        %v2746 = vpop.xlane.xlu0 %2745
        %2747 = vmax.xlane.f32.xlu0 %v2689
        %v2748 = vpop.xlane.xlu0 %2747
        %2749 = vmax.xlane.f32.xlu0 %v2692
        %v2750 = vpop.xlane.xlu0 %2749
        %2751 = vmax.xlane.f32.xlu0 %v2697
        %v2752 = vpop.xlane.xlu0 %2751
        %2753 = vmax.xlane.f32.xlu0 %v2700
        %v2754 = vpop.xlane.xlu0 %2753
        %2755 = vmax.xlane.f32.xlu0 %v2705
        %v2756 = vpop.xlane.xlu0 %2755
        %2757 = vmax.xlane.f32.xlu0 %v2708
        %v2758 = vpop.xlane.xlu0 %2757
        %2759 = vmax.xlane.f32.xlu0 %v2713
        %v2760 = vpop.xlane.xlu0 %2759
        %2761 = vmax.xlane.f32.xlu0 %v2716
        %v2762 = vpop.xlane.xlu0 %2761
        %2763 = vmax.xlane.f32.xlu0 %v2721
        %v2764 = vpop.xlane.xlu0 %2763
        %2765 = vmax.xlane.f32.xlu0 %v2724
        %v2766 = vpop.xlane.xlu0 %2765
        %2767 = vmax.xlane.f32.xlu0 %v2729
        %v2768 = vpop.xlane.xlu0 %2767
        %2769 = vmax.xlane.f32.xlu0 %v2732
        %v2770 = vpop.xlane.xlu0 %2769
        %2771 = vmax.xlane.f32.xlu0 %v2737
        %v2772 = vpop.xlane.xlu0 %2771
        %2773 = vmax.xlane.f32.xlu0 %v2740
        %v2774 = vpop.xlane.xlu0 %2773
        %v2775 = vsub.f32 %v2681, %v2744
        %v2776 = vsub.f32 %v2684, %v2746
        %v2777 = vsub.f32 %v2689, %v2748
        %v2778 = vsub.f32 %v2692, %v2750
        %v2779 = vsub.f32 %v2697, %v2752
        %v2780 = vsub.f32 %v2700, %v2754
        %v2781 = vsub.f32 %v2705, %v2756
        %v2782 = vsub.f32 %v2708, %v2758
        %v2783 = vsub.f32 %v2713, %v2760
        %v2784 = vsub.f32 %v2716, %v2762
        %v2785 = vsub.f32 %v2721, %v2764
        %v2786 = vsub.f32 %v2724, %v2766
        %v2787 = vsub.f32 %v2729, %v2768
        %v2788 = vsub.f32 %v2732, %v2770
        %v2789 = vsub.f32 %v2737, %v2772
        %v2790 = vsub.f32 %v2740, %v2774
        %v2791 = vmul.f32 %v2775, 1.442695
        %v2792 = vpow.pop %v2791
        %v2793 = vmul.f32 %v2776, 1.442695
        %v2794 = vpow.pop %v2793
        %v2795 = vmul.f32 %v2777, 1.442695
        %v2796 = vpow.pop %v2795
        %v2797 = vmul.f32 %v2778, 1.442695
        %v2798 = vpow.pop %v2797
        %v2799 = vmul.f32 %v2779, 1.442695
        %v2800 = vpow.pop %v2799
        %v2801 = vmul.f32 %v2780, 1.442695
        %v2802 = vpow.pop %v2801
        %v2803 = vmul.f32 %v2781, 1.442695
        %v2804 = vpow.pop %v2803
        %v2805 = vmul.f32 %v2782, 1.442695
        %v2806 = vpow.pop %v2805
        %v2807 = vmul.f32 %v2783, 1.442695
        %v2808 = vpow.pop %v2807
        %v2809 = vmul.f32 %v2784, 1.442695
        %v2810 = vpow.pop %v2809
        %v2811 = vmul.f32 %v2785, 1.442695
        %v2812 = vpow.pop %v2811
        %v2813 = vmul.f32 %v2786, 1.442695
        %v2814 = vpow.pop %v2813
        %v2815 = vmul.f32 %v2787, 1.442695
        %v2816 = vpow.pop %v2815
        %v2817 = vmul.f32 %v2788, 1.442695
        %v2818 = vpow.pop %v2817
        %v2819 = vmul.f32 %v2789, 1.442695
        %v2820 = vpow.pop %v2819
        %v2821 = vmul.f32 %v2790, 1.442695
        %v2822 = vpow.pop %v2821
        %2823 = vadd.xlane.f32.xlu0 %v2792
        %v2824 = vpop.xlane.xlu0 %2823
        %2825 = vadd.xlane.f32.xlu0 %v2794
        %v2826 = vpop.xlane.xlu0 %2825
        %2827 = vadd.xlane.f32.xlu0 %v2796
        %v2828 = vpop.xlane.xlu0 %2827
        %2829 = vadd.xlane.f32.xlu0 %v2798
        %v2830 = vpop.xlane.xlu0 %2829
        %2831 = vadd.xlane.f32.xlu0 %v2800
        %v2832 = vpop.xlane.xlu0 %2831
        %2833 = vadd.xlane.f32.xlu0 %v2802
        %v2834 = vpop.xlane.xlu0 %2833
        %2835 = vadd.xlane.f32.xlu0 %v2804
        %v2836 = vpop.xlane.xlu0 %2835
        %2837 = vadd.xlane.f32.xlu0 %v2806
        %v2838 = vpop.xlane.xlu0 %2837
        %2839 = vadd.xlane.f32.xlu0 %v2808
        %v2840 = vpop.xlane.xlu0 %2839
        %2841 = vadd.xlane.f32.xlu0 %v2810
        %v2842 = vpop.xlane.xlu0 %2841
        %2843 = vadd.xlane.f32.xlu0 %v2812
        %v2844 = vpop.xlane.xlu0 %2843
        %2845 = vadd.xlane.f32.xlu0 %v2814
        %v2846 = vpop.xlane.xlu0 %2845
        %2847 = vadd.xlane.f32.xlu0 %v2816
        %v2848 = vpop.xlane.xlu0 %2847
        %2849 = vadd.xlane.f32.xlu0 %v2818
        %v2850 = vpop.xlane.xlu0 %2849
        %2851 = vadd.xlane.f32.xlu0 %v2820
        %v2852 = vpop.xlane.xlu0 %2851
        %2853 = vadd.xlane.f32.xlu0 %v2822
        %v2854 = vpop.xlane.xlu0 %2853
        %v2855 = vpack.c.bf16 %v2794, %v2792
        %v2856 = vpack.c.bf16 %v2798, %v2796
        %v2857 = vpack.c.bf16 %v2802, %v2800
        %v2858 = vpack.c.bf16 %v2806, %v2804
        %v2859 = vpack.c.bf16 %v2810, %v2808
        %v2860 = vpack.c.bf16 %v2814, %v2812
        %v2861 = vpack.c.bf16 %v2818, %v2816
        %v2862 = vpack.c.bf16 %v2822, %v2820
        %2863 = vrot.lane.b32.xlu0 %v1261, 64
        %v2864 = vpop.permute.xlu0 %2863
        %2865 = vrot.lane.b32.xlu0 %v1262, 64
        %v2866 = vpop.permute.xlu0 %2865
        %2867 = vrot.lane.b32.xlu0 %v1263, 64
        %v2868 = vpop.permute.xlu0 %2867
        %2869 = vrot.lane.b32.xlu0 %v1264, 64
        %v2870 = vpop.permute.xlu0 %2869
        %2871 = vrot.lane.b32.xlu0 %v1265, 64
        %v2872 = vpop.permute.xlu0 %2871
        %2873 = vrot.lane.b32.xlu0 %v1266, 64
        %v2874 = vpop.permute.xlu0 %2873
        %2875 = vrot.lane.b32.xlu0 %v1267, 64
        %v2876 = vpop.permute.xlu0 %2875
        %2877 = vrot.lane.b32.xlu0 %v1268, 64
        %v2878 = vpop.permute.xlu0 %2877
        %2887 = vmatprep.subr.bf16.mxu0 0
        %2888 = vmatpush1.bf16.msra.mxu0 %v2864
        %2889 = vmatprep.subr.bf16.mxu0 0
        %2890 = vmatpush1.bf16.msra.mxu0 %v2866
        %2891 = vmatprep.subr.bf16.mxu0 0
        %2892 = vmatpush1.bf16.msra.mxu0 %v2868
        %2893 = vmatprep.subr.bf16.mxu0 0
        %2894 = vmatpush1.bf16.msra.mxu0 %v2870
        %2895 = vmatprep.subr.bf16.mxu0 0
        %2896 = vmatpush1.bf16.msra.mxu0 %v2872
        %2897 = vmatprep.subr.bf16.mxu0 0
        %2898 = vmatpush1.bf16.msra.mxu0 %v2874
        %2899 = vmatprep.subr.bf16.mxu0 0
        %2900 = vmatpush1.bf16.msra.mxu0 %v2876
        %2901 = vmatprep.subr.bf16.mxu0 0
        %2902 = vmatpush1.bf16.msra.mxu0 %v2878
        %2903 = vmatprep.subr.bf16.mxu0 0
        %2904 = vmatpush1.bf16.msra.mxu0 0
        %2905 = vmatprep.subr.bf16.mxu0 0
        %2906 = vmatpush1.bf16.msra.mxu0 0
        %2907 = vmatprep.subr.bf16.mxu0 0
        %2908 = vmatpush1.bf16.msra.mxu0 0
        %2909 = vmatprep.subr.bf16.mxu0 0
        %2910 = vmatpush1.bf16.msra.mxu0 0
        %2911 = vmatprep.subr.bf16.mxu0 0
        %2912 = vmatpush1.bf16.msra.mxu0 0
        %2913 = vmatprep.subr.bf16.mxu0 0
        %2914 = vmatpush1.bf16.msra.mxu0 0
        %2915 = vmatprep.subr.bf16.mxu0 0
        %2916 = vmatpush1.bf16.msra.mxu0 0
        %2917 = vmatprep.subr.bf16.mxu0 0
        %2918 = vmatpush1.bf16.msra.mxu0 0
        %2919 = vmatprep.mubr.bf16.mxu0 0
        %2920 = vmatmul.mubr.bf16.gmra.mrb[0].mxu0 %v2855
        %v2921 = vpop.f32.mrb[0].mxu0
        %v2922 = vadd.f32 0.0, %v2921
        %v2923 = vpop.f32.mrb[0].mxu0
        %v2924 = vpop.f32.mrb[0].mxu0
        %v2925 = vadd.f32 0.0, %v2924
        %v2926 = vpop.f32.mrb[0].mxu0
        %2927 = vmatprep.mubr.bf16.mxu0 0
        %2928 = vmatmul.mubr.bf16.gmra.mrb[0].mxu0 %v2856
        %v2929 = vpop.f32.mrb[0].mxu0
        %v2930 = vadd.f32 0.0, %v2929
        %v2931 = vpop.f32.mrb[0].mxu0
        %v2932 = vpop.f32.mrb[0].mxu0
        %v2933 = vadd.f32 0.0, %v2932
        %v2934 = vpop.f32.mrb[0].mxu0
        %2935 = vmatprep.mubr.bf16.mxu0 0
        %2936 = vmatmul.mubr.bf16.gmra.mrb[0].mxu0 %v2857
        %v2937 = vpop.f32.mrb[0].mxu0
        %v2938 = vadd.f32 0.0, %v2937
        %v2939 = vpop.f32.mrb[0].mxu0
        %v2940 = vpop.f32.mrb[0].mxu0
        %v2941 = vadd.f32 0.0, %v2940
        %v2942 = vpop.f32.mrb[0].mxu0
        %2943 = vmatprep.mubr.bf16.mxu0 0
        %2944 = vmatmul.mubr.bf16.gmra.mrb[0].mxu0 %v2858
        %v2945 = vpop.f32.mrb[0].mxu0
        %v2946 = vadd.f32 0.0, %v2945
        %v2947 = vpop.f32.mrb[0].mxu0
        %v2948 = vpop.f32.mrb[0].mxu0
        %v2949 = vadd.f32 0.0, %v2948
        %v2950 = vpop.f32.mrb[0].mxu0
        %2951 = vmatprep.mubr.bf16.mxu0 0
        %2952 = vmatmul.mubr.bf16.gmra.mrb[0].mxu0 %v2859
        %v2953 = vpop.f32.mrb[0].mxu0
        %v2954 = vadd.f32 0.0, %v2953
        %v2955 = vpop.f32.mrb[0].mxu0
        %v2956 = vpop.f32.mrb[0].mxu0
        %v2957 = vadd.f32 0.0, %v2956
        %v2958 = vpop.f32.mrb[0].mxu0
        %2959 = vmatprep.mubr.bf16.mxu0 0
        %2960 = vmatmul.mubr.bf16.gmra.mrb[0].mxu0 %v2860
        %v2961 = vpop.f32.mrb[0].mxu0
        %v2962 = vadd.f32 0.0, %v2961
        %v2963 = vpop.f32.mrb[0].mxu0
        %v2964 = vpop.f32.mrb[0].mxu0
        %v2965 = vadd.f32 0.0, %v2964
        %v2966 = vpop.f32.mrb[0].mxu0
        %2967 = vmatprep.mubr.bf16.mxu0 0
        %2968 = vmatmul.mubr.bf16.gmra.mrb[0].mxu0 %v2861
        %v2969 = vpop.f32.mrb[0].mxu0
        %v2970 = vadd.f32 0.0, %v2969
        %v2971 = vpop.f32.mrb[0].mxu0
        %v2972 = vpop.f32.mrb[0].mxu0
        %v2973 = vadd.f32 0.0, %v2972
        %v2974 = vpop.f32.mrb[0].mxu0
        %2975 = vmatprep.mubr.bf16.mxu0 0
        %2976 = vmatmul.mubr.bf16.gmra.mrb[0].mxu0 %v2862
        %v2977 = vpop.f32.mrb[0].mxu0
        %v2978 = vadd.f32 0.0, %v2977
        %v2979 = vpop.f32.mrb[0].mxu0
        %v2980 = vpop.f32.mrb[0].mxu0
        %v2981 = vadd.f32 0.0, %v2980
        %v2982 = vpop.f32.mrb[0].mxu0
        %2983 = vdwg.mxu0
        %v2984 = vrcp.pop %v2824
        %v2985 = vrcp.pop %v2826
        %v2986 = vrcp.pop %v2828
        %v2987 = vrcp.pop %v2830
        %v2988 = vrcp.pop %v2832
        %v2989 = vrcp.pop %v2834
        %v2990 = vrcp.pop %v2836
        %v2991 = vrcp.pop %v2838
        %v2992 = vrcp.pop %v2840
        %v2993 = vrcp.pop %v2842
        %v2994 = vrcp.pop %v2844
        %v2995 = vrcp.pop %v2846
        %v2996 = vrcp.pop %v2848
        %v2997 = vrcp.pop %v2850
        %v2998 = vrcp.pop %v2852
        %v2999 = vrcp.pop %v2854
        %v3000 = vmul.f32 %v2922, %v2984
        %v3001 = vmul.f32 %v2925, %v2985
        %v3002 = vmul.f32 %v2930, %v2986
        %v3003 = vmul.f32 %v2933, %v2987
        %v3004 = vmul.f32 %v2938, %v2988
        %v3005 = vmul.f32 %v2941, %v2989
        %v3006 = vmul.f32 %v2946, %v2990
        %v3007 = vmul.f32 %v2949, %v2991
        %v3008 = vmul.f32 %v2954, %v2992
        %v3009 = vmul.f32 %v2957, %v2993
        %v3010 = vmul.f32 %v2962, %v2994
        %v3011 = vmul.f32 %v2965, %v2995
        %v3012 = vmul.f32 %v2970, %v2996
        %v3013 = vmul.f32 %v2973, %v2997
        %v3014 = vmul.f32 %v2978, %v2998
        %v3015 = vmul.f32 %v2981, %v2999
        %s3016 = sadd.s32 %s736, 3
        %s3017 = sld [smem:[#allocation10 + %s3016]]
        %3018 = vrot.lane.b32.xlu0 %v738, 32
        %v3019 = vpop.permute.xlu0 %3018
        %3020 = vrot.lane.b32.xlu0 %v739, 32
        %v3021 = vpop.permute.xlu0 %3020
        %3022 = vrot.lane.b32.xlu0 %v740, 32
        %v3023 = vpop.permute.xlu0 %3022
        %3024 = vrot.lane.b32.xlu0 %v741, 32
        %v3025 = vpop.permute.xlu0 %3024
        %3026 = vrot.lane.b32.xlu0 %v742, 32
        %v3027 = vpop.permute.xlu0 %3026
        %3028 = vrot.lane.b32.xlu0 %v743, 32
        %v3029 = vpop.permute.xlu0 %3028
        %3030 = vrot.lane.b32.xlu0 %v744, 32
        %v3031 = vpop.permute.xlu0 %3030
        %3032 = vrot.lane.b32.xlu0 %v745, 32
        %v3033 = vpop.permute.xlu0 %3032
        %3034 = vrot.lane.b32.xlu0 %v746, 32
        %v3035 = vpop.permute.xlu0 %3034
        %3036 = vrot.lane.b32.xlu0 %v747, 32
        %v3037 = vpop.permute.xlu0 %3036
        %3038 = vrot.lane.b32.xlu0 %v748, 32
        %v3039 = vpop.permute.xlu0 %3038
        %3040 = vrot.lane.b32.xlu0 %v749, 32
        %v3041 = vpop.permute.xlu0 %3040
        %3042 = vrot.lane.b32.xlu0 %v750, 32
        %v3043 = vpop.permute.xlu0 %3042
        %3044 = vrot.lane.b32.xlu0 %v751, 32
        %v3045 = vpop.permute.xlu0 %3044
        %3046 = vrot.lane.b32.xlu0 %v752, 32
        %v3047 = vpop.permute.xlu0 %3046
        %3048 = vrot.lane.b32.xlu0 %v753, 32
        %v3049 = vpop.permute.xlu0 %3048
        %v3066 = vsel %vm754, %v3019, 0.0
        %3067 = vadd.xlane.f32.xlu0 %v3066
        %v3068 = vpop.xlane.xlu0 %3067
        %v3069 = vsel %vm754, %v3021, 0.0
        %3070 = vadd.xlane.f32.xlu0 %v3069
        %v3071 = vpop.xlane.xlu0 %3070
        %v3072 = vsel %vm754, %v3023, 0.0
        %3073 = vadd.xlane.f32.xlu0 %v3072
        %v3074 = vpop.xlane.xlu0 %3073
        %v3075 = vsel %vm754, %v3025, 0.0
        %3076 = vadd.xlane.f32.xlu0 %v3075
        %v3077 = vpop.xlane.xlu0 %3076
        %v3078 = vsel %vm754, %v3027, 0.0
        %3079 = vadd.xlane.f32.xlu0 %v3078
        %v3080 = vpop.xlane.xlu0 %3079
        %v3081 = vsel %vm754, %v3029, 0.0
        %3082 = vadd.xlane.f32.xlu0 %v3081
        %v3083 = vpop.xlane.xlu0 %3082
        %v3084 = vsel %vm754, %v3031, 0.0
        %3085 = vadd.xlane.f32.xlu0 %v3084
        %v3086 = vpop.xlane.xlu0 %3085
        %v3087 = vsel %vm754, %v3033, 0.0
        %3088 = vadd.xlane.f32.xlu0 %v3087
        %v3089 = vpop.xlane.xlu0 %3088
        %v3090 = vsel %vm754, %v3035, 0.0
        %3091 = vadd.xlane.f32.xlu0 %v3090
        %v3092 = vpop.xlane.xlu0 %3091
        %v3093 = vsel %vm754, %v3037, 0.0
        %3094 = vadd.xlane.f32.xlu0 %v3093
        %v3095 = vpop.xlane.xlu0 %3094
        %v3096 = vsel %vm754, %v3039, 0.0
        %3097 = vadd.xlane.f32.xlu0 %v3096
        %v3098 = vpop.xlane.xlu0 %3097
        %v3099 = vsel %vm754, %v3041, 0.0
        %3100 = vadd.xlane.f32.xlu0 %v3099
        %v3101 = vpop.xlane.xlu0 %3100
        %v3102 = vsel %vm754, %v3043, 0.0
        %3103 = vadd.xlane.f32.xlu0 %v3102
        %v3104 = vpop.xlane.xlu0 %3103
        %v3105 = vsel %vm754, %v3045, 0.0
        %3106 = vadd.xlane.f32.xlu0 %v3105
        %v3107 = vpop.xlane.xlu0 %3106
        %v3108 = vsel %vm754, %v3047, 0.0
        %3109 = vadd.xlane.f32.xlu0 %v3108
        %v3110 = vpop.xlane.xlu0 %3109
        %v3111 = vsel %vm754, %v3049, 0.0
        %3112 = vadd.xlane.f32.xlu0 %v3111
        %v3113 = vpop.xlane.xlu0 %3112
        %v3114 = vmax.f32 %v3068, 1e-24
        %v3115 = vmax.f32 %v3071, 1e-24
        %v3116 = vmax.f32 %v3074, 1e-24
        %v3117 = vmax.f32 %v3077, 1e-24
        %v3118 = vmax.f32 %v3080, 1e-24
        %v3119 = vmax.f32 %v3083, 1e-24
        %v3120 = vmax.f32 %v3086, 1e-24
        %v3121 = vmax.f32 %v3089, 1e-24
        %v3122 = vmax.f32 %v3092, 1e-24
        %v3123 = vmax.f32 %v3095, 1e-24
        %v3124 = vmax.f32 %v3098, 1e-24
        %v3125 = vmax.f32 %v3101, 1e-24
        %v3126 = vmax.f32 %v3104, 1e-24
        %v3127 = vmax.f32 %v3107, 1e-24
        %v3128 = vmax.f32 %v3110, 1e-24
        %v3129 = vmax.f32 %v3113, 1e-24
        %v3130 = vrsqrt.pop %v3114
        %v3131 = vrsqrt.pop %v3115
        %v3132 = vrsqrt.pop %v3116
        %v3133 = vrsqrt.pop %v3117
        %v3134 = vrsqrt.pop %v3118
        %v3135 = vrsqrt.pop %v3119
        %v3136 = vrsqrt.pop %v3120
        %v3137 = vrsqrt.pop %v3121
        %v3138 = vrsqrt.pop %v3122
        %v3139 = vrsqrt.pop %v3123
        %v3140 = vrsqrt.pop %v3124
        %v3141 = vrsqrt.pop %v3125
        %v3142 = vrsqrt.pop %v3126
        %v3143 = vrsqrt.pop %v3127
        %v3144 = vrsqrt.pop %v3128
        %v3145 = vrsqrt.pop %v3129
        %v3146 = vstv %s3017
        %v3147 = vmul.f32 %v3146, %v3130
        %v3148 = vmul.f32 %v3146, %v3131
        %v3149 = vmul.f32 %v3146, %v3132
        %v3150 = vmul.f32 %v3146, %v3133
        %v3151 = vmul.f32 %v3146, %v3134
        %v3152 = vmul.f32 %v3146, %v3135
        %v3153 = vmul.f32 %v3146, %v3136
        %v3154 = vmul.f32 %v3146, %v3137
        %v3155 = vmul.f32 %v3146, %v3138
        %v3156 = vmul.f32 %v3146, %v3139
        %v3157 = vmul.f32 %v3146, %v3140
        %v3158 = vmul.f32 %v3146, %v3141
        %v3159 = vmul.f32 %v3146, %v3142
        %v3160 = vmul.f32 %v3146, %v3143
        %v3161 = vmul.f32 %v3146, %v3144
        %v3162 = vmul.f32 %v3146, %v3145
        %v3163 = vmul.f32 %v561, %v3147
        %v3164 = vmul.f32 %v565, %v3148
        %v3165 = vmul.f32 %v571, %v3149
        %v3166 = vmul.f32 %v575, %v3150
        %v3167 = vmul.f32 %v581, %v3151
        %v3168 = vmul.f32 %v585, %v3152
        %v3169 = vmul.f32 %v591, %v3153
        %v3170 = vmul.f32 %v595, %v3154
        %v3171 = vmul.f32 %v601, %v3155
        %v3172 = vmul.f32 %v605, %v3156
        %v3173 = vmul.f32 %v611, %v3157
        %v3174 = vmul.f32 %v615, %v3158
        %v3175 = vmul.f32 %v621, %v3159
        %v3176 = vmul.f32 %v625, %v3160
        %v3177 = vmul.f32 %v631, %v3161
        %v3178 = vmul.f32 %v635, %v3162
        %3179 = vrot.lane.b32.xlu0 %v868, 32
        %v3180 = vpop.permute.xlu0 %3179
        %3181 = vrot.lane.b32.xlu0 %v869, 32
        %v3182 = vpop.permute.xlu0 %3181
        %3183 = vrot.lane.b32.xlu0 %v870, 32
        %v3184 = vpop.permute.xlu0 %3183
        %3185 = vrot.lane.b32.xlu0 %v871, 32
        %v3186 = vpop.permute.xlu0 %3185
        %3187 = vrot.lane.b32.xlu0 %v872, 32
        %v3188 = vpop.permute.xlu0 %3187
        %3189 = vrot.lane.b32.xlu0 %v873, 32
        %v3190 = vpop.permute.xlu0 %3189
        %3191 = vrot.lane.b32.xlu0 %v874, 32
        %v3192 = vpop.permute.xlu0 %3191
        %3193 = vrot.lane.b32.xlu0 %v875, 32
        %v3194 = vpop.permute.xlu0 %3193
        %3195 = vrot.lane.b32.xlu0 %v876, 32
        %v3196 = vpop.permute.xlu0 %3195
        %3197 = vrot.lane.b32.xlu0 %v877, 32
        %v3198 = vpop.permute.xlu0 %3197
        %3199 = vrot.lane.b32.xlu0 %v878, 32
        %v3200 = vpop.permute.xlu0 %3199
        %3201 = vrot.lane.b32.xlu0 %v879, 32
        %v3202 = vpop.permute.xlu0 %3201
        %3203 = vrot.lane.b32.xlu0 %v880, 32
        %v3204 = vpop.permute.xlu0 %3203
        %3205 = vrot.lane.b32.xlu0 %v881, 32
        %v3206 = vpop.permute.xlu0 %3205
        %3207 = vrot.lane.b32.xlu0 %v882, 32
        %v3208 = vpop.permute.xlu0 %3207
        %3209 = vrot.lane.b32.xlu0 %v883, 32
        %v3210 = vpop.permute.xlu0 %3209
        %v3227 = vsel %vm754, %v3180, 0.0
        %3228 = vadd.xlane.f32.xlu0 %v3227
        %v3229 = vpop.xlane.xlu0 %3228
        %v3230 = vsel %vm754, %v3182, 0.0
        %3231 = vadd.xlane.f32.xlu0 %v3230
        %v3232 = vpop.xlane.xlu0 %3231
        %v3233 = vsel %vm754, %v3184, 0.0
        %3234 = vadd.xlane.f32.xlu0 %v3233
        %v3235 = vpop.xlane.xlu0 %3234
        %v3236 = vsel %vm754, %v3186, 0.0
        %3237 = vadd.xlane.f32.xlu0 %v3236
        %v3238 = vpop.xlane.xlu0 %3237
        %v3239 = vsel %vm754, %v3188, 0.0
        %3240 = vadd.xlane.f32.xlu0 %v3239
        %v3241 = vpop.xlane.xlu0 %3240
        %v3242 = vsel %vm754, %v3190, 0.0
        %3243 = vadd.xlane.f32.xlu0 %v3242
        %v3244 = vpop.xlane.xlu0 %3243
        %v3245 = vsel %vm754, %v3192, 0.0
        %3246 = vadd.xlane.f32.xlu0 %v3245
        %v3247 = vpop.xlane.xlu0 %3246
        %v3248 = vsel %vm754, %v3194, 0.0
        %3249 = vadd.xlane.f32.xlu0 %v3248
        %v3250 = vpop.xlane.xlu0 %3249
        %v3251 = vsel %vm754, %v3196, 0.0
        %3252 = vadd.xlane.f32.xlu0 %v3251
        %v3253 = vpop.xlane.xlu0 %3252
        %v3254 = vsel %vm754, %v3198, 0.0
        %3255 = vadd.xlane.f32.xlu0 %v3254
        %v3256 = vpop.xlane.xlu0 %3255
        %v3257 = vsel %vm754, %v3200, 0.0
        %3258 = vadd.xlane.f32.xlu0 %v3257
        %v3259 = vpop.xlane.xlu0 %3258
        %v3260 = vsel %vm754, %v3202, 0.0
        %3261 = vadd.xlane.f32.xlu0 %v3260
        %v3262 = vpop.xlane.xlu0 %3261
        %v3263 = vsel %vm754, %v3204, 0.0
        %3264 = vadd.xlane.f32.xlu0 %v3263
        %v3265 = vpop.xlane.xlu0 %3264
        %v3266 = vsel %vm754, %v3206, 0.0
        %3267 = vadd.xlane.f32.xlu0 %v3266
        %v3268 = vpop.xlane.xlu0 %3267
        %v3269 = vsel %vm754, %v3208, 0.0
        %3270 = vadd.xlane.f32.xlu0 %v3269
        %v3271 = vpop.xlane.xlu0 %3270
        %v3272 = vsel %vm754, %v3210, 0.0
        %3273 = vadd.xlane.f32.xlu0 %v3272
        %v3274 = vpop.xlane.xlu0 %3273
        %v3275 = vmax.f32 %v3229, 1e-24
        %v3276 = vmax.f32 %v3232, 1e-24
        %v3277 = vmax.f32 %v3235, 1e-24
        %v3278 = vmax.f32 %v3238, 1e-24
        %v3279 = vmax.f32 %v3241, 1e-24
        %v3280 = vmax.f32 %v3244, 1e-24
        %v3281 = vmax.f32 %v3247, 1e-24
        %v3282 = vmax.f32 %v3250, 1e-24
        %v3283 = vmax.f32 %v3253, 1e-24
        %v3284 = vmax.f32 %v3256, 1e-24
        %v3285 = vmax.f32 %v3259, 1e-24
        %v3286 = vmax.f32 %v3262, 1e-24
        %v3287 = vmax.f32 %v3265, 1e-24
        %v3288 = vmax.f32 %v3268, 1e-24
        %v3289 = vmax.f32 %v3271, 1e-24
        %v3290 = vmax.f32 %v3274, 1e-24
        %v3291 = vrsqrt.pop %v3275
        %v3292 = vrsqrt.pop %v3276
        %v3293 = vrsqrt.pop %v3277
        %v3294 = vrsqrt.pop %v3278
        %v3295 = vrsqrt.pop %v3279
        %v3296 = vrsqrt.pop %v3280
        %v3297 = vrsqrt.pop %v3281
        %v3298 = vrsqrt.pop %v3282
        %v3299 = vrsqrt.pop %v3283
        %v3300 = vrsqrt.pop %v3284
        %v3301 = vrsqrt.pop %v3285
        %v3302 = vrsqrt.pop %v3286
        %v3303 = vrsqrt.pop %v3287
        %v3304 = vrsqrt.pop %v3288
        %v3305 = vrsqrt.pop %v3289
        %v3306 = vrsqrt.pop %v3290
        %v3307 = vmul.f32 %v563, %v3291
        %v3308 = vmul.f32 %v567, %v3292
        %v3309 = vmul.f32 %v573, %v3293
        %v3310 = vmul.f32 %v577, %v3294
        %v3311 = vmul.f32 %v583, %v3295
        %v3312 = vmul.f32 %v587, %v3296
        %v3313 = vmul.f32 %v593, %v3297
        %v3314 = vmul.f32 %v597, %v3298
        %v3315 = vmul.f32 %v603, %v3299
        %v3316 = vmul.f32 %v607, %v3300
        %v3317 = vmul.f32 %v613, %v3301
        %v3318 = vmul.f32 %v617, %v3302
        %v3319 = vmul.f32 %v623, %v3303
        %v3320 = vmul.f32 %v627, %v3304
        %v3321 = vmul.f32 %v633, %v3305
        %v3322 = vmul.f32 %v637, %v3306
        %v3323 = vpack.c.bf16 %v3164, %v3163
        %v3324 = vpack.c.bf16 %v3166, %v3165
        %v3325 = vpack.c.bf16 %v3168, %v3167
        %v3326 = vpack.c.bf16 %v3170, %v3169
        %v3327 = vpack.c.bf16 %v3172, %v3171
        %v3328 = vpack.c.bf16 %v3174, %v3173
        %v3329 = vpack.c.bf16 %v3176, %v3175
        %v3330 = vpack.c.bf16 %v3178, %v3177
        %v3331 = vpack.c.bf16 %v3308, %v3307
        %v3332 = vpack.c.bf16 %v3310, %v3309
        %v3333 = vpack.c.bf16 %v3312, %v3311
        %v3334 = vpack.c.bf16 %v3314, %v3313
        %v3335 = vpack.c.bf16 %v3316, %v3315
        %v3336 = vpack.c.bf16 %v3318, %v3317
        %v3337 = vpack.c.bf16 %v3320, %v3319
        %v3338 = vpack.c.bf16 %v3322, %v3321
        %3347 = vrot.lane.b32.xlu0 %v3323, 32
        %v3348 = vpop.permute.xlu0 %3347
        %3349 = vrot.lane.b32.xlu0 %v3324, 32
        %v3350 = vpop.permute.xlu0 %3349
        %3351 = vrot.lane.b32.xlu0 %v3325, 32
        %v3352 = vpop.permute.xlu0 %3351
        %3353 = vrot.lane.b32.xlu0 %v3326, 32
        %v3354 = vpop.permute.xlu0 %3353
        %3355 = vrot.lane.b32.xlu0 %v3327, 32
        %v3356 = vpop.permute.xlu0 %3355
        %3357 = vrot.lane.b32.xlu0 %v3328, 32
        %v3358 = vpop.permute.xlu0 %3357
        %3359 = vrot.lane.b32.xlu0 %v3329, 32
        %v3360 = vpop.permute.xlu0 %3359
        %3361 = vrot.lane.b32.xlu0 %v3330, 32
        %v3362 = vpop.permute.xlu0 %3361
        %3371 = vrot.lane.b32.xlu0 %v3331, 32
        %v3372 = vpop.permute.xlu0 %3371
        %3373 = vrot.lane.b32.xlu0 %v3332, 32
        %v3374 = vpop.permute.xlu0 %3373
        %3375 = vrot.lane.b32.xlu0 %v3333, 32
        %v3376 = vpop.permute.xlu0 %3375
        %3377 = vrot.lane.b32.xlu0 %v3334, 32
        %v3378 = vpop.permute.xlu0 %3377
        %3379 = vrot.lane.b32.xlu0 %v3335, 32
        %v3380 = vpop.permute.xlu0 %3379
        %3381 = vrot.lane.b32.xlu0 %v3336, 32
        %v3382 = vpop.permute.xlu0 %3381
        %3383 = vrot.lane.b32.xlu0 %v3337, 32
        %v3384 = vpop.permute.xlu0 %3383
        %3385 = vrot.lane.b32.xlu0 %v3338, 32
        %v3386 = vpop.permute.xlu0 %3385
        %v3388 = vsel %vm754, %v3348, 0
        %v3391 = vsel %vm754, %v3350, 0
        %v3394 = vsel %vm754, %v3352, 0
        %v3397 = vsel %vm754, %v3354, 0
        %v3400 = vsel %vm754, %v3356, 0
        %v3403 = vsel %vm754, %v3358, 0
        %v3406 = vsel %vm754, %v3360, 0
        %v3409 = vsel %vm754, %v3362, 0
        %v3412 = vsel %vm754, %v3372, 0
        %v3415 = vsel %vm754, %v3374, 0
        %v3418 = vsel %vm754, %v3376, 0
        %v3421 = vsel %vm754, %v3378, 0
        %v3424 = vsel %vm754, %v3380, 0
        %v3427 = vsel %vm754, %v3382, 0
        %v3430 = vsel %vm754, %v3384, 0
        %v3433 = vsel %vm754, %v3386, 0
        %3435 = vmatprep.subr.bf16.mxu0 0
        %3436 = vmatpush1.bf16.xpose.msra.mxu0 %v3412
        %3437 = vmatprep.subr.bf16.mxu0 0
        %3438 = vmatpush1.bf16.xpose.msra.mxu0 %v3415
        %3439 = vmatprep.subr.bf16.mxu0 0
        %3440 = vmatpush1.bf16.xpose.msra.mxu0 %v3418
        %3441 = vmatprep.subr.bf16.mxu0 0
        %3442 = vmatpush1.bf16.xpose.msra.mxu0 %v3421
        %3443 = vmatprep.subr.bf16.mxu0 0
        %3444 = vmatpush1.bf16.xpose.msra.mxu0 %v3424
        %3445 = vmatprep.subr.bf16.mxu0 0
        %3446 = vmatpush1.bf16.xpose.msra.mxu0 %v3427
        %3447 = vmatprep.subr.bf16.mxu0 0
        %3448 = vmatpush1.bf16.xpose.msra.mxu0 %v3430
        %3449 = vmatprep.subr.bf16.mxu0 0
        %3450 = vmatpush1.bf16.xpose.msra.mxu0 %v3433
        %3451 = vmatprep.subr.bf16.mxu0 0
        %3452 = vmatpush1.bf16.xpose.msra.mxu0 0
        %3453 = vmatprep.subr.bf16.mxu0 0
        %3454 = vmatpush1.bf16.xpose.msra.mxu0 0
        %3455 = vmatprep.subr.bf16.mxu0 0
        %3456 = vmatpush1.bf16.xpose.msra.mxu0 0
        %3457 = vmatprep.subr.bf16.mxu0 0
        %3458 = vmatpush1.bf16.xpose.msra.mxu0 0
        %3459 = vmatprep.subr.bf16.mxu0 0
        %3460 = vmatpush1.bf16.xpose.msra.mxu0 0
        %3461 = vmatprep.subr.bf16.mxu0 0
        %3462 = vmatpush1.bf16.xpose.msra.mxu0 0
        %3463 = vmatprep.subr.bf16.mxu0 0
        %3464 = vmatpush1.bf16.xpose.msra.mxu0 0
        %3465 = vmatprep.subr.bf16.mxu0 0
        %3466 = vmatpush1.bf16.xpose.msra.mxu0 0
        %3467 = vmatprep.mubr.bf16.mxu0 0
        %3468 = vmatmul.mubr.bf16.gmra.mrb[0].mxu0 %v3388
        %v3469 = vpop.f32.mrb[0].mxu0
        %v3470 = vadd.f32 0.0, %v3469
        %v3471 = vpop.f32.mrb[0].mxu0
        %v3472 = vpop.f32.mrb[0].mxu0
        %v3473 = vadd.f32 0.0, %v3472
        %v3474 = vpop.f32.mrb[0].mxu0
        %3475 = vmatprep.mubr.bf16.mxu0 0
        %3476 = vmatmul.mubr.bf16.gmra.mrb[0].mxu0 %v3391
        %v3477 = vpop.f32.mrb[0].mxu0
        %v3478 = vadd.f32 0.0, %v3477
        %v3479 = vpop.f32.mrb[0].mxu0
        %v3480 = vpop.f32.mrb[0].mxu0
        %v3481 = vadd.f32 0.0, %v3480
        %v3482 = vpop.f32.mrb[0].mxu0
        %3483 = vmatprep.mubr.bf16.mxu0 0
        %3484 = vmatmul.mubr.bf16.gmra.mrb[0].mxu0 %v3394
        %v3485 = vpop.f32.mrb[0].mxu0
        %v3486 = vadd.f32 0.0, %v3485
        %v3487 = vpop.f32.mrb[0].mxu0
        %v3488 = vpop.f32.mrb[0].mxu0
        %v3489 = vadd.f32 0.0, %v3488
        %v3490 = vpop.f32.mrb[0].mxu0
        %3491 = vmatprep.mubr.bf16.mxu0 0
        %3492 = vmatmul.mubr.bf16.gmra.mrb[0].mxu0 %v3397
        %v3493 = vpop.f32.mrb[0].mxu0
        %v3494 = vadd.f32 0.0, %v3493
        %v3495 = vpop.f32.mrb[0].mxu0
        %v3496 = vpop.f32.mrb[0].mxu0
        %v3497 = vadd.f32 0.0, %v3496
        %v3498 = vpop.f32.mrb[0].mxu0
        %3499 = vmatprep.mubr.bf16.mxu0 0
        %3500 = vmatmul.mubr.bf16.gmra.mrb[0].mxu0 %v3400
        %v3501 = vpop.f32.mrb[0].mxu0
        %v3502 = vadd.f32 0.0, %v3501
        %v3503 = vpop.f32.mrb[0].mxu0
        %v3504 = vpop.f32.mrb[0].mxu0
        %v3505 = vadd.f32 0.0, %v3504
        %v3506 = vpop.f32.mrb[0].mxu0
        %3507 = vmatprep.mubr.bf16.mxu0 0
        %3508 = vmatmul.mubr.bf16.gmra.mrb[0].mxu0 %v3403
        %v3509 = vpop.f32.mrb[0].mxu0
        %v3510 = vadd.f32 0.0, %v3509
        %v3511 = vpop.f32.mrb[0].mxu0
        %v3512 = vpop.f32.mrb[0].mxu0
        %v3513 = vadd.f32 0.0, %v3512
        %v3514 = vpop.f32.mrb[0].mxu0
        %3515 = vmatprep.mubr.bf16.mxu0 0
        %3516 = vmatmul.mubr.bf16.gmra.mrb[0].mxu0 %v3406
        %v3517 = vpop.f32.mrb[0].mxu0
        %v3518 = vadd.f32 0.0, %v3517
        %v3519 = vpop.f32.mrb[0].mxu0
        %v3520 = vpop.f32.mrb[0].mxu0
        %v3521 = vadd.f32 0.0, %v3520
        %v3522 = vpop.f32.mrb[0].mxu0
        %3523 = vmatprep.mubr.bf16.mxu0 0
        %3524 = vmatmul.mubr.bf16.gmra.mrb[0].mxu0 %v3409
        %v3525 = vpop.f32.mrb[0].mxu0
        %v3526 = vadd.f32 0.0, %v3525
        %v3527 = vpop.f32.mrb[0].mxu0
        %v3528 = vpop.f32.mrb[0].mxu0
        %v3529 = vadd.f32 0.0, %v3528
        %v3530 = vpop.f32.mrb[0].mxu0
        %3531 = vdwg.mxu0
        %3532 = vmax.xlane.f32.xlu0 %v3470
        %v3533 = vpop.xlane.xlu0 %3532
        %3534 = vmax.xlane.f32.xlu0 %v3473
        %v3535 = vpop.xlane.xlu0 %3534
        %3536 = vmax.xlane.f32.xlu0 %v3478
        %v3537 = vpop.xlane.xlu0 %3536
        %3538 = vmax.xlane.f32.xlu0 %v3481
        %v3539 = vpop.xlane.xlu0 %3538
        %3540 = vmax.xlane.f32.xlu0 %v3486
        %v3541 = vpop.xlane.xlu0 %3540
        %3542 = vmax.xlane.f32.xlu0 %v3489
        %v3543 = vpop.xlane.xlu0 %3542
        %3544 = vmax.xlane.f32.xlu0 %v3494
        %v3545 = vpop.xlane.xlu0 %3544
        %3546 = vmax.xlane.f32.xlu0 %v3497
        %v3547 = vpop.xlane.xlu0 %3546
        %3548 = vmax.xlane.f32.xlu0 %v3502
        %v3549 = vpop.xlane.xlu0 %3548
        %3550 = vmax.xlane.f32.xlu0 %v3505
        %v3551 = vpop.xlane.xlu0 %3550
        %3552 = vmax.xlane.f32.xlu0 %v3510
        %v3553 = vpop.xlane.xlu0 %3552
        %3554 = vmax.xlane.f32.xlu0 %v3513
        %v3555 = vpop.xlane.xlu0 %3554
        %3556 = vmax.xlane.f32.xlu0 %v3518
        %v3557 = vpop.xlane.xlu0 %3556
        %3558 = vmax.xlane.f32.xlu0 %v3521
        %v3559 = vpop.xlane.xlu0 %3558
        %3560 = vmax.xlane.f32.xlu0 %v3526
        %v3561 = vpop.xlane.xlu0 %3560
        %3562 = vmax.xlane.f32.xlu0 %v3529
        %v3563 = vpop.xlane.xlu0 %3562
        %v3564 = vsub.f32 %v3470, %v3533
        %v3565 = vsub.f32 %v3473, %v3535
        %v3566 = vsub.f32 %v3478, %v3537
        %v3567 = vsub.f32 %v3481, %v3539
        %v3568 = vsub.f32 %v3486, %v3541
        %v3569 = vsub.f32 %v3489, %v3543
        %v3570 = vsub.f32 %v3494, %v3545
        %v3571 = vsub.f32 %v3497, %v3547
        %v3572 = vsub.f32 %v3502, %v3549
        %v3573 = vsub.f32 %v3505, %v3551
        %v3574 = vsub.f32 %v3510, %v3553
        %v3575 = vsub.f32 %v3513, %v3555
        %v3576 = vsub.f32 %v3518, %v3557
        %v3577 = vsub.f32 %v3521, %v3559
        %v3578 = vsub.f32 %v3526, %v3561
        %v3579 = vsub.f32 %v3529, %v3563
        %v3580 = vmul.f32 %v3564, 1.442695
        %v3581 = vpow.pop %v3580
        %v3582 = vmul.f32 %v3565, 1.442695
        %v3583 = vpow.pop %v3582
        %v3584 = vmul.f32 %v3566, 1.442695
        %v3585 = vpow.pop %v3584
        %v3586 = vmul.f32 %v3567, 1.442695
        %v3587 = vpow.pop %v3586
        %v3588 = vmul.f32 %v3568, 1.442695
        %v3589 = vpow.pop %v3588
        %v3590 = vmul.f32 %v3569, 1.442695
        %v3591 = vpow.pop %v3590
        %v3592 = vmul.f32 %v3570, 1.442695
        %v3593 = vpow.pop %v3592
        %v3594 = vmul.f32 %v3571, 1.442695
        %v3595 = vpow.pop %v3594
        %v3596 = vmul.f32 %v3572, 1.442695
        %v3597 = vpow.pop %v3596
        %v3598 = vmul.f32 %v3573, 1.442695
        %v3599 = vpow.pop %v3598
        %v3600 = vmul.f32 %v3574, 1.442695
        %v3601 = vpow.pop %v3600
        %v3602 = vmul.f32 %v3575, 1.442695
        %v3603 = vpow.pop %v3602
        %v3604 = vmul.f32 %v3576, 1.442695
        %v3605 = vpow.pop %v3604
        %v3606 = vmul.f32 %v3577, 1.442695
        %v3607 = vpow.pop %v3606
        %v3608 = vmul.f32 %v3578, 1.442695
        %v3609 = vpow.pop %v3608
        %v3610 = vmul.f32 %v3579, 1.442695
        %v3611 = vpow.pop %v3610
        %3612 = vadd.xlane.f32.xlu0 %v3581
        %v3613 = vpop.xlane.xlu0 %3612
        %3614 = vadd.xlane.f32.xlu0 %v3583
        %v3615 = vpop.xlane.xlu0 %3614
        %3616 = vadd.xlane.f32.xlu0 %v3585
        %v3617 = vpop.xlane.xlu0 %3616
        %3618 = vadd.xlane.f32.xlu0 %v3587
        %v3619 = vpop.xlane.xlu0 %3618
        %3620 = vadd.xlane.f32.xlu0 %v3589
        %v3621 = vpop.xlane.xlu0 %3620
        %3622 = vadd.xlane.f32.xlu0 %v3591
        %v3623 = vpop.xlane.xlu0 %3622
        %3624 = vadd.xlane.f32.xlu0 %v3593
        %v3625 = vpop.xlane.xlu0 %3624
        %3626 = vadd.xlane.f32.xlu0 %v3595
        %v3627 = vpop.xlane.xlu0 %3626
        %3628 = vadd.xlane.f32.xlu0 %v3597
        %v3629 = vpop.xlane.xlu0 %3628
        %3630 = vadd.xlane.f32.xlu0 %v3599
        %v3631 = vpop.xlane.xlu0 %3630
        %3632 = vadd.xlane.f32.xlu0 %v3601
        %v3633 = vpop.xlane.xlu0 %3632
        %3634 = vadd.xlane.f32.xlu0 %v3603
        %v3635 = vpop.xlane.xlu0 %3634
        %3636 = vadd.xlane.f32.xlu0 %v3605
        %v3637 = vpop.xlane.xlu0 %3636
        %3638 = vadd.xlane.f32.xlu0 %v3607
        %v3639 = vpop.xlane.xlu0 %3638
        %3640 = vadd.xlane.f32.xlu0 %v3609
        %v3641 = vpop.xlane.xlu0 %3640
        %3642 = vadd.xlane.f32.xlu0 %v3611
        %v3643 = vpop.xlane.xlu0 %3642
        %v3644 = vpack.c.bf16 %v3583, %v3581
        %v3645 = vpack.c.bf16 %v3587, %v3585
        %v3646 = vpack.c.bf16 %v3591, %v3589
        %v3647 = vpack.c.bf16 %v3595, %v3593
        %v3648 = vpack.c.bf16 %v3599, %v3597
        %v3649 = vpack.c.bf16 %v3603, %v3601
        %v3650 = vpack.c.bf16 %v3607, %v3605
        %v3651 = vpack.c.bf16 %v3611, %v3609
        %3652 = vrot.lane.b32.xlu0 %v1261, 32
        %v3653 = vpop.permute.xlu0 %3652
        %3654 = vrot.lane.b32.xlu0 %v1262, 32
        %v3655 = vpop.permute.xlu0 %3654
        %3656 = vrot.lane.b32.xlu0 %v1263, 32
        %v3657 = vpop.permute.xlu0 %3656
        %3658 = vrot.lane.b32.xlu0 %v1264, 32
        %v3659 = vpop.permute.xlu0 %3658
        %3660 = vrot.lane.b32.xlu0 %v1265, 32
        %v3661 = vpop.permute.xlu0 %3660
        %3662 = vrot.lane.b32.xlu0 %v1266, 32
        %v3663 = vpop.permute.xlu0 %3662
        %3664 = vrot.lane.b32.xlu0 %v1267, 32
        %v3665 = vpop.permute.xlu0 %3664
        %3666 = vrot.lane.b32.xlu0 %v1268, 32
        %v3667 = vpop.permute.xlu0 %3666
        %3676 = vmatprep.subr.bf16.mxu0 0
        %3677 = vmatpush1.bf16.msra.mxu0 %v3653
        %3678 = vmatprep.subr.bf16.mxu0 0
        %3679 = vmatpush1.bf16.msra.mxu0 %v3655
        %3680 = vmatprep.subr.bf16.mxu0 0
        %3681 = vmatpush1.bf16.msra.mxu0 %v3657
        %3682 = vmatprep.subr.bf16.mxu0 0
        %3683 = vmatpush1.bf16.msra.mxu0 %v3659
        %3684 = vmatprep.subr.bf16.mxu0 0
        %3685 = vmatpush1.bf16.msra.mxu0 %v3661
        %3686 = vmatprep.subr.bf16.mxu0 0
        %3687 = vmatpush1.bf16.msra.mxu0 %v3663
        %3688 = vmatprep.subr.bf16.mxu0 0
        %3689 = vmatpush1.bf16.msra.mxu0 %v3665
        %3690 = vmatprep.subr.bf16.mxu0 0
        %3691 = vmatpush1.bf16.msra.mxu0 %v3667
        %3692 = vmatprep.subr.bf16.mxu0 0
        %3693 = vmatpush1.bf16.msra.mxu0 0
        %3694 = vmatprep.subr.bf16.mxu0 0
        %3695 = vmatpush1.bf16.msra.mxu0 0
        %3696 = vmatprep.subr.bf16.mxu0 0
        %3697 = vmatpush1.bf16.msra.mxu0 0
        %3698 = vmatprep.subr.bf16.mxu0 0
        %3699 = vmatpush1.bf16.msra.mxu0 0
        %3700 = vmatprep.subr.bf16.mxu0 0
        %3701 = vmatpush1.bf16.msra.mxu0 0
        %3702 = vmatprep.subr.bf16.mxu0 0
        %3703 = vmatpush1.bf16.msra.mxu0 0
        %3704 = vmatprep.subr.bf16.mxu0 0
        %3705 = vmatpush1.bf16.msra.mxu0 0
        %3706 = vmatprep.subr.bf16.mxu0 0
        %3707 = vmatpush1.bf16.msra.mxu0 0
        %3708 = vmatprep.mubr.bf16.mxu0 0
        %3709 = vmatmul.mubr.bf16.gmra.mrb[0].mxu0 %v3644
        %v3710 = vpop.f32.mrb[0].mxu0
        %v3711 = vadd.f32 0.0, %v3710
        %v3712 = vpop.f32.mrb[0].mxu0
        %v3713 = vpop.f32.mrb[0].mxu0
        %v3714 = vadd.f32 0.0, %v3713
        %v3715 = vpop.f32.mrb[0].mxu0
        %3716 = vmatprep.mubr.bf16.mxu0 0
        %3717 = vmatmul.mubr.bf16.gmra.mrb[0].mxu0 %v3645
        %v3718 = vpop.f32.mrb[0].mxu0
        %v3719 = vadd.f32 0.0, %v3718
        %v3720 = vpop.f32.mrb[0].mxu0
        %v3721 = vpop.f32.mrb[0].mxu0
        %v3722 = vadd.f32 0.0, %v3721
        %v3723 = vpop.f32.mrb[0].mxu0
        %3724 = vmatprep.mubr.bf16.mxu0 0
        %3725 = vmatmul.mubr.bf16.gmra.mrb[0].mxu0 %v3646
        %v3726 = vpop.f32.mrb[0].mxu0
        %v3727 = vadd.f32 0.0, %v3726
        %v3728 = vpop.f32.mrb[0].mxu0
        %v3729 = vpop.f32.mrb[0].mxu0
        %v3730 = vadd.f32 0.0, %v3729
        %v3731 = vpop.f32.mrb[0].mxu0
        %3732 = vmatprep.mubr.bf16.mxu0 0
        %3733 = vmatmul.mubr.bf16.gmra.mrb[0].mxu0 %v3647
        %v3734 = vpop.f32.mrb[0].mxu0
        %v3735 = vadd.f32 0.0, %v3734
        %v3736 = vpop.f32.mrb[0].mxu0
        %v3737 = vpop.f32.mrb[0].mxu0
        %v3738 = vadd.f32 0.0, %v3737
        %v3739 = vpop.f32.mrb[0].mxu0
        %3740 = vmatprep.mubr.bf16.mxu0 0
        %3741 = vmatmul.mubr.bf16.gmra.mrb[0].mxu0 %v3648
        %v3742 = vpop.f32.mrb[0].mxu0
        %v3743 = vadd.f32 0.0, %v3742
        %v3744 = vpop.f32.mrb[0].mxu0
        %v3745 = vpop.f32.mrb[0].mxu0
        %v3746 = vadd.f32 0.0, %v3745
        %v3747 = vpop.f32.mrb[0].mxu0
        %3748 = vmatprep.mubr.bf16.mxu0 0
        %3749 = vmatmul.mubr.bf16.gmra.mrb[0].mxu0 %v3649
        %v3750 = vpop.f32.mrb[0].mxu0
        %v3751 = vadd.f32 0.0, %v3750
        %v3752 = vpop.f32.mrb[0].mxu0
        %v3753 = vpop.f32.mrb[0].mxu0
        %v3754 = vadd.f32 0.0, %v3753
        %v3755 = vpop.f32.mrb[0].mxu0
        %3756 = vmatprep.mubr.bf16.mxu0 0
        %3757 = vmatmul.mubr.bf16.gmra.mrb[0].mxu0 %v3650
        %v3758 = vpop.f32.mrb[0].mxu0
        %v3759 = vadd.f32 0.0, %v3758
        %v3760 = vpop.f32.mrb[0].mxu0
        %v3761 = vpop.f32.mrb[0].mxu0
        %v3762 = vadd.f32 0.0, %v3761
        %v3763 = vpop.f32.mrb[0].mxu0
        %3764 = vmatprep.mubr.bf16.mxu0 0
        %3765 = vmatmul.mubr.bf16.gmra.mrb[0].mxu0 %v3651
        %v3766 = vpop.f32.mrb[0].mxu0
        %v3767 = vadd.f32 0.0, %v3766
        %v3768 = vpop.f32.mrb[0].mxu0
        %v3769 = vpop.f32.mrb[0].mxu0
        %v3770 = vadd.f32 0.0, %v3769
        %v3771 = vpop.f32.mrb[0].mxu0
        %3772 = vdwg.mxu0
        %v3773 = vrcp.pop %v3613
        %v3774 = vrcp.pop %v3615
        %v3775 = vrcp.pop %v3617
        %v3776 = vrcp.pop %v3619
        %v3777 = vrcp.pop %v3621
        %v3778 = vrcp.pop %v3623
        %v3779 = vrcp.pop %v3625
        %v3780 = vrcp.pop %v3627
        %v3781 = vrcp.pop %v3629
        %v3782 = vrcp.pop %v3631
        %v3783 = vrcp.pop %v3633
        %v3784 = vrcp.pop %v3635
        %v3785 = vrcp.pop %v3637
        %v3786 = vrcp.pop %v3639
        %v3787 = vrcp.pop %v3641
        %v3788 = vrcp.pop %v3643
        %v3789 = vmul.f32 %v3711, %v3773
        %v3790 = vmul.f32 %v3714, %v3774
        %v3791 = vmul.f32 %v3719, %v3775
        %v3792 = vmul.f32 %v3722, %v3776
        %v3793 = vmul.f32 %v3727, %v3777
        %v3794 = vmul.f32 %v3730, %v3778
        %v3795 = vmul.f32 %v3735, %v3779
        %v3796 = vmul.f32 %v3738, %v3780
        %v3797 = vmul.f32 %v3743, %v3781
        %v3798 = vmul.f32 %v3746, %v3782
        %v3799 = vmul.f32 %v3751, %v3783
        %v3800 = vmul.f32 %v3754, %v3784
        %v3801 = vmul.f32 %v3759, %v3785
        %v3802 = vmul.f32 %v3762, %v3786
        %v3803 = vmul.f32 %v3767, %v3787
        %v3804 = vmul.f32 %v3770, %v3788
        %3821 = vrot.lane.b32.xlu0 %v2211, 32
        %v3822 = vpop.permute.xlu0 %3821
        %3823 = vrot.lane.b32.xlu0 %v2212, 32
        %v3824 = vpop.permute.xlu0 %3823
        %3825 = vrot.lane.b32.xlu0 %v2213, 32
        %v3826 = vpop.permute.xlu0 %3825
        %3827 = vrot.lane.b32.xlu0 %v2214, 32
        %v3828 = vpop.permute.xlu0 %3827
        %3829 = vrot.lane.b32.xlu0 %v2215, 32
        %v3830 = vpop.permute.xlu0 %3829
        %3831 = vrot.lane.b32.xlu0 %v2216, 32
        %v3832 = vpop.permute.xlu0 %3831
        %3833 = vrot.lane.b32.xlu0 %v2217, 32
        %v3834 = vpop.permute.xlu0 %3833
        %3835 = vrot.lane.b32.xlu0 %v2218, 32
        %v3836 = vpop.permute.xlu0 %3835
        %3837 = vrot.lane.b32.xlu0 %v2219, 32
        %v3838 = vpop.permute.xlu0 %3837
        %3839 = vrot.lane.b32.xlu0 %v2220, 32
        %v3840 = vpop.permute.xlu0 %3839
        %3841 = vrot.lane.b32.xlu0 %v2221, 32
        %v3842 = vpop.permute.xlu0 %3841
        %3843 = vrot.lane.b32.xlu0 %v2222, 32
        %v3844 = vpop.permute.xlu0 %3843
        %3845 = vrot.lane.b32.xlu0 %v2223, 32
        %v3846 = vpop.permute.xlu0 %3845
        %3847 = vrot.lane.b32.xlu0 %v2224, 32
        %v3848 = vpop.permute.xlu0 %3847
        %3849 = vrot.lane.b32.xlu0 %v2225, 32
        %v3850 = vpop.permute.xlu0 %3849
        %3851 = vrot.lane.b32.xlu0 %v2226, 32
        %v3852 = vpop.permute.xlu0 %3851
        %3885 = vrot.lane.b32.xlu0 %v3000, 64
        %v3886 = vpop.permute.xlu0 %3885
        %3887 = vrot.lane.b32.xlu0 %v3001, 64
        %v3888 = vpop.permute.xlu0 %3887
        %3889 = vrot.lane.b32.xlu0 %v3002, 64
        %v3890 = vpop.permute.xlu0 %3889
        %3891 = vrot.lane.b32.xlu0 %v3003, 64
        %v3892 = vpop.permute.xlu0 %3891
        %3893 = vrot.lane.b32.xlu0 %v3004, 64
        %v3894 = vpop.permute.xlu0 %3893
        %3895 = vrot.lane.b32.xlu0 %v3005, 64
        %v3896 = vpop.permute.xlu0 %3895
        %3897 = vrot.lane.b32.xlu0 %v3006, 64
        %v3898 = vpop.permute.xlu0 %3897
        %3899 = vrot.lane.b32.xlu0 %v3007, 64
        %v3900 = vpop.permute.xlu0 %3899
        %3901 = vrot.lane.b32.xlu0 %v3008, 64
        %v3902 = vpop.permute.xlu0 %3901
        %3903 = vrot.lane.b32.xlu0 %v3009, 64
        %v3904 = vpop.permute.xlu0 %3903
        %3905 = vrot.lane.b32.xlu0 %v3010, 64
        %v3906 = vpop.permute.xlu0 %3905
        %3907 = vrot.lane.b32.xlu0 %v3011, 64
        %v3908 = vpop.permute.xlu0 %3907
        %3909 = vrot.lane.b32.xlu0 %v3012, 64
        %v3910 = vpop.permute.xlu0 %3909
        %3911 = vrot.lane.b32.xlu0 %v3013, 64
        %v3912 = vpop.permute.xlu0 %3911
        %3913 = vrot.lane.b32.xlu0 %v3014, 64
        %v3914 = vpop.permute.xlu0 %3913
        %3915 = vrot.lane.b32.xlu0 %v3015, 64
        %v3916 = vpop.permute.xlu0 %3915
        %3949 = vrot.lane.b32.xlu0 %v3789, 96
        %v3950 = vpop.permute.xlu0 %3949
        %3951 = vrot.lane.b32.xlu0 %v3790, 96
        %v3952 = vpop.permute.xlu0 %3951
        %3953 = vrot.lane.b32.xlu0 %v3791, 96
        %v3954 = vpop.permute.xlu0 %3953
        %3955 = vrot.lane.b32.xlu0 %v3792, 96
        %v3956 = vpop.permute.xlu0 %3955
        %3957 = vrot.lane.b32.xlu0 %v3793, 96
        %v3958 = vpop.permute.xlu0 %3957
        %3959 = vrot.lane.b32.xlu0 %v3794, 96
        %v3960 = vpop.permute.xlu0 %3959
        %3961 = vrot.lane.b32.xlu0 %v3795, 96
        %v3962 = vpop.permute.xlu0 %3961
        %3963 = vrot.lane.b32.xlu0 %v3796, 96
        %v3964 = vpop.permute.xlu0 %3963
        %3965 = vrot.lane.b32.xlu0 %v3797, 96
        %v3966 = vpop.permute.xlu0 %3965
        %3967 = vrot.lane.b32.xlu0 %v3798, 96
        %v3968 = vpop.permute.xlu0 %3967
        %3969 = vrot.lane.b32.xlu0 %v3799, 96
        %v3970 = vpop.permute.xlu0 %3969
        %3971 = vrot.lane.b32.xlu0 %v3800, 96
        %v3972 = vpop.permute.xlu0 %3971
        %3973 = vrot.lane.b32.xlu0 %v3801, 96
        %v3974 = vpop.permute.xlu0 %3973
        %3975 = vrot.lane.b32.xlu0 %v3802, 96
        %v3976 = vpop.permute.xlu0 %3975
        %3977 = vrot.lane.b32.xlu0 %v3803, 96
        %v3978 = vpop.permute.xlu0 %3977
        %3979 = vrot.lane.b32.xlu0 %v3804, 96
        %v3980 = vpop.permute.xlu0 %3979
        %v3997 = vsel %vm754, %v1382, %v3822
        %v3998 = vsel %vm754, %v1383, %v3824
        %v3999 = vsel %vm754, %v1384, %v3826
        %v4000 = vsel %vm754, %v1385, %v3828
        %v4001 = vsel %vm754, %v1386, %v3830
        %v4002 = vsel %vm754, %v1387, %v3832
        %v4003 = vsel %vm754, %v1388, %v3834
        %v4004 = vsel %vm754, %v1389, %v3836
        %v4005 = vsel %vm754, %v1390, %v3838
        %v4006 = vsel %vm754, %v1391, %v3840
        %v4007 = vsel %vm754, %v1392, %v3842
        %v4008 = vsel %vm754, %v1393, %v3844
        %v4009 = vsel %vm754, %v1394, %v3846
        %v4010 = vsel %vm754, %v1395, %v3848
        %v4011 = vsel %vm754, %v1396, %v3850
        %v4012 = vsel %vm754, %v1397, %v3852
        %vm4013 = vcmask 523264
        %v4014 = vsel %vm4013, %v3997, %v3886
        %v4015 = vsel %vm4013, %v3998, %v3888
        %v4016 = vsel %vm4013, %v3999, %v3890
        %v4017 = vsel %vm4013, %v4000, %v3892
        %v4018 = vsel %vm4013, %v4001, %v3894
        %v4019 = vsel %vm4013, %v4002, %v3896
        %v4020 = vsel %vm4013, %v4003, %v3898
        %v4021 = vsel %vm4013, %v4004, %v3900
        %v4022 = vsel %vm4013, %v4005, %v3902
        %v4023 = vsel %vm4013, %v4006, %v3904
        %v4024 = vsel %vm4013, %v4007, %v3906
        %v4025 = vsel %vm4013, %v4008, %v3908
        %v4026 = vsel %vm4013, %v4009, %v3910
        %v4027 = vsel %vm4013, %v4010, %v3912
        %v4028 = vsel %vm4013, %v4011, %v3914
        %v4029 = vsel %vm4013, %v4012, %v3916
        %vm4030 = vcmask 785408
        %v4031 = vsel %vm4030, %v4014, %v3950
        %v4032 = vsel %vm4030, %v4015, %v3952
        %v4033 = vsel %vm4030, %v4016, %v3954
        %v4034 = vsel %vm4030, %v4017, %v3956
        %v4035 = vsel %vm4030, %v4018, %v3958
        %v4036 = vsel %vm4030, %v4019, %v3960
        %v4037 = vsel %vm4030, %v4020, %v3962
        %v4038 = vsel %vm4030, %v4021, %v3964
        %v4039 = vsel %vm4030, %v4022, %v3966
        %v4040 = vsel %vm4030, %v4023, %v3968
        %v4041 = vsel %vm4030, %v4024, %v3970
        %v4042 = vsel %vm4030, %v4025, %v3972
        %v4043 = vsel %vm4030, %v4026, %v3974
        %v4044 = vsel %vm4030, %v4027, %v3976
        %v4045 = vsel %vm4030, %v4028, %v3978
        %v4046 = vsel %vm4030, %v4029, %v3980
        %v4047 = vpack.c.bf16 %v4032, %v4031
        %v4048 = vpack.c.bf16 %v4034, %v4033
        %v4049 = vpack.c.bf16 %v4036, %v4035
        %v4050 = vpack.c.bf16 %v4038, %v4037
        %v4051 = vpack.c.bf16 %v4040, %v4039
        %v4052 = vpack.c.bf16 %v4042, %v4041
        %v4053 = vpack.c.bf16 %v4044, %v4043
        %v4054 = vpack.c.bf16 %v4046, %v4045
        %p4055 = scmp.eq.s32.totalorder %s29, 0
        // Predicated region
        $region57: #{tpu_custom_call.1} parent=39 // pred_check
          %p4056 = pneg %p4055
        $region58: #{tpu_custom_call.1} parent=39 // pred_check_branch
          %4058 = sbr.rel (%p4056) target = $region60
        $region59: #{tpu_custom_call.1} parent=39 // pred_region
          %4059 = vst [vmem:[#allocation2] sm:$0xff] %v4047
          %4060 = vst [vmem:[#allocation2 + $0x8] sm:$0xff] %v4048
          %4061 = vst [vmem:[#allocation2 + $0x10] sm:$0xff] %v4049
          %4062 = vst [vmem:[#allocation2 + $0x18] sm:$0xff] %v4050
          %4063 = vst [vmem:[#allocation2 + $0x20] sm:$0xff] %v4051
          %4064 = vst [vmem:[#allocation2 + $0x28] sm:$0xff] %v4052
          %4065 = vst [vmem:[#allocation2 + $0x30] sm:$0xff] %v4053
          %4066 = vst [vmem:[#allocation2 + $0x38] sm:$0xff] %v4054
          %v4067 = vld [vmem:[#allocation2] sm:$0xff]
          %v4068 = vld [vmem:[#allocation2 + $0x8] sm:$0xff]
          %v4069 = vld [vmem:[#allocation2 + $0x10] sm:$0xff]
          %v4070 = vld [vmem:[#allocation2 + $0x18] sm:$0xff]
          %v4071 = vld [vmem:[#allocation2 + $0x20] sm:$0xff]
          %v4072 = vld [vmem:[#allocation2 + $0x28] sm:$0xff]
          %v4073 = vld [vmem:[#allocation2 + $0x30] sm:$0xff]
          %v4074 = vld [vmem:[#allocation2 + $0x38] sm:$0xff]
          %v4075 = vld [vmem:[#allocation9] sm:$0xf]
          %v4076 = vld [vmem:[#allocation9 + $0x4] sm:$0xf]
          %v4077 = vld [vmem:[#allocation9 + $0x8] sm:$0xf]
          %v4078 = vld [vmem:[#allocation9 + $0xc] sm:$0xf]
          %v4079 = vld [vmem:[#allocation9 + $0x10] sm:$0xf]
          %v4080 = vld [vmem:[#allocation9 + $0x14] sm:$0xf]
          %v4081 = vld [vmem:[#allocation9 + $0x18] sm:$0xf]
          %v4082 = vld [vmem:[#allocation9 + $0x1c] sm:$0xf]
          %v4083 = vld [vmem:[#allocation9 + $0x20] sm:$0xf]
          %v4084 = vld [vmem:[#allocation9 + $0x24] sm:$0xf]
          %v4085 = vld [vmem:[#allocation9 + $0x28] sm:$0xf]
          %v4086 = vld [vmem:[#allocation9 + $0x2c] sm:$0xf]
          %v4087 = vld [vmem:[#allocation9 + $0x30] sm:$0xf]
          %v4088 = vld [vmem:[#allocation9 + $0x34] sm:$0xf]
          %v4089 = vld [vmem:[#allocation9 + $0x38] sm:$0xf]
          %v4090 = vld [vmem:[#allocation9 + $0x3c] sm:$0xf]
          %v4091 = vld [vmem:[%s4] sm:$0x1]
          %v4093 = vlaneseq
          %v4094 = vshrl.u32 %v4093, 7
          %v4095 = vsub.s32 0, %v4094
          %v4096 = vrot.slane %v4091, %v4095
          %v4114 = vunpack.c.l.b16 %v4075
          %v4115 = vunpack.c.l.b16 %v4076
          %v4116 = vunpack.c.l.b16 %v4077
          %v4117 = vunpack.c.l.b16 %v4078
          %v4118 = vunpack.c.l.b16 %v4079
          %v4119 = vunpack.c.l.b16 %v4080
          %v4120 = vunpack.c.l.b16 %v4081
          %v4121 = vunpack.c.l.b16 %v4082
          %v4122 = vunpack.c.l.b16 %v4083
          %v4123 = vunpack.c.l.b16 %v4084
          %v4124 = vunpack.c.l.b16 %v4085
          %v4125 = vunpack.c.l.b16 %v4086
          %v4126 = vunpack.c.l.b16 %v4087
          %v4127 = vunpack.c.l.b16 %v4088
          %v4128 = vunpack.c.l.b16 %v4089
          %v4129 = vunpack.c.l.b16 %v4090
          %v4130 = vpack.c.b16 %v4115, %v4114
          %v4131 = vpack.c.b16 %v4117, %v4116
          %v4132 = vpack.c.b16 %v4119, %v4118
          %v4133 = vpack.c.b16 %v4121, %v4120
          %v4134 = vpack.c.b16 %v4123, %v4122
          %v4135 = vpack.c.b16 %v4125, %v4124
          %v4136 = vpack.c.b16 %v4127, %v4126
          %v4137 = vpack.c.b16 %v4129, %v4128
          %4146 = vmatprep.subr.bf16.mxu0 0
          %4147 = vmatpush1.bf16.msra.mxu0 %v4130
          %4148 = vmatprep.subr.bf16.mxu0 0
          %4149 = vmatpush1.bf16.msra.mxu0 %v4131
          %4150 = vmatprep.subr.bf16.mxu0 0
          %4151 = vmatpush1.bf16.msra.mxu0 %v4132
          %4152 = vmatprep.subr.bf16.mxu0 0
          %4153 = vmatpush1.bf16.msra.mxu0 %v4133
          %4154 = vmatprep.subr.bf16.mxu0 0
          %4155 = vmatpush1.bf16.msra.mxu0 %v4134
          %4156 = vmatprep.subr.bf16.mxu0 0
          %4157 = vmatpush1.bf16.msra.mxu0 %v4135
          %4158 = vmatprep.subr.bf16.mxu0 0
          %4159 = vmatpush1.bf16.msra.mxu0 %v4136
          %4160 = vmatprep.subr.bf16.mxu0 0
          %4161 = vmatpush1.bf16.msra.mxu0 %v4137
          %4162 = vmatprep.subr.bf16.mxu0 0
          %4163 = vmatpush1.bf16.msra.mxu0 0
          %4164 = vmatprep.subr.bf16.mxu0 0
          %4165 = vmatpush1.bf16.msra.mxu0 0
          %4166 = vmatprep.subr.bf16.mxu0 0
          %4167 = vmatpush1.bf16.msra.mxu0 0
          %4168 = vmatprep.subr.bf16.mxu0 0
          %4169 = vmatpush1.bf16.msra.mxu0 0
          %4170 = vmatprep.subr.bf16.mxu0 0
          %4171 = vmatpush1.bf16.msra.mxu0 0
          %4172 = vmatprep.subr.bf16.mxu0 0
          %4173 = vmatpush1.bf16.msra.mxu0 0
          %4174 = vmatprep.subr.bf16.mxu0 0
          %4175 = vmatpush1.bf16.msra.mxu0 0
          %4176 = vmatprep.subr.bf16.mxu0 0
          %4177 = vmatpush1.bf16.msra.mxu0 0
          %4178 = vmatprep.mubr.bf16.mxu0 0
          %4179 = vmatmul.mubr.bf16.gmra.mrb[0].mxu0 %v4067
          %v4180 = vpop.f32.mrb[0].mxu0
          %v4181 = vadd.f32 %v4096, %v4180
          %v4182 = vpop.f32.mrb[0].mxu0
          %v4183 = vpop.f32.mrb[0].mxu0
          %v4184 = vadd.f32 %v4096, %v4183
          %v4185 = vpop.f32.mrb[0].mxu0
          %4186 = vmatprep.mubr.bf16.mxu0 0
          %4187 = vmatmul.mubr.bf16.gmra.mrb[0].mxu0 %v4068
          %v4188 = vpop.f32.mrb[0].mxu0
          %v4189 = vadd.f32 %v4096, %v4188
          %v4190 = vpop.f32.mrb[0].mxu0
          %v4191 = vpop.f32.mrb[0].mxu0
          %v4192 = vadd.f32 %v4096, %v4191
          %v4193 = vpop.f32.mrb[0].mxu0
          %4194 = vmatprep.mubr.bf16.mxu0 0
          %4195 = vmatmul.mubr.bf16.gmra.mrb[0].mxu0 %v4069
          %v4196 = vpop.f32.mrb[0].mxu0
          %v4197 = vadd.f32 %v4096, %v4196
          %v4198 = vpop.f32.mrb[0].mxu0
          %v4199 = vpop.f32.mrb[0].mxu0
          %v4200 = vadd.f32 %v4096, %v4199
          %v4201 = vpop.f32.mrb[0].mxu0
          %4202 = vmatprep.mubr.bf16.mxu0 0
          %4203 = vmatmul.mubr.bf16.gmra.mrb[0].mxu0 %v4070
          %v4204 = vpop.f32.mrb[0].mxu0
          %v4205 = vadd.f32 %v4096, %v4204
          %v4206 = vpop.f32.mrb[0].mxu0
          %v4207 = vpop.f32.mrb[0].mxu0
          %v4208 = vadd.f32 %v4096, %v4207
          %v4209 = vpop.f32.mrb[0].mxu0
          %4210 = vmatprep.mubr.bf16.mxu0 0
          %4211 = vmatmul.mubr.bf16.gmra.mrb[0].mxu0 %v4071
          %v4212 = vpop.f32.mrb[0].mxu0
          %v4213 = vadd.f32 %v4096, %v4212
          %v4214 = vpop.f32.mrb[0].mxu0
          %v4215 = vpop.f32.mrb[0].mxu0
          %v4216 = vadd.f32 %v4096, %v4215
          %v4217 = vpop.f32.mrb[0].mxu0
          %4218 = vmatprep.mubr.bf16.mxu0 0
          %4219 = vmatmul.mubr.bf16.gmra.mrb[0].mxu0 %v4072
          %v4220 = vpop.f32.mrb[0].mxu0
          %v4221 = vadd.f32 %v4096, %v4220
          %v4222 = vpop.f32.mrb[0].mxu0
          %v4223 = vpop.f32.mrb[0].mxu0
          %v4224 = vadd.f32 %v4096, %v4223
          %v4225 = vpop.f32.mrb[0].mxu0
          %4226 = vmatprep.mubr.bf16.mxu0 0
          %4227 = vmatmul.mubr.bf16.gmra.mrb[0].mxu0 %v4073
          %v4228 = vpop.f32.mrb[0].mxu0
          %v4229 = vadd.f32 %v4096, %v4228
          %v4230 = vpop.f32.mrb[0].mxu0
          %v4231 = vpop.f32.mrb[0].mxu0
          %v4232 = vadd.f32 %v4096, %v4231
          %v4233 = vpop.f32.mrb[0].mxu0
          %4234 = vmatprep.mubr.bf16.mxu0 0
          %4235 = vmatmul.mubr.bf16.gmra.mrb[0].mxu0 %v4074
          %v4236 = vpop.f32.mrb[0].mxu0
          %v4237 = vadd.f32 %v4096, %v4236
          %v4238 = vpop.f32.mrb[0].mxu0
          %v4239 = vpop.f32.mrb[0].mxu0
          %v4240 = vadd.f32 %v4096, %v4239
          %v4241 = vpop.f32.mrb[0].mxu0
          %4242 = vdwg.mxu0
          %4243 = vst [vmem:[%s297] sm:$0xff] %v4181
          %4244 = vst [vmem:[%s297 + $0x8] sm:$0xff] %v4184
          %4245 = vst [vmem:[%s297 + $0x10] sm:$0xff] %v4189
          %4246 = vst [vmem:[%s297 + $0x18] sm:$0xff] %v4192
          %4247 = vst [vmem:[%s297 + $0x20] sm:$0xff] %v4197
          %4248 = vst [vmem:[%s297 + $0x28] sm:$0xff] %v4200
          %4249 = vst [vmem:[%s297 + $0x30] sm:$0xff] %v4205
          %4250 = vst [vmem:[%s297 + $0x38] sm:$0xff] %v4208
          %4251 = vst [vmem:[%s297 + $0x40] sm:$0xff] %v4213
          %4252 = vst [vmem:[%s297 + $0x48] sm:$0xff] %v4216
          %4253 = vst [vmem:[%s297 + $0x50] sm:$0xff] %v4221
          %4254 = vst [vmem:[%s297 + $0x58] sm:$0xff] %v4224
          %4255 = vst [vmem:[%s297 + $0x60] sm:$0xff] %v4229
          %4256 = vst [vmem:[%s297 + $0x68] sm:$0xff] %v4232
          %4257 = vst [vmem:[%s297 + $0x70] sm:$0xff] %v4237
          %4258 = vst [vmem:[%s297 + $0x78] sm:$0xff] %v4240
        $region60: #{tpu_custom_call.1} parent=39 // pred_fallthru
          _
        %s4259 = sand.u32 %s154, 1
        %s4260 = scalar_lea.sflag [#allocation5], %s4259
        %s4261 = sand.u32 %s154, 1
        %s4262 = smul.addr %s4261, 128
        %s4263 = scalar_lea.vmem [#allocation11], %s4262
        // Predicated region
        $region61: #{tpu_custom_call.1} parent=39 // pred_check
          %p4264 = pneg %p164
        $region62: #{tpu_custom_call.1} parent=39 // pred_check_branch
          %4266 = sbr.rel (%p4264) target = $region64
        $region63: #{tpu_custom_call.1} parent=39 // pred_region
          %s4268 = ssub.s32 2048, 2048
          %4269 = vsyncadd %s4260, %s4268
          %s4270 = smul.addr %s28, 16
          %s4271 = smul.addr %s4270, 128
          %s4272 = scalar_lea.hbm %s5, %s4271
          %s4273 = sshll.u32 %s4263, 4
          %s4274 = int_to_ptr.vmem [resolvable:$true] %s4273
          %4279 = dma.vmem_to_hbm [thread:$0]  %s4274, 2048, %s4272, %s4260, 128, 128, 8
        $region64: #{tpu_custom_call.1} parent=39 // pred_fallthru
          _
      $region40: #{tpu_custom_call.1} parent=5 // pred_fallthru
        _
      %p4280 = scmp.le.s32.totalorder 2, %s19
      // Predicated region
      $region65: #{tpu_custom_call.1} parent=5 // pred_check
        %p4281 = pneg %p4280
      $region66: #{tpu_custom_call.1} parent=5 // pred_check_branch
        %4283 = sbr.rel (%p4281) target = $region68
      $region67: #{tpu_custom_call.1} parent=5 // pred_region
        %s4284 = ssub.s32 %s19, 2
        // Predicated region
        $region69: #{tpu_custom_call.1} parent=67 // pred_check
          %p4285 = pneg %p170
        $region70: #{tpu_custom_call.1} parent=67 // pred_check_branch
          %4287 = sbr.rel (%p4285) target = $region72
        $region71: #{tpu_custom_call.1} parent=67 // pred_region
          %s4288 = sand.u32 %s155, 1
          %s4289 = scalar_lea.sflag [#allocation5], %s4288
          %s4290 = sand.u32 %s155, 1
          %s4291 = smul.addr %s4290, 128
          %s4292 = scalar_lea.vmem [#allocation11], %s4291
          %4293 = dma.done %s4289, 2048
        $region72: #{tpu_custom_call.1} parent=67 // pred_fallthru
          _
      $region68: #{tpu_custom_call.1} parent=5 // pred_fallthru
        _
    $region6: #{tpu_custom_call.1} parent=1 // loop_footer
      %s23 = sadd.s32 1, %s19
    $region7: #{tpu_custom_call.1} parent=1 // loop_footer_branch
      %18 = sbr.rel target = $region3
    $region8: #{tpu_custom_call.1} parent=1 // loop_exit
      _
    %4294 = vsyncpa [#allocation4], 1
    %s4295 = scalar_lea.sflag [#allocation4], 1
    %4296 = vsyncpa %s4295, 1
    %4297 = vsyncpa [#allocation8], 1
    %4298 = vsyncpa [#allocation5], 1
    %s4299 = scalar_lea.sflag [#allocation5], 1
    %4300 = vsyncpa %s4299, 1
    %4301 = vsyncpa [#allocation6], 1
    %s4302 = scalar_lea.sflag [#allocation6], 1
    %4303 = vsyncpa %s4302, 1

</llo_original>
